<compile_context>
chip_gen: v6e
topology: v6e:2x2x1
jax: 0.10.0
libtpu: 0.0.40
codegen_flags: <defaults>
</compile_context>

<pallas_src>
import functools

import jax
import jax.numpy as jnp
from jax import lax
from jax.experimental import pallas as pl
from jax.experimental.pallas import tpu as pltpu


def _bottleneck_kernel(x_ref, w1_ref, b1_ref, w2_ref, b2_ref, w3_ref, b3_ref,
                       out_ref, pad_ref, *, H, W, pack_output):
    # x_ref:   (Bt, H*W, Cin)           Bt images per grid step (spatial-flat)
    # w1_ref:  (Cin, width)      bf16   conv1 1x1, BN1 scale folded in
    # w2_ref:  (9*width, width)  bf16   conv2 3x3 as im2col matrix, BN2 folded
    # w3_ref:  (width, Cout)     bf16   conv3 1x1, BN3 scale folded in
    # b*_ref:  (1, C)            f32    folded BN biases
    # pad_ref: (Bt, H+2, W+2, width) f32 scratch: zero-padded conv2 input
    Bt, HW, Cin = x_ref.shape
    width = w1_ref.shape[1]
    Cout = w3_ref.shape[1]

    # --- conv1 (1x1, BN1 scale folded) + bias + ReLU -------------------------
    # Feed bf16 straight to the MXU; no f32 copy of x kept live across convs.
    xin = x_ref[...].reshape(Bt * HW, Cin)               # leading-dim merge only
    y1 = jnp.dot(xin.astype(jnp.bfloat16), w1_ref[...],
                 preferred_element_type=jnp.float32)
    y1 = jnp.maximum(y1 + b1_ref[...], 0.0)              # (Bt*HW, width) f32

    # --- conv2 (3x3, pad=1, stride=1) as a single im2col matmul --------------
    # Zero only the halo border; interior is fully overwritten each step.
    # (Keep this per step: under megacore sharding each core has its own
    #  scratch, so gating it on program_id would be wrong.)
    zrow = jnp.zeros((Bt, 1, W + 2, width), jnp.float32)
    pad_ref[:, 0:1, :, :] = zrow
    pad_ref[:, H + 1:H + 2, :, :] = zrow
    zcol = jnp.zeros((Bt, H + 2, 1, width), jnp.float32)
    pad_ref[:, :, 0:1, :] = zcol
    pad_ref[:, :, W + 1:W + 2, :] = zcol
    pad_ref[:, 1:H + 1, 1:W + 1, :] = y1.reshape(Bt, H, W, width)

    # Cast each tap to bf16 before the lane concat -> patches is bf16, never f32.
    patches = jnp.concatenate(
        [pad_ref[:, dy:dy + H, dx:dx + W, :].reshape(Bt * HW, width)
             .astype(jnp.bfloat16)
         for dy in range(3) for dx in range(3)],
        axis=-1)                                         # (Bt*HW, 9*width) bf16
    y2 = jnp.dot(patches, w2_ref[...], preferred_element_type=jnp.float32)
    y2 = jnp.maximum(y2 + b2_ref[...], 0.0)              # (Bt*HW, width) f32

    # --- conv3 (1x1, BN3 scale folded) + bias + identity + ReLU --------------
    y3 = jnp.dot(y2.astype(jnp.bfloat16), w3_ref[...],
                 preferred_element_type=jnp.float32)
    res = x_ref[...].astype(jnp.float32).reshape(Bt * HW, Cout)  # Cin == Cout
    y3 = jnp.maximum(y3 + b3_ref[...] + res, 0.0)        # (Bt*HW, Cout) f32

    if pack_output:
        # Lane-dense store for small Cout: (Bt*HW, Cout) -> (Bt, H, W*Cout)
        # via sublane-select + lane-concat (avoids masked partial stores).
        y3r = y3.reshape(Bt * H, W, Cout)
        packed = jnp.concatenate([y3r[:, w, :] for w in range(W)], axis=-1)
        out_ref[...] = packed.reshape(Bt, H, W * Cout).astype(out_ref.dtype)
    else:
        out_ref[...] = y3.reshape(Bt, HW, Cout).astype(out_ref.dtype)


def bottleneck_pallas(x, w1, sb1, w2, sb2, w3, sb3, batch_tile=None):
    """x: (N, H, W, Cin) NHWC. sb*: (2, C) rows = (BN scale, BN bias)."""
    N, H, W, Cin = x.shape
    width = w1.shape[1]
    Cout = w3.shape[1]
    assert Cin == Cout, "downsample=None requires inplanes == planes*expansion"

    # Fold BN scales into conv weights (per output channel); bf16 MXU operands.
    w1f = (w1 * sb1[0][None, :]).astype(jnp.bfloat16)
    w2f = (w2 * sb2[0][None, None, None, :]).reshape(9 * width, width)
    w2f = w2f.astype(jnp.bfloat16)
    w3f = (w3 * sb3[0][None, :]).astype(jnp.bfloat16)
    b1 = sb1[1].reshape(1, width).astype(jnp.float32)
    b2 = sb2[1].reshape(1, width).astype(jnp.float32)
    b3 = sb3[1].reshape(1, Cout).astype(jnp.float32)

    # Batch tile: aim for matmul M = Bt*H*W >= ~512 per grid step.
    if batch_tile is None:
        batch_tile = max(1, min(N, 512 // max(1, H * W)))
    bt = max(1, min(int(batch_tile), N))
    while N % bt:
        bt -= 1
    n_steps = N // bt

    # Lane-dense output packing only pays for small channel counts.
    pack_output = Cout < 128

    xf = x.reshape(N, H * W, Cin)          # free HBM reshape, channels-last

    if pack_output:
        out_shape = jax.ShapeDtypeStruct((N, H, W * Cout), x.dtype)
        out_spec = pl.BlockSpec((bt, H, W * Cout), lambda n: (n, 0, 0))
    else:
        out_shape = jax.ShapeDtypeStruct((N, H * W, Cout), x.dtype)
        out_spec = pl.BlockSpec((bt, H * W, Cout), lambda n: (n, 0, 0))

    # Deeper input buffering only once the per-step DMA is big enough and the
    # grid has enough steps to hide it (never at the small demo shape).
    in_block_bytes = bt * H * W * Cin * x.dtype.itemsize
    x_spec_kwargs = {}
    if in_block_bytes >= (1 << 20) and n_steps >= 4:
        x_spec_kwargs["pipeline_mode"] = pl.Buffered(3)
    x_spec = pl.BlockSpec((bt, H * W, Cin), lambda n: (n, 0, 0),
                          **x_spec_kwargs)

    # Explicit VMEM budget from the per-step working set (double-buffered I/O
    # + scratch + bf16 patches + f32 intermediates + weights), with margin.
    out_block_bytes = bt * H * W * Cout * x.dtype.itemsize
    est = (2 * (in_block_bytes + out_block_bytes)
           + bt * (H + 2) * (W + 2) * width * 4          # pad scratch (f32)
           + bt * H * W * 9 * width * 2                  # patches (bf16)
           + bt * H * W * (2 * width + 2 * Cout) * 4     # y1/y2/y3/res (f32)
           + 2 * (Cin * width + 9 * width * width + width * Cout) * 2
           + (2 * width + Cout) * 4)
    vmem_limit = int(min(32 << 20, max(16 << 20, 4 * est)))

    full2 = lambda n: (0, 0)
    kernel = functools.partial(_bottleneck_kernel, H=H, W=W,
                               pack_output=pack_output)
    out = pl.pallas_call(
        kernel,
        out_shape=out_shape,
        grid_spec=pltpu.PrefetchScalarGridSpec(
            num_scalar_prefetch=0,
            grid=(n_steps,),
            in_specs=[
                x_spec,
                pl.BlockSpec((Cin, width), full2),
                pl.BlockSpec((1, width), full2),
                pl.BlockSpec((9 * width, width), full2),
                pl.BlockSpec((1, width), full2),
                pl.BlockSpec((width, Cout), full2),
                pl.BlockSpec((1, Cout), full2),
            ],
            out_specs=out_spec,
            scratch_shapes=[
                pltpu.VMEM((bt, H + 2, W + 2, width), jnp.float32)],
        ),
        compiler_params=pltpu.CompilerParams(
            dimension_semantics=("parallel",),
            vmem_limit_bytes=vmem_limit),
    )(xf, w1f, b1, w2f, b2, w3f, b3)
    return out.reshape(N, H, W, Cout)


def _fold_bn(gamma, beta, mean, var, eps=1e-5):
    scale = gamma / jnp.sqrt(var + eps)
    bias = beta - mean * scale
    return jnp.stack([scale, bias], axis=0)  # (2, C)


def _reference(x, w1, sb1, w2, sb2, w3, sb3):
    dn = ("NHWC", "HWIO", "NHWC")
    Cin, width = w1.shape
    Cout = w3.shape[1]
    y = lax.conv_general_dilated(x, w1.reshape(1, 1, Cin, width),
                                 (1, 1), "VALID", dimension_numbers=dn)
    y = jnp.maximum(y * sb1[0] + sb1[1], 0.0)
    y = lax.conv_general_dilated(y, w2, (1, 1), ((1, 1), (1, 1)),
                                 dimension_numbers=dn)
    y = jnp.maximum(y * sb2[0] + sb2[1], 0.0)
    y = lax.conv_general_dilated(y, w3.reshape(1, 1, width, Cout),
                                 (1, 1), "VALID", dimension_numbers=dn)
    y = y * sb3[0] + sb3[1]
    return jnp.maximum(y + x, 0.0)


if __name__ == "__main__":
    # Bottleneck(inplanes=16, planes=4): width=4, out channels=16, stride=1,
    # downsample=None (identity residual). N=16 so the batched grid has 2
    # steps of Bt=8 images (matmul M = 512 per step).
    N, H, W = 16, 8, 8
    inplanes, planes, expansion = 16, 4, 4
    width = planes             # base_width=64, groups=1
    cout = planes * expansion  # == inplanes

    key = jax.random.PRNGKey(0)
    ks = jax.random.split(key, 8)
    x = jax.random.normal(ks[0], (N, H, W, inplanes), jnp.float32)

    w1 = jax.random.normal(ks[1], (inplanes, width), jnp.float32) * 0.1
    w2 = jax.random.normal(ks[2], (3, 3, width, width), jnp.float32) * 0.1
    w3 = jax.random.normal(ks[3], (width, cout), jnp.float32) * 0.1

    def bn_params(k, c):
        k1, k2, k3, k4 = jax.random.split(k, 4)
        gamma = 1.0 + 0.1 * jax.random.normal(k1, (c,), jnp.float32)
        beta = 0.1 * jax.random.normal(k2, (c,), jnp.float32)
        mean = 0.1 * jax.random.normal(k3, (c,), jnp.float32)
        var = jnp.abs(1.0 + 0.1 * jax.random.normal(k4, (c,), jnp.float32))
        return _fold_bn(gamma, beta, mean, var)

    sb1 = bn_params(ks[4], width)
    sb2 = bn_params(ks[5], width)
    sb3 = bn_params(ks[6], cout)

    out = bottleneck_pallas(x, w1, sb1, w2, sb2, w3, sb3)
    out = jax.block_until_ready(out)

    ref = _reference(x, w1, sb1, w2, sb2, w3, sb3)
    assert out.shape == (N, H, W, cout)
    # bf16 MXU operands vs. full-f32 reference -> relaxed tolerance.
    assert jnp.max(jnp.abs(out - ref)) < 5e-2

    print("KERNEL_OK")
</pallas_src>

<mosaic_0001>
module attributes {stable_mosaic.version = 11 : i64} {
  func.func @_bottleneck_kernel(%arg0: i32, %arg1: memref<8x64x16xf32, #tpu.memory_space<vmem>>, %arg2: memref<16x4xbf16, #tpu.memory_space<vmem>>, %arg3: memref<1x4xf32, #tpu.memory_space<vmem>>, %arg4: memref<36x4xbf16, #tpu.memory_space<vmem>>, %arg5: memref<1x4xf32, #tpu.memory_space<vmem>>, %arg6: memref<4x16xbf16, #tpu.memory_space<vmem>>, %arg7: memref<1x16xf32, #tpu.memory_space<vmem>>, %arg8: memref<8x8x128xf32, #tpu.memory_space<vmem>>, %arg9: memref<8x10x10x4xf32, #tpu.memory_space<vmem>>) attributes {dimension_semantics = [#tpu.dimension_semantics<parallel>], iteration_bounds = array<i64: 2>, scalar_prefetch = 0 : i64, scratch_operands = 1 : i64, tpu.core_type = #tpu.core_type<tc>, window_params = [{transform_indices = @transform_0, window_bounds = array<i64: 8, 64, 16>}, {pipeline_mode = #tpu.pipeline_mode<synchronous>, transform_indices = @transform_1, window_bounds = array<i64: 16, 4>}, {pipeline_mode = #tpu.pipeline_mode<synchronous>, transform_indices = @transform_2, window_bounds = array<i64: 1, 4>}, {pipeline_mode = #tpu.pipeline_mode<synchronous>, transform_indices = @transform_3, window_bounds = array<i64: 36, 4>}, {pipeline_mode = #tpu.pipeline_mode<synchronous>, transform_indices = @transform_4, window_bounds = array<i64: 1, 4>}, {pipeline_mode = #tpu.pipeline_mode<synchronous>, transform_indices = @transform_5, window_bounds = array<i64: 4, 16>}, {pipeline_mode = #tpu.pipeline_mode<synchronous>, transform_indices = @transform_6, window_bounds = array<i64: 1, 16>}, {transform_indices = @transform_7, window_bounds = array<i64: 8, 8, 128>}]} {
    %c0 = arith.constant 0 : index
    %c0_0 = arith.constant 0 : index
    %c0_1 = arith.constant 0 : index
    %0 = vector.load %arg1[%c0, %c0_0, %c0_1] : memref<8x64x16xf32, #tpu.memory_space<vmem>>, vector<8x64x16xf32>
    %1 = vector.shape_cast %0 : vector<8x64x16xf32> to vector<512x16xf32>
    %2 = arith.truncf %1 : vector<512x16xf32> to vector<512x16xbf16>
    %c0_2 = arith.constant 0 : index
    %c0_3 = arith.constant 0 : index
    %3 = vector.load %arg2[%c0_2, %c0_3] : memref<16x4xbf16, #tpu.memory_space<vmem>>, vector<16x4xbf16>
    %cst = arith.constant dense<0.000000e+00> : vector<512x4xf32>
    %4 = tpu.matmul %2, %3, %cst {dimension_numbers = #tpu.dot_dimension_numbers<[1], [0], [0], [1], [0, 0, 1, 1], [], []>} : vector<512x16xbf16>, vector<16x4xbf16>, vector<512x4xf32> -> vector<512x4xf32>
    %c0_4 = arith.constant 0 : index
    %c0_5 = arith.constant 0 : index
    %5 = vector.load %arg3[%c0_4, %c0_5] : memref<1x4xf32, #tpu.memory_space<vmem>>, vector<1x4xf32>
    %6 = vector.broadcast %5 : vector<1x4xf32> to vector<512x4xf32>
    %7 = arith.addf %4, %6 : vector<512x4xf32>
    %cst_6 = arith.constant 0.000000e+00 : f32
    %8 = vector.broadcast %cst_6 : f32 to vector<512x4xf32>
    %9 = arith.maximumf %7, %8 : vector<512x4xf32>
    %cst_7 = arith.constant 0.000000e+00 : f32
    %10 = vector.broadcast %cst_7 : f32 to vector<8x1x10x4xf32>
    %c0_8 = arith.constant 0 : index
    %c0_9 = arith.constant 0 : index
    %c0_10 = arith.constant 0 : index
    %c0_11 = arith.constant 0 : index
    %11 = vector.load %arg9[%c0_8, %c0_9, %c0_10, %c0_11] : memref<8x10x10x4xf32, #tpu.memory_space<vmem>>, vector<8x1x10x4xf32>
    tpu.vector_store %arg9[%c0_8, %c0_9, %c0_10, %c0_11], %10 {strides = array<i32>} : memref<8x10x10x4xf32, #tpu.memory_space<vmem>>, vector<8x1x10x4xf32>,
    %c0_12 = arith.constant 0 : index
    %c9 = arith.constant 9 : index
    %c0_13 = arith.constant 0 : index
    %c0_14 = arith.constant 0 : index
    %12 = vector.load %arg9[%c0_12, %c9, %c0_13, %c0_14] : memref<8x10x10x4xf32, #tpu.memory_space<vmem>>, vector<8x1x10x4xf32>
    tpu.vector_store %arg9[%c0_12, %c9, %c0_13, %c0_14], %10 {strides = array<i32>} : memref<8x10x10x4xf32, #tpu.memory_space<vmem>>, vector<8x1x10x4xf32>,
    %cst_15 = arith.constant 0.000000e+00 : f32
    %13 = vector.broadcast %cst_15 : f32 to vector<8x10x1x4xf32>
    %c0_16 = arith.constant 0 : index
    %c0_17 = arith.constant 0 : index
    %c0_18 = arith.constant 0 : index
    %c0_19 = arith.constant 0 : index
    %14 = vector.load %arg9[%c0_16, %c0_17, %c0_18, %c0_19] : memref<8x10x10x4xf32, #tpu.memory_space<vmem>>, vector<8x10x1x4xf32>
    tpu.vector_store %arg9[%c0_16, %c0_17, %c0_18, %c0_19], %13 {strides = array<i32>} : memref<8x10x10x4xf32, #tpu.memory_space<vmem>>, vector<8x10x1x4xf32>,
    %c0_20 = arith.constant 0 : index
    %c0_21 = arith.constant 0 : index
    %c9_22 = arith.constant 9 : index
    %c0_23 = arith.constant 0 : index
    %15 = vector.load %arg9[%c0_20, %c0_21, %c9_22, %c0_23] : memref<8x10x10x4xf32, #tpu.memory_space<vmem>>, vector<8x10x1x4xf32>
    tpu.vector_store %arg9[%c0_20, %c0_21, %c9_22, %c0_23], %13 {strides = array<i32>} : memref<8x10x10x4xf32, #tpu.memory_space<vmem>>, vector<8x10x1x4xf32>,
    %16 = vector.shape_cast %9 : vector<512x4xf32> to vector<8x8x8x4xf32>
    %c0_24 = arith.constant 0 : index
    %c1 = arith.constant 1 : index
    %c1_25 = arith.constant 1 : index
    %c0_26 = arith.constant 0 : index
    %17 = vector.load %arg9[%c0_24, %c1, %c1_25, %c0_26] : memref<8x10x10x4xf32, #tpu.memory_space<vmem>>, vector<8x8x8x4xf32>
    tpu.vector_store %arg9[%c0_24, %c1, %c1_25, %c0_26], %16 {strides = array<i32>} : memref<8x10x10x4xf32, #tpu.memory_space<vmem>>, vector<8x8x8x4xf32>,
    %c0_27 = arith.constant 0 : index
    %c0_28 = arith.constant 0 : index
    %c0_29 = arith.constant 0 : index
    %c0_30 = arith.constant 0 : index
    %18 = vector.load %arg9[%c0_27, %c0_28, %c0_29, %c0_30] : memref<8x10x10x4xf32, #tpu.memory_space<vmem>>, vector<8x8x8x4xf32>
    %19 = vector.shape_cast %18 : vector<8x8x8x4xf32> to vector<512x4xf32>
    %20 = arith.truncf %19 : vector<512x4xf32> to vector<512x4xbf16>
    %c0_31 = arith.constant 0 : index
    %c0_32 = arith.constant 0 : index
    %c1_33 = arith.constant 1 : index
    %c0_34 = arith.constant 0 : index
    %21 = vector.load %arg9[%c0_31, %c0_32, %c1_33, %c0_34] : memref<8x10x10x4xf32, #tpu.memory_space<vmem>>, vector<8x8x8x4xf32>
    %22 = vector.shape_cast %21 : vector<8x8x8x4xf32> to vector<512x4xf32>
    %23 = arith.truncf %22 : vector<512x4xf32> to vector<512x4xbf16>
    %c0_35 = arith.constant 0 : index
    %c0_36 = arith.constant 0 : index
    %c2 = arith.constant 2 : index
    %c0_37 = arith.constant 0 : index
    %24 = vector.load %arg9[%c0_35, %c0_36, %c2, %c0_37] : memref<8x10x10x4xf32, #tpu.memory_space<vmem>>, vector<8x8x8x4xf32>
    %25 = vector.shape_cast %24 : vector<8x8x8x4xf32> to vector<512x4xf32>
    %26 = arith.truncf %25 : vector<512x4xf32> to vector<512x4xbf16>
    %c0_38 = arith.constant 0 : index
    %c1_39 = arith.constant 1 : index
    %c0_40 = arith.constant 0 : index
    %c0_41 = arith.constant 0 : index
    %27 = vector.load %arg9[%c0_38, %c1_39, %c0_40, %c0_41] : memref<8x10x10x4xf32, #tpu.memory_space<vmem>>, vector<8x8x8x4xf32>
    %28 = vector.shape_cast %27 : vector<8x8x8x4xf32> to vector<512x4xf32>
    %29 = arith.truncf %28 : vector<512x4xf32> to vector<512x4xbf16>
    %c0_42 = arith.constant 0 : index
    %c1_43 = arith.constant 1 : index
    %c1_44 = arith.constant 1 : index
    %c0_45 = arith.constant 0 : index
    %30 = vector.load %arg9[%c0_42, %c1_43, %c1_44, %c0_45] : memref<8x10x10x4xf32, #tpu.memory_space<vmem>>, vector<8x8x8x4xf32>
    %31 = vector.shape_cast %30 : vector<8x8x8x4xf32> to vector<512x4xf32>
    %32 = arith.truncf %31 : vector<512x4xf32> to vector<512x4xbf16>
    %c0_46 = arith.constant 0 : index
    %c1_47 = arith.constant 1 : index
    %c2_48 = arith.constant 2 : index
    %c0_49 = arith.constant 0 : index
    %33 = vector.load %arg9[%c0_46, %c1_47, %c2_48, %c0_49] : memref<8x10x10x4xf32, #tpu.memory_space<vmem>>, vector<8x8x8x4xf32>
    %34 = vector.shape_cast %33 : vector<8x8x8x4xf32> to vector<512x4xf32>
    %35 = arith.truncf %34 : vector<512x4xf32> to vector<512x4xbf16>
    %c0_50 = arith.constant 0 : index
    %c2_51 = arith.constant 2 : index
    %c0_52 = arith.constant 0 : index
    %c0_53 = arith.constant 0 : index
    %36 = vector.load %arg9[%c0_50, %c2_51, %c0_52, %c0_53] : memref<8x10x10x4xf32, #tpu.memory_space<vmem>>, vector<8x8x8x4xf32>
    %37 = vector.shape_cast %36 : vector<8x8x8x4xf32> to vector<512x4xf32>
    %38 = arith.truncf %37 : vector<512x4xf32> to vector<512x4xbf16>
    %c0_54 = arith.constant 0 : index
    %c2_55 = arith.constant 2 : index
    %c1_56 = arith.constant 1 : index
    %c0_57 = arith.constant 0 : index
    %39 = vector.load %arg9[%c0_54, %c2_55, %c1_56, %c0_57] : memref<8x10x10x4xf32, #tpu.memory_space<vmem>>, vector<8x8x8x4xf32>
    %40 = vector.shape_cast %39 : vector<8x8x8x4xf32> to vector<512x4xf32>
    %41 = arith.truncf %40 : vector<512x4xf32> to vector<512x4xbf16>
    %c0_58 = arith.constant 0 : index
    %c2_59 = arith.constant 2 : index
    %c2_60 = arith.constant 2 : index
    %c0_61 = arith.constant 0 : index
    %42 = vector.load %arg9[%c0_58, %c2_59, %c2_60, %c0_61] : memref<8x10x10x4xf32, #tpu.memory_space<vmem>>, vector<8x8x8x4xf32>
    %43 = vector.shape_cast %42 : vector<8x8x8x4xf32> to vector<512x4xf32>
    %44 = arith.truncf %43 : vector<512x4xf32> to vector<512x4xbf16>
    %45 = tpu.concatenate %20, %23, %26, %29, %32, %35, %38, %41, %44 in 1 : vector<512x4xbf16>, vector<512x4xbf16>, vector<512x4xbf16>, vector<512x4xbf16>, vector<512x4xbf16>, vector<512x4xbf16>, vector<512x4xbf16>, vector<512x4xbf16>, vector<512x4xbf16> -> vector<512x36xbf16>
    %c0_62 = arith.constant 0 : index
    %c0_63 = arith.constant 0 : index
    %46 = vector.load %arg4[%c0_62, %c0_63] : memref<36x4xbf16, #tpu.memory_space<vmem>>, vector<36x4xbf16>
    %cst_64 = arith.constant dense<0.000000e+00> : vector<512x4xf32>
    %47 = tpu.matmul %45, %46, %cst_64 {dimension_numbers = #tpu.dot_dimension_numbers<[1], [0], [0], [1], [0, 0, 1, 1], [], []>} : vector<512x36xbf16>, vector<36x4xbf16>, vector<512x4xf32> -> vector<512x4xf32>
    %c0_65 = arith.constant 0 : index
    %c0_66 = arith.constant 0 : index
    %48 = vector.load %arg5[%c0_65, %c0_66] : memref<1x4xf32, #tpu.memory_space<vmem>>, vector<1x4xf32>
    %49 = vector.broadcast %48 : vector<1x4xf32> to vector<512x4xf32>
    %50 = arith.addf %47, %49 : vector<512x4xf32>
    %cst_67 = arith.constant 0.000000e+00 : f32
    %51 = vector.broadcast %cst_67 : f32 to vector<512x4xf32>
    %52 = arith.maximumf %50, %51 : vector<512x4xf32>
    %53 = arith.truncf %52 : vector<512x4xf32> to vector<512x4xbf16>
    %c0_68 = arith.constant 0 : index
    %c0_69 = arith.constant 0 : index
    %54 = vector.load %arg6[%c0_68, %c0_69] : memref<4x16xbf16, #tpu.memory_space<vmem>>, vector<4x16xbf16>
    %cst_70 = arith.constant dense<0.000000e+00> : vector<512x16xf32>
    %55 = tpu.matmul %53, %54, %cst_70 {dimension_numbers = #tpu.dot_dimension_numbers<[1], [0], [0], [1], [0, 0, 1, 1], [], []>} : vector<512x4xbf16>, vector<4x16xbf16>, vector<512x16xf32> -> vector<512x16xf32>
    %c0_71 = arith.constant 0 : index
    %c0_72 = arith.constant 0 : index
    %c0_73 = arith.constant 0 : index
    %56 = vector.load %arg1[%c0_71, %c0_72, %c0_73] : memref<8x64x16xf32, #tpu.memory_space<vmem>>, vector<8x64x16xf32>
    %57 = vector.shape_cast %56 : vector<8x64x16xf32> to vector<512x16xf32>
    %c0_74 = arith.constant 0 : index
    %c0_75 = arith.constant 0 : index
    %58 = vector.load %arg7[%c0_74, %c0_75] : memref<1x16xf32, #tpu.memory_space<vmem>>, vector<1x16xf32>
    %59 = vector.broadcast %58 : vector<1x16xf32> to vector<512x16xf32>
    %60 = arith.addf %55, %59 : vector<512x16xf32>
    %61 = arith.addf %60, %57 : vector<512x16xf32>
    %cst_76 = arith.constant 0.000000e+00 : f32
    %62 = vector.broadcast %cst_76 : f32 to vector<512x16xf32>
    %63 = arith.maximumf %61, %62 : vector<512x16xf32>
    %64 = vector.shape_cast %63 : vector<512x16xf32> to vector<64x8x16xf32>
    %65 = vector.extract_strided_slice %64 {offsets = [0, 0, 0], sizes = [64, 1, 16], strides = [1, 1, 1]} : vector<64x8x16xf32> to vector<64x1x16xf32>
    %66 = vector.shape_cast %65 : vector<64x1x16xf32> to vector<64x16xf32>
    %67 = vector.extract_strided_slice %64 {offsets = [0, 1, 0], sizes = [64, 1, 16], strides = [1, 1, 1]} : vector<64x8x16xf32> to vector<64x1x16xf32>
    %68 = vector.shape_cast %67 : vector<64x1x16xf32> to vector<64x16xf32>
    %69 = vector.extract_strided_slice %64 {offsets = [0, 2, 0], sizes = [64, 1, 16], strides = [1, 1, 1]} : vector<64x8x16xf32> to vector<64x1x16xf32>
    %70 = vector.shape_cast %69 : vector<64x1x16xf32> to vector<64x16xf32>
    %71 = vector.extract_strided_slice %64 {offsets = [0, 3, 0], sizes = [64, 1, 16], strides = [1, 1, 1]} : vector<64x8x16xf32> to vector<64x1x16xf32>
    %72 = vector.shape_cast %71 : vector<64x1x16xf32> to vector<64x16xf32>
    %73 = vector.extract_strided_slice %64 {offsets = [0, 4, 0], sizes = [64, 1, 16], strides = [1, 1, 1]} : vector<64x8x16xf32> to vector<64x1x16xf32>
    %74 = vector.shape_cast %73 : vector<64x1x16xf32> to vector<64x16xf32>
    %75 = vector.extract_strided_slice %64 {offsets = [0, 5, 0], sizes = [64, 1, 16], strides = [1, 1, 1]} : vector<64x8x16xf32> to vector<64x1x16xf32>
    %76 = vector.shape_cast %75 : vector<64x1x16xf32> to vector<64x16xf32>
    %77 = vector.extract_strided_slice %64 {offsets = [0, 6, 0], sizes = [64, 1, 16], strides = [1, 1, 1]} : vector<64x8x16xf32> to vector<64x1x16xf32>
    %78 = vector.shape_cast %77 : vector<64x1x16xf32> to vector<64x16xf32>
    %79 = vector.extract_strided_slice %64 {offsets = [0, 7, 0], sizes = [64, 1, 16], strides = [1, 1, 1]} : vector<64x8x16xf32> to vector<64x1x16xf32>
    %80 = vector.shape_cast %79 : vector<64x1x16xf32> to vector<64x16xf32>
    %81 = tpu.concatenate %66, %68, %70, %72, %74, %76, %78, %80 in 1 : vector<64x16xf32>, vector<64x16xf32>, vector<64x16xf32>, vector<64x16xf32>, vector<64x16xf32>, vector<64x16xf32>, vector<64x16xf32>, vector<64x16xf32> -> vector<64x128xf32>
    %82 = vector.shape_cast %81 : vector<64x128xf32> to vector<8x8x128xf32>
    %c0_77 = arith.constant 0 : index
    %c0_78 = arith.constant 0 : index
    %c0_79 = arith.constant 0 : index
    %83 = vector.load %arg8[%c0_77, %c0_78, %c0_79] : memref<8x8x128xf32, #tpu.memory_space<vmem>>, vector<8x8x128xf32>
    tpu.vector_store %arg8[%c0_77, %c0_78, %c0_79], %82 {strides = array<i32>} : memref<8x8x128xf32, #tpu.memory_space<vmem>>, vector<8x8x128xf32>,
    return
  }
  func.func @transform_0(%arg0: i32) -> (i32, i32, i32) {
    %c0_i32 = arith.constant 0 : i32
    %c0_i32_0 = arith.constant 0 : i32
    %c0_i32_1 = arith.constant 0 : i32
    return %arg0, %c0_i32, %c0_i32_0 : i32, i32, i32
  }
  func.func @transform_1(%arg0: i32) -> (i32, i32) {
    %c0_i32 = arith.constant 0 : i32
    %c0_i32_0 = arith.constant 0 : i32
    %c0_i32_1 = arith.constant 0 : i32
    return %c0_i32, %c0_i32_0 : i32, i32
  }
  func.func @transform_2(%arg0: i32) -> (i32, i32) {
    %c0_i32 = arith.constant 0 : i32
    %c0_i32_0 = arith.constant 0 : i32
    %c0_i32_1 = arith.constant 0 : i32
    return %c0_i32, %c0_i32_0 : i32, i32
  }
  func.func @transform_3(%arg0: i32) -> (i32, i32) {
    %c0_i32 = arith.constant 0 : i32
    %c0_i32_0 = arith.constant 0 : i32
    %c0_i32_1 = arith.constant 0 : i32
    return %c0_i32, %c0_i32_0 : i32, i32
  }
  func.func @transform_4(%arg0: i32) -> (i32, i32) {
    %c0_i32 = arith.constant 0 : i32
    %c0_i32_0 = arith.constant 0 : i32
    %c0_i32_1 = arith.constant 0 : i32
    return %c0_i32, %c0_i32_0 : i32, i32
  }
  func.func @transform_5(%arg0: i32) -> (i32, i32) {
    %c0_i32 = arith.constant 0 : i32
    %c0_i32_0 = arith.constant 0 : i32
    %c0_i32_1 = arith.constant 0 : i32
    return %c0_i32, %c0_i32_0 : i32, i32
  }
  func.func @transform_6(%arg0: i32) -> (i32, i32) {
    %c0_i32 = arith.constant 0 : i32
    %c0_i32_0 = arith.constant 0 : i32
    %c0_i32_1 = arith.constant 0 : i32
    return %c0_i32, %c0_i32_0 : i32, i32
  }
  func.func @transform_7(%arg0: i32) -> (i32, i32, i32) {
    %c0_i32 = arith.constant 0 : i32
    %c0_i32_0 = arith.constant 0 : i32
    %c0_i32_1 = arith.constant 0 : i32
    return %arg0, %c0_i32, %c0_i32_0 : i32, i32, i32
  }
}

</mosaic_0001>

<llo_original>
// kernel: tpu_custom_call.1
$region0: #{tpu_custom_call.1}
  #allocation0 [shape = 'u32[]', space=smem, size = 0x4, offset = 0x4, fixed_abs, tag = 'smem constant byte address 0x4 - core index']
  #allocation1 [shape = 'u32[144,128]{1,0:T(1,128)}', space=vmem, size = 0x12000, scoped, tag = 'internal scratch']
  #allocation2 [shape = 'f32[8,10,10,4]{3,2,1,0:T(8,128)}', space=vmem, size = 0xa0000, scoped, tag = 'scratch operand']
  %s0 = inlined_call_operand.vmem [shape: f32[16,64,16], index: 0, kind: input, shape index: {}]
  %s1 = inlined_call_operand.vmem [shape: bf16[16,4], index: 1, kind: input, shape index: {}]
  %s2 = inlined_call_operand.vmem [shape: f32[1,4], index: 2, kind: input, shape index: {}]
  %s3 = inlined_call_operand.vmem [shape: bf16[36,4], index: 3, kind: input, shape index: {}]
  %s4 = inlined_call_operand.vmem [shape: f32[1,4], index: 4, kind: input, shape index: {}]
  %s5 = inlined_call_operand.vmem [shape: bf16[4,16], index: 5, kind: input, shape index: {}]
  %s6 = inlined_call_operand.vmem [shape: f32[1,16], index: 6, kind: input, shape index: {}]
  %s7 = inlined_call_operand.hbm [shape: f32[16,8,128], index: 7, kind: output, shape index: {}]
  %s8 = sld [smem:[#allocation0]]
  $region61: #{tpu_custom_call.1} parent=0
    _
  %s10 = ssub.s32 1, %s8
  %s11 = scalar_select 0, %s10, %s8
  $region1: #{tpu_custom_call.1} parent=0
    #allocation3 [shape = 'u8[65536]{0}', space=vmem, size = 0x10000, scoped, tag = 'output window, operand 0']
    #allocation4 [shape = 's32[2]{0}', space=sflag, size = 0x8, scoped, tag = 'scoped memory for tpu_custom_call.1']
    %12 = vsyncpa [#allocation4], 0
    %s13 = scalar_lea.sflag [#allocation4], 1
    %14 = vsyncpa %s13, 0
    loop: start=0, step=1, limit=4
    $region2: #{tpu_custom_call.1} parent=1 // loop_pre_header
      _
    $region3: #{tpu_custom_call.1} parent=1 // loop_header
      %s16 = sphi 0, %s20
      %p17 = scmp.ge.s32.totalorder %s16, 4
      %s26 = sphi 0, %s28
      %s29 = sphi 0, %s26
      %s30 = sphi 0, %s29
      %s46 = sphi 0, %s30
      %s50 = sphi 0, %s50
      %s52 = sphi 0, %s50
      %s53 = sphi 0, %s52
      %s67 = sphi 0, %s53
      %s71 = sphi 0, %s71
      %s73 = sphi 0, %s71
      %s74 = sphi 0, %s73
      %s88 = sphi 0, %s74
      %s92 = sphi 0, %s92
      %s94 = sphi 0, %s92
      %s95 = sphi 0, %s94
      %s109 = sphi 0, %s95
      %s113 = sphi 0, %s113
      %s115 = sphi 0, %s113
      %s116 = sphi 0, %s115
      %s130 = sphi 0, %s116
      %s134 = sphi 0, %s134
      %s136 = sphi 0, %s134
      %s137 = sphi 0, %s136
      %s151 = sphi 0, %s137
      %s155 = sphi 0, %s155
      %s157 = sphi 0, %s155
      %s158 = sphi 0, %s157
      %s172 = sphi 0, %s158
      %s178 = sphi 0, %s180
      %s181 = sphi 0, %s178
      %s182 = sphi 0, %s181
      %s198 = sphi 0, %s182
    $region4: #{tpu_custom_call.1} parent=1 // loop_header_branch
      %19 = sbr.rel (%p17) target = $region8
    $region5: #{tpu_custom_call.1} parent=1 // loop_body
      %s21 = ssub.s32 %s16, 1
      %s22 = ssub.s32 %s16, 2
      %s23 = sadd.s32 %s16, 1
      %s24 = ssub.s32 %s16, %s23
      %p25 = scmp.eq.s32.totalorder %s24, 0
      %s27 = sadd.s32 %s26, 1
      %s28 = scalar_select %p25, %s26, %s27
      %p31 = pneg %p25
      %p32 = scmp.eq.s32.totalorder %s16, 1
      %p33 = por %p31, %p32
      %p34 = scmp.ne.s32.totalorder %s26, %s29
      %p35 = scmp.eq.s32.totalorder %s16, 0
      %p36 = por %p34, %p35
      %p37 = scmp.ne.s32.totalorder %s26, %s29
      %p38 = scmp.eq.s32.totalorder %s21, 1
      %p39 = por %p37, %p38
      %p40 = scmp.ne.s32.totalorder %s29, %s30
      %p41 = scmp.eq.s32.totalorder %s21, 0
      %p42 = por %p40, %p41
      %p43 = scmp.ne.s32.totalorder %s29, %s30
      %p44 = scmp.eq.s32.totalorder %s22, 1
      %p45 = por %p43, %p44
      %p47 = scmp.ne.s32.totalorder %s30, %s46
      %p48 = scmp.eq.s32.totalorder %s22, 0
      %p49 = por %p47, %p48
      %s51 = sadd.s32 %s50, 1
      %p54 = scmp.eq.s32.totalorder %s16, 1
      %p55 = scmp.ne.s32.totalorder %s50, %s52
      %p56 = scmp.eq.s32.totalorder %s16, 0
      %p57 = por %p55, %p56
      %p58 = scmp.ne.s32.totalorder %s50, %s52
      %p59 = scmp.eq.s32.totalorder %s21, 1
      %p60 = por %p58, %p59
      %p61 = scmp.ne.s32.totalorder %s52, %s53
      %p62 = scmp.eq.s32.totalorder %s21, 0
      %p63 = por %p61, %p62
      %p64 = scmp.ne.s32.totalorder %s52, %s53
      %p65 = scmp.eq.s32.totalorder %s22, 1
      %p66 = por %p64, %p65
      %p68 = scmp.ne.s32.totalorder %s53, %s67
      %p69 = scmp.eq.s32.totalorder %s22, 0
      %p70 = por %p68, %p69
      %s72 = sadd.s32 %s71, 1
      %p75 = scmp.eq.s32.totalorder %s16, 1
      %p76 = scmp.ne.s32.totalorder %s71, %s73
      %p77 = scmp.eq.s32.totalorder %s16, 0
      %p78 = por %p76, %p77
      %p79 = scmp.ne.s32.totalorder %s71, %s73
      %p80 = scmp.eq.s32.totalorder %s21, 1
      %p81 = por %p79, %p80
      %p82 = scmp.ne.s32.totalorder %s73, %s74
      %p83 = scmp.eq.s32.totalorder %s21, 0
      %p84 = por %p82, %p83
      %p85 = scmp.ne.s32.totalorder %s73, %s74
      %p86 = scmp.eq.s32.totalorder %s22, 1
      %p87 = por %p85, %p86
      %p89 = scmp.ne.s32.totalorder %s74, %s88
      %p90 = scmp.eq.s32.totalorder %s22, 0
      %p91 = por %p89, %p90
      %s93 = sadd.s32 %s92, 1
      %p96 = scmp.eq.s32.totalorder %s16, 1
      %p97 = scmp.ne.s32.totalorder %s92, %s94
      %p98 = scmp.eq.s32.totalorder %s16, 0
      %p99 = por %p97, %p98
      %p100 = scmp.ne.s32.totalorder %s92, %s94
      %p101 = scmp.eq.s32.totalorder %s21, 1
      %p102 = por %p100, %p101
      %p103 = scmp.ne.s32.totalorder %s94, %s95
      %p104 = scmp.eq.s32.totalorder %s21, 0
      %p105 = por %p103, %p104
      %p106 = scmp.ne.s32.totalorder %s94, %s95
      %p107 = scmp.eq.s32.totalorder %s22, 1
      %p108 = por %p106, %p107
      %p110 = scmp.ne.s32.totalorder %s95, %s109
      %p111 = scmp.eq.s32.totalorder %s22, 0
      %p112 = por %p110, %p111
      %s114 = sadd.s32 %s113, 1
      %p117 = scmp.eq.s32.totalorder %s16, 1
      %p118 = scmp.ne.s32.totalorder %s113, %s115
      %p119 = scmp.eq.s32.totalorder %s16, 0
      %p120 = por %p118, %p119
      %p121 = scmp.ne.s32.totalorder %s113, %s115
      %p122 = scmp.eq.s32.totalorder %s21, 1
      %p123 = por %p121, %p122
      %p124 = scmp.ne.s32.totalorder %s115, %s116
      %p125 = scmp.eq.s32.totalorder %s21, 0
      %p126 = por %p124, %p125
      %p127 = scmp.ne.s32.totalorder %s115, %s116
      %p128 = scmp.eq.s32.totalorder %s22, 1
      %p129 = por %p127, %p128
      %p131 = scmp.ne.s32.totalorder %s116, %s130
      %p132 = scmp.eq.s32.totalorder %s22, 0
      %p133 = por %p131, %p132
      %s135 = sadd.s32 %s134, 1
      %p138 = scmp.eq.s32.totalorder %s16, 1
      %p139 = scmp.ne.s32.totalorder %s134, %s136
      %p140 = scmp.eq.s32.totalorder %s16, 0
      %p141 = por %p139, %p140
      %p142 = scmp.ne.s32.totalorder %s134, %s136
      %p143 = scmp.eq.s32.totalorder %s21, 1
      %p144 = por %p142, %p143
      %p145 = scmp.ne.s32.totalorder %s136, %s137
      %p146 = scmp.eq.s32.totalorder %s21, 0
      %p147 = por %p145, %p146
      %p148 = scmp.ne.s32.totalorder %s136, %s137
      %p149 = scmp.eq.s32.totalorder %s22, 1
      %p150 = por %p148, %p149
      %p152 = scmp.ne.s32.totalorder %s137, %s151
      %p153 = scmp.eq.s32.totalorder %s22, 0
      %p154 = por %p152, %p153
      %s156 = sadd.s32 %s155, 1
      %p159 = scmp.eq.s32.totalorder %s16, 1
      %p160 = scmp.ne.s32.totalorder %s155, %s157
      %p161 = scmp.eq.s32.totalorder %s16, 0
      %p162 = por %p160, %p161
      %p163 = scmp.ne.s32.totalorder %s155, %s157
      %p164 = scmp.eq.s32.totalorder %s21, 1
      %p165 = por %p163, %p164
      %p166 = scmp.ne.s32.totalorder %s157, %s158
      %p167 = scmp.eq.s32.totalorder %s21, 0
      %p168 = por %p166, %p167
      %p169 = scmp.ne.s32.totalorder %s157, %s158
      %p170 = scmp.eq.s32.totalorder %s22, 1
      %p171 = por %p169, %p170
      %p173 = scmp.ne.s32.totalorder %s158, %s172
      %p174 = scmp.eq.s32.totalorder %s22, 0
      %p175 = por %p173, %p174
      %s176 = ssub.s32 %s16, %s23
      %p177 = scmp.eq.s32.totalorder %s176, 0
      %s179 = sadd.s32 %s178, 1
      %s180 = scalar_select %p177, %s178, %s179
      %p183 = pneg %p177
      %p184 = scmp.eq.s32.totalorder %s16, 1
      %p185 = por %p183, %p184
      %p186 = scmp.ne.s32.totalorder %s178, %s181
      %p187 = scmp.eq.s32.totalorder %s16, 0
      %p188 = por %p186, %p187
      %p189 = scmp.ne.s32.totalorder %s178, %s181
      %p190 = scmp.eq.s32.totalorder %s21, 1
      %p191 = por %p189, %p190
      %p192 = scmp.ne.s32.totalorder %s181, %s182
      %p193 = scmp.eq.s32.totalorder %s21, 0
      %p194 = por %p192, %p193
      %p195 = scmp.ne.s32.totalorder %s181, %s182
      %p196 = scmp.eq.s32.totalorder %s22, 1
      %p197 = por %p195, %p196
      %p199 = scmp.ne.s32.totalorder %s182, %s198
      %p200 = scmp.eq.s32.totalorder %s22, 0
      %p201 = por %p199, %p200
      %p202 = scmp.le.s32.totalorder 1, %s16
      %p203 = scmp.lt.s32.totalorder %s16, 3
      %p204 = pnand %p202, %p203
      %p205 = pneg %p204
      // Predicated region
      $region9: #{tpu_custom_call.1} parent=5 // pred_check
        _
      $region10: #{tpu_custom_call.1} parent=5 // pred_check_branch
        %207 = sbr.rel (%p204) target = $region12
      $region11: #{tpu_custom_call.1} parent=5 // pred_region
        %s208 = ssub.s32 %s16, 1
        // Predicated region
        $region13: #{tpu_custom_call.1} parent=11 // pred_check
          %p209 = pneg %p63
        $region14: #{tpu_custom_call.1} parent=11 // pred_check_branch
          %211 = sbr.rel (%p209) target = $region16
        $region15: #{tpu_custom_call.1} parent=11 // pred_region
          _
        $region16: #{tpu_custom_call.1} parent=11 // pred_fallthru
          _
        // Predicated region
        $region17: #{tpu_custom_call.1} parent=11 // pred_check
          %p212 = pneg %p84
        $region18: #{tpu_custom_call.1} parent=11 // pred_check_branch
          %214 = sbr.rel (%p212) target = $region20
        $region19: #{tpu_custom_call.1} parent=11 // pred_region
          _
        $region20: #{tpu_custom_call.1} parent=11 // pred_fallthru
          _
        // Predicated region
        $region21: #{tpu_custom_call.1} parent=11 // pred_check
          %p215 = pneg %p105
        $region22: #{tpu_custom_call.1} parent=11 // pred_check_branch
          %217 = sbr.rel (%p215) target = $region24
        $region23: #{tpu_custom_call.1} parent=11 // pred_region
          _
        $region24: #{tpu_custom_call.1} parent=11 // pred_fallthru
          _
        // Predicated region
        $region25: #{tpu_custom_call.1} parent=11 // pred_check
          %p218 = pneg %p126
        $region26: #{tpu_custom_call.1} parent=11 // pred_check_branch
          %220 = sbr.rel (%p218) target = $region28
        $region27: #{tpu_custom_call.1} parent=11 // pred_region
          _
        $region28: #{tpu_custom_call.1} parent=11 // pred_fallthru
          _
        // Predicated region
        $region29: #{tpu_custom_call.1} parent=11 // pred_check
          %p221 = pneg %p147
        $region30: #{tpu_custom_call.1} parent=11 // pred_check_branch
          %223 = sbr.rel (%p221) target = $region32
        $region31: #{tpu_custom_call.1} parent=11 // pred_region
          _
        $region32: #{tpu_custom_call.1} parent=11 // pred_fallthru
          _
        // Predicated region
        $region33: #{tpu_custom_call.1} parent=11 // pred_check
          %p224 = pneg %p168
        $region34: #{tpu_custom_call.1} parent=11 // pred_check_branch
          %226 = sbr.rel (%p224) target = $region36
        $region35: #{tpu_custom_call.1} parent=11 // pred_region
          _
        $region36: #{tpu_custom_call.1} parent=11 // pred_fallthru
          _
      $region12: #{tpu_custom_call.1} parent=5 // pred_fallthru
        _
      %p227 = scmp.lt.s32.totalorder %s16, 2
      // Predicated region
      $region37: #{tpu_custom_call.1} parent=5 // pred_check
        %p228 = pneg %p227
      $region38: #{tpu_custom_call.1} parent=5 // pred_check_branch
        %230 = sbr.rel (%p228) target = $region40
      $region39: #{tpu_custom_call.1} parent=5 // pred_region
        // Predicated region
        $region41: #{tpu_custom_call.1} parent=39 // pred_check
          %p231 = pneg %p36
        $region42: #{tpu_custom_call.1} parent=39 // pred_check_branch
          %233 = sbr.rel (%p231) target = $region44
        $region43: #{tpu_custom_call.1} parent=39 // pred_region
          %s234 = smul.u32 8, %s16
          %p235 = scmp.lt.s32.totalorder %s234, 15
          %s236 = scalar_select %p235, %s234, 15
          %s237 = smul.addr %s236, 8
          %s238 = smul.addr %s237, 8
          %s239 = scalar_lea.vmem %s0, %s238
          %s240 = smul.u32 8, %s16
        $region44: #{tpu_custom_call.1} parent=39 // pred_fallthru
          _
      $region40: #{tpu_custom_call.1} parent=5 // pred_fallthru
        _
      %p241 = scmp.le.s32.totalorder 1, %s16
      %p242 = scmp.lt.s32.totalorder %s16, 3
      %p243 = pnand %p241, %p242
      %p244 = pneg %p243
      // Predicated region
      $region45: #{tpu_custom_call.1} parent=5 // pred_check
        _
      $region46: #{tpu_custom_call.1} parent=5 // pred_check_branch
        %246 = sbr.rel (%p243) target = $region48
      $region47: #{tpu_custom_call.1} parent=5 // pred_region
        %s247 = ssub.s32 %s16, 1
        %s248 = smul.u32 8, %s21
        %p249 = scmp.lt.s32.totalorder %s248, 15
        %s250 = scalar_select %p249, %s248, 15
        %s251 = smul.addr %s250, 8
        %s252 = smul.addr %s251, 8
        %s253 = scalar_lea.vmem %s0, %s252
        %p254 = pneg %p42
        %p255 = pneg %p39
        %p256 = pneg %p63
        %p257 = pneg %p60
        %p258 = pneg %p84
        %p259 = pneg %p81
        %p260 = pneg %p105
        %p261 = pneg %p102
        %p262 = pneg %p126
        %p263 = pneg %p123
        %p264 = pneg %p147
        %p265 = pneg %p144
        %p266 = pneg %p168
        %p267 = pneg %p165
        %p268 = pneg %p194
        %p269 = pneg %p191
        %s270 = sand.u32 %s181, 1
        %s271 = scalar_lea.sflag [#allocation4], %s270
        %s272 = sand.u32 %s181, 1
        %s273 = smul.addr %s272, 64
        %s274 = scalar_lea.vmem [#allocation3], %s273
        %s275 = smul.u32 8, %s21
        %p276 = scmp.lt.s32.totalorder %s275, 15
        %s277 = scalar_select %p276, %s275, 15
        %s278 = smul.addr %s277, 8
        %s279 = smul.addr %s278, 8
        %s280 = scalar_lea.vmem %s0, %s279
        %s281 = smul.u32 8, %s21
        %s282 = smul.u32 8, %s21
        %v284 = vld [vmem:[%s280] sm:$0xff]
        %v285 = vld [vmem:[%s280 + $0x8] sm:$0xff]
        %v286 = vld [vmem:[%s280 + $0x10] sm:$0xff]
        %v287 = vld [vmem:[%s280 + $0x18] sm:$0xff]
        %v288 = vld [vmem:[%s280 + $0x20] sm:$0xff]
        %v289 = vld [vmem:[%s280 + $0x28] sm:$0xff]
        %v290 = vld [vmem:[%s280 + $0x30] sm:$0xff]
        %v291 = vld [vmem:[%s280 + $0x38] sm:$0xff]
        %v292 = vld [vmem:[%s280 + $0x40] sm:$0xff]
        %v293 = vld [vmem:[%s280 + $0x48] sm:$0xff]
        %v294 = vld [vmem:[%s280 + $0x50] sm:$0xff]
        %v295 = vld [vmem:[%s280 + $0x58] sm:$0xff]
        %v296 = vld [vmem:[%s280 + $0x60] sm:$0xff]
        %v297 = vld [vmem:[%s280 + $0x68] sm:$0xff]
        %v298 = vld [vmem:[%s280 + $0x70] sm:$0xff]
        %v299 = vld [vmem:[%s280 + $0x78] sm:$0xff]
        %v300 = vld [vmem:[%s280 + $0x80] sm:$0xff]
        %v301 = vld [vmem:[%s280 + $0x88] sm:$0xff]
        %v302 = vld [vmem:[%s280 + $0x90] sm:$0xff]
        %v303 = vld [vmem:[%s280 + $0x98] sm:$0xff]
        %v304 = vld [vmem:[%s280 + $0xa0] sm:$0xff]
        %v305 = vld [vmem:[%s280 + $0xa8] sm:$0xff]
        %v306 = vld [vmem:[%s280 + $0xb0] sm:$0xff]
        %v307 = vld [vmem:[%s280 + $0xb8] sm:$0xff]
        %v308 = vld [vmem:[%s280 + $0xc0] sm:$0xff]
        %v309 = vld [vmem:[%s280 + $0xc8] sm:$0xff]
        %v310 = vld [vmem:[%s280 + $0xd0] sm:$0xff]
        %v311 = vld [vmem:[%s280 + $0xd8] sm:$0xff]
        %v312 = vld [vmem:[%s280 + $0xe0] sm:$0xff]
        %v313 = vld [vmem:[%s280 + $0xe8] sm:$0xff]
        %v314 = vld [vmem:[%s280 + $0xf0] sm:$0xff]
        %v315 = vld [vmem:[%s280 + $0xf8] sm:$0xff]
        %v316 = vld [vmem:[%s280 + $0x100] sm:$0xff]
        %v317 = vld [vmem:[%s280 + $0x108] sm:$0xff]
        %v318 = vld [vmem:[%s280 + $0x110] sm:$0xff]
        %v319 = vld [vmem:[%s280 + $0x118] sm:$0xff]
        %v320 = vld [vmem:[%s280 + $0x120] sm:$0xff]
        %v321 = vld [vmem:[%s280 + $0x128] sm:$0xff]
        %v322 = vld [vmem:[%s280 + $0x130] sm:$0xff]
        %v323 = vld [vmem:[%s280 + $0x138] sm:$0xff]
        %v324 = vld [vmem:[%s280 + $0x140] sm:$0xff]
        %v325 = vld [vmem:[%s280 + $0x148] sm:$0xff]
        %v326 = vld [vmem:[%s280 + $0x150] sm:$0xff]
        %v327 = vld [vmem:[%s280 + $0x158] sm:$0xff]
        %v328 = vld [vmem:[%s280 + $0x160] sm:$0xff]
        %v329 = vld [vmem:[%s280 + $0x168] sm:$0xff]
        %v330 = vld [vmem:[%s280 + $0x170] sm:$0xff]
        %v331 = vld [vmem:[%s280 + $0x178] sm:$0xff]
        %v332 = vld [vmem:[%s280 + $0x180] sm:$0xff]
        %v333 = vld [vmem:[%s280 + $0x188] sm:$0xff]
        %v334 = vld [vmem:[%s280 + $0x190] sm:$0xff]
        %v335 = vld [vmem:[%s280 + $0x198] sm:$0xff]
        %v336 = vld [vmem:[%s280 + $0x1a0] sm:$0xff]
        %v337 = vld [vmem:[%s280 + $0x1a8] sm:$0xff]
        %v338 = vld [vmem:[%s280 + $0x1b0] sm:$0xff]
        %v339 = vld [vmem:[%s280 + $0x1b8] sm:$0xff]
        %v340 = vld [vmem:[%s280 + $0x1c0] sm:$0xff]
        %v341 = vld [vmem:[%s280 + $0x1c8] sm:$0xff]
        %v342 = vld [vmem:[%s280 + $0x1d0] sm:$0xff]
        %v343 = vld [vmem:[%s280 + $0x1d8] sm:$0xff]
        %v344 = vld [vmem:[%s280 + $0x1e0] sm:$0xff]
        %v345 = vld [vmem:[%s280 + $0x1e8] sm:$0xff]
        %v346 = vld [vmem:[%s280 + $0x1f0] sm:$0xff]
        %v347 = vld [vmem:[%s280 + $0x1f8] sm:$0xff]
        %v348 = vpack.c.bf16 %v285, %v284
        %v349 = vpack.c.bf16 %v287, %v286
        %v350 = vpack.c.bf16 %v289, %v288
        %v351 = vpack.c.bf16 %v291, %v290
        %v352 = vpack.c.bf16 %v293, %v292
        %v353 = vpack.c.bf16 %v295, %v294
        %v354 = vpack.c.bf16 %v297, %v296
        %v355 = vpack.c.bf16 %v299, %v298
        %v356 = vpack.c.bf16 %v301, %v300
        %v357 = vpack.c.bf16 %v303, %v302
        %v358 = vpack.c.bf16 %v305, %v304
        %v359 = vpack.c.bf16 %v307, %v306
        %v360 = vpack.c.bf16 %v309, %v308
        %v361 = vpack.c.bf16 %v311, %v310
        %v362 = vpack.c.bf16 %v313, %v312
        %v363 = vpack.c.bf16 %v315, %v314
        %v364 = vpack.c.bf16 %v317, %v316
        %v365 = vpack.c.bf16 %v319, %v318
        %v366 = vpack.c.bf16 %v321, %v320
        %v367 = vpack.c.bf16 %v323, %v322
        %v368 = vpack.c.bf16 %v325, %v324
        %v369 = vpack.c.bf16 %v327, %v326
        %v370 = vpack.c.bf16 %v329, %v328
        %v371 = vpack.c.bf16 %v331, %v330
        %v372 = vpack.c.bf16 %v333, %v332
        %v373 = vpack.c.bf16 %v335, %v334
        %v374 = vpack.c.bf16 %v337, %v336
        %v375 = vpack.c.bf16 %v339, %v338
        %v376 = vpack.c.bf16 %v341, %v340
        %v377 = vpack.c.bf16 %v343, %v342
        %v378 = vpack.c.bf16 %v345, %v344
        %v379 = vpack.c.bf16 %v347, %v346
        %v380 = vld [vmem:[%s1] sm:$0xf]
        %v381 = vld [vmem:[%s1 + $0x4] sm:$0xf]
        %v382 = vld [vmem:[%s2] sm:$0x1]
        %v384 = vlaneseq
        %v385 = vshrl.u32 %v384, 7
        %v386 = vsub.s32 0, %v385
        %v387 = vrot.slane %v382, %v386
        %v391 = vunpack.c.l.b16 %v380
        %v392 = vunpack.c.l.b16 %v381
        %v393 = vpack.c.b16 %v392, %v391
        %vm395 = vcmask 130048
        %v397 = vsel %vm395, %v348, 0
        %v400 = vsel %vm395, %v349, 0
        %v403 = vsel %vm395, %v350, 0
        %v406 = vsel %vm395, %v351, 0
        %v409 = vsel %vm395, %v352, 0
        %v412 = vsel %vm395, %v353, 0
        %v415 = vsel %vm395, %v354, 0
        %v418 = vsel %vm395, %v355, 0
        %v421 = vsel %vm395, %v356, 0
        %v424 = vsel %vm395, %v357, 0
        %v427 = vsel %vm395, %v358, 0
        %v430 = vsel %vm395, %v359, 0
        %v433 = vsel %vm395, %v360, 0
        %v436 = vsel %vm395, %v361, 0
        %v439 = vsel %vm395, %v362, 0
        %v442 = vsel %vm395, %v363, 0
        %v445 = vsel %vm395, %v364, 0
        %v448 = vsel %vm395, %v365, 0
        %v451 = vsel %vm395, %v366, 0
        %v454 = vsel %vm395, %v367, 0
        %v457 = vsel %vm395, %v368, 0
        %v460 = vsel %vm395, %v369, 0
        %v463 = vsel %vm395, %v370, 0
        %v466 = vsel %vm395, %v371, 0
        %v469 = vsel %vm395, %v372, 0
        %v472 = vsel %vm395, %v373, 0
        %v475 = vsel %vm395, %v374, 0
        %v478 = vsel %vm395, %v375, 0
        %v481 = vsel %vm395, %v376, 0
        %v484 = vsel %vm395, %v377, 0
        %v487 = vsel %vm395, %v378, 0
        %v490 = vsel %vm395, %v379, 0
        %492 = vmatprep.subr.bf16.mxu0 0
        %493 = vmatpush1.bf16.msra.mxu0 0
        %494 = vmatprep.subr.bf16.mxu0 0
        %495 = vmatpush1.bf16.msra.mxu0 0
        %496 = vmatprep.subr.bf16.mxu0 0
        %497 = vmatpush1.bf16.msra.mxu0 0
        %498 = vmatprep.subr.bf16.mxu0 0
        %499 = vmatpush1.bf16.msra.mxu0 0
        %500 = vmatprep.subr.bf16.mxu0 0
        %501 = vmatpush1.bf16.msra.mxu0 0
        %502 = vmatprep.subr.bf16.mxu0 0
        %503 = vmatpush1.bf16.msra.mxu0 0
        %504 = vmatprep.subr.bf16.mxu0 0
        %505 = vmatpush1.bf16.msra.mxu0 0
        %506 = vmatprep.subr.bf16.mxu0 0
        %507 = vmatpush1.bf16.msra.mxu0 %v393
        %508 = vmatprep.subr.bf16.mxu0 0
        %509 = vmatpush2.bf16.msra.mxu0 0
        %510 = vmatprep.subr.bf16.mxu0 0
        %511 = vmatpush2.bf16.msra.mxu0 0
        %512 = vmatprep.subr.bf16.mxu0 0
        %513 = vmatpush2.bf16.msra.mxu0 0
        %514 = vmatprep.subr.bf16.mxu0 0
        %515 = vmatpush2.bf16.msra.mxu0 0
        %516 = vmatprep.subr.bf16.mxu0 0
        %517 = vmatpush2.bf16.msra.mxu0 0
        %518 = vmatprep.subr.bf16.mxu0 0
        %519 = vmatpush2.bf16.msra.mxu0 0
        %520 = vmatprep.subr.bf16.mxu0 0
        %521 = vmatpush2.bf16.msra.mxu0 0
        %522 = vmatprep.subr.bf16.mxu0 0
        %523 = vmatpush2.bf16.msra.mxu0 0
        %524 = vmatprep.mubr.bf16.mxu0 0
        %525 = vmatmul.mubr.bf16.gmra.mxu0 %v397
        %v526 = vpop.f32.mrf.mxu0
        %v527 = vadd.f32 %v387, %v526
        %v528 = vpop.f32.mrf.mxu0
        %v529 = vpop.f32.mrf.mxu0
        %v530 = vadd.f32 %v387, %v529
        %v531 = vpop.f32.mrf.mxu0
        %532 = vmatprep.mubr.bf16.mxu0 0
        %533 = vmatmul.mubr.bf16.gmra.mxu0 %v400
        %v534 = vpop.f32.mrf.mxu0
        %v535 = vadd.f32 %v387, %v534
        %v536 = vpop.f32.mrf.mxu0
        %v537 = vpop.f32.mrf.mxu0
        %v538 = vadd.f32 %v387, %v537
        %v539 = vpop.f32.mrf.mxu0
        %540 = vmatprep.mubr.bf16.mxu0 0
        %541 = vmatmul.mubr.bf16.gmra.mxu0 %v403
        %v542 = vpop.f32.mrf.mxu0
        %v543 = vadd.f32 %v387, %v542
        %v544 = vpop.f32.mrf.mxu0
        %v545 = vpop.f32.mrf.mxu0
        %v546 = vadd.f32 %v387, %v545
        %v547 = vpop.f32.mrf.mxu0
        %548 = vmatprep.mubr.bf16.mxu0 0
        %549 = vmatmul.mubr.bf16.gmra.mxu0 %v406
        %v550 = vpop.f32.mrf.mxu0
        %v551 = vadd.f32 %v387, %v550
        %v552 = vpop.f32.mrf.mxu0
        %v553 = vpop.f32.mrf.mxu0
        %v554 = vadd.f32 %v387, %v553
        %v555 = vpop.f32.mrf.mxu0
        %556 = vmatprep.mubr.bf16.mxu0 0
        %557 = vmatmul.mubr.bf16.gmra.mxu0 %v409
        %v558 = vpop.f32.mrf.mxu0
        %v559 = vadd.f32 %v387, %v558
        %v560 = vpop.f32.mrf.mxu0
        %v561 = vpop.f32.mrf.mxu0
        %v562 = vadd.f32 %v387, %v561
        %v563 = vpop.f32.mrf.mxu0
        %564 = vmatprep.mubr.bf16.mxu0 0
        %565 = vmatmul.mubr.bf16.gmra.mxu0 %v412
        %v566 = vpop.f32.mrf.mxu0
        %v567 = vadd.f32 %v387, %v566
        %v568 = vpop.f32.mrf.mxu0
        %v569 = vpop.f32.mrf.mxu0
        %v570 = vadd.f32 %v387, %v569
        %v571 = vpop.f32.mrf.mxu0
        %572 = vmatprep.mubr.bf16.mxu0 0
        %573 = vmatmul.mubr.bf16.gmra.mxu0 %v415
        %v574 = vpop.f32.mrf.mxu0
        %v575 = vadd.f32 %v387, %v574
        %v576 = vpop.f32.mrf.mxu0
        %v577 = vpop.f32.mrf.mxu0
        %v578 = vadd.f32 %v387, %v577
        %v579 = vpop.f32.mrf.mxu0
        %580 = vmatprep.mubr.bf16.mxu0 0
        %581 = vmatmul.mubr.bf16.gmra.mxu0 %v418
        %v582 = vpop.f32.mrf.mxu0
        %v583 = vadd.f32 %v387, %v582
        %v584 = vpop.f32.mrf.mxu0
        %v585 = vpop.f32.mrf.mxu0
        %v586 = vadd.f32 %v387, %v585
        %v587 = vpop.f32.mrf.mxu0
        %588 = vmatprep.mubr.bf16.mxu0 0
        %589 = vmatmul.mubr.bf16.gmra.mxu0 %v421
        %v590 = vpop.f32.mrf.mxu0
        %v591 = vadd.f32 %v387, %v590
        %v592 = vpop.f32.mrf.mxu0
        %v593 = vpop.f32.mrf.mxu0
        %v594 = vadd.f32 %v387, %v593
        %v595 = vpop.f32.mrf.mxu0
        %596 = vmatprep.mubr.bf16.mxu0 0
        %597 = vmatmul.mubr.bf16.gmra.mxu0 %v424
        %v598 = vpop.f32.mrf.mxu0
        %v599 = vadd.f32 %v387, %v598
        %v600 = vpop.f32.mrf.mxu0
        %v601 = vpop.f32.mrf.mxu0
        %v602 = vadd.f32 %v387, %v601
        %v603 = vpop.f32.mrf.mxu0
        %604 = vmatprep.mubr.bf16.mxu0 0
        %605 = vmatmul.mubr.bf16.gmra.mxu0 %v427
        %v606 = vpop.f32.mrf.mxu0
        %v607 = vadd.f32 %v387, %v606
        %v608 = vpop.f32.mrf.mxu0
        %v609 = vpop.f32.mrf.mxu0
        %v610 = vadd.f32 %v387, %v609
        %v611 = vpop.f32.mrf.mxu0
        %612 = vmatprep.mubr.bf16.mxu0 0
        %613 = vmatmul.mubr.bf16.gmra.mxu0 %v430
        %v614 = vpop.f32.mrf.mxu0
        %v615 = vadd.f32 %v387, %v614
        %v616 = vpop.f32.mrf.mxu0
        %v617 = vpop.f32.mrf.mxu0
        %v618 = vadd.f32 %v387, %v617
        %v619 = vpop.f32.mrf.mxu0
        %620 = vmatprep.mubr.bf16.mxu0 0
        %621 = vmatmul.mubr.bf16.gmra.mxu0 %v433
        %v622 = vpop.f32.mrf.mxu0
        %v623 = vadd.f32 %v387, %v622
        %v624 = vpop.f32.mrf.mxu0
        %v625 = vpop.f32.mrf.mxu0
        %v626 = vadd.f32 %v387, %v625
        %v627 = vpop.f32.mrf.mxu0
        %628 = vmatprep.mubr.bf16.mxu0 0
        %629 = vmatmul.mubr.bf16.gmra.mxu0 %v436
        %v630 = vpop.f32.mrf.mxu0
        %v631 = vadd.f32 %v387, %v630
        %v632 = vpop.f32.mrf.mxu0
        %v633 = vpop.f32.mrf.mxu0
        %v634 = vadd.f32 %v387, %v633
        %v635 = vpop.f32.mrf.mxu0
        %636 = vmatprep.mubr.bf16.mxu0 0
        %637 = vmatmul.mubr.bf16.gmra.mxu0 %v439
        %v638 = vpop.f32.mrf.mxu0
        %v639 = vadd.f32 %v387, %v638
        %v640 = vpop.f32.mrf.mxu0
        %v641 = vpop.f32.mrf.mxu0
        %v642 = vadd.f32 %v387, %v641
        %v643 = vpop.f32.mrf.mxu0
        %644 = vmatprep.mubr.bf16.mxu0 0
        %645 = vmatmul.mubr.bf16.gmra.mxu0 %v442
        %v646 = vpop.f32.mrf.mxu0
        %v647 = vadd.f32 %v387, %v646
        %v648 = vpop.f32.mrf.mxu0
        %v649 = vpop.f32.mrf.mxu0
        %v650 = vadd.f32 %v387, %v649
        %v651 = vpop.f32.mrf.mxu0
        %652 = vmatprep.mubr.bf16.mxu0 0
        %653 = vmatmul.mubr.bf16.gmra.mxu0 %v445
        %v654 = vpop.f32.mrf.mxu0
        %v655 = vadd.f32 %v387, %v654
        %v656 = vpop.f32.mrf.mxu0
        %v657 = vpop.f32.mrf.mxu0
        %v658 = vadd.f32 %v387, %v657
        %v659 = vpop.f32.mrf.mxu0
        %660 = vmatprep.mubr.bf16.mxu0 0
        %661 = vmatmul.mubr.bf16.gmra.mxu0 %v448
        %v662 = vpop.f32.mrf.mxu0
        %v663 = vadd.f32 %v387, %v662
        %v664 = vpop.f32.mrf.mxu0
        %v665 = vpop.f32.mrf.mxu0
        %v666 = vadd.f32 %v387, %v665
        %v667 = vpop.f32.mrf.mxu0
        %668 = vmatprep.mubr.bf16.mxu0 0
        %669 = vmatmul.mubr.bf16.gmra.mxu0 %v451
        %v670 = vpop.f32.mrf.mxu0
        %v671 = vadd.f32 %v387, %v670
        %v672 = vpop.f32.mrf.mxu0
        %v673 = vpop.f32.mrf.mxu0
        %v674 = vadd.f32 %v387, %v673
        %v675 = vpop.f32.mrf.mxu0
        %676 = vmatprep.mubr.bf16.mxu0 0
        %677 = vmatmul.mubr.bf16.gmra.mxu0 %v454
        %v678 = vpop.f32.mrf.mxu0
        %v679 = vadd.f32 %v387, %v678
        %v680 = vpop.f32.mrf.mxu0
        %v681 = vpop.f32.mrf.mxu0
        %v682 = vadd.f32 %v387, %v681
        %v683 = vpop.f32.mrf.mxu0
        %684 = vmatprep.mubr.bf16.mxu0 0
        %685 = vmatmul.mubr.bf16.gmra.mxu0 %v457
        %v686 = vpop.f32.mrf.mxu0
        %v687 = vadd.f32 %v387, %v686
        %v688 = vpop.f32.mrf.mxu0
        %v689 = vpop.f32.mrf.mxu0
        %v690 = vadd.f32 %v387, %v689
        %v691 = vpop.f32.mrf.mxu0
        %692 = vmatprep.mubr.bf16.mxu0 0
        %693 = vmatmul.mubr.bf16.gmra.mxu0 %v460
        %v694 = vpop.f32.mrf.mxu0
        %v695 = vadd.f32 %v387, %v694
        %v696 = vpop.f32.mrf.mxu0
        %v697 = vpop.f32.mrf.mxu0
        %v698 = vadd.f32 %v387, %v697
        %v699 = vpop.f32.mrf.mxu0
        %700 = vmatprep.mubr.bf16.mxu0 0
        %701 = vmatmul.mubr.bf16.gmra.mxu0 %v463
        %v702 = vpop.f32.mrf.mxu0
        %v703 = vadd.f32 %v387, %v702
        %v704 = vpop.f32.mrf.mxu0
        %v705 = vpop.f32.mrf.mxu0
        %v706 = vadd.f32 %v387, %v705
        %v707 = vpop.f32.mrf.mxu0
        %708 = vmatprep.mubr.bf16.mxu0 0
        %709 = vmatmul.mubr.bf16.gmra.mxu0 %v466
        %v710 = vpop.f32.mrf.mxu0
        %v711 = vadd.f32 %v387, %v710
        %v712 = vpop.f32.mrf.mxu0
        %v713 = vpop.f32.mrf.mxu0
        %v714 = vadd.f32 %v387, %v713
        %v715 = vpop.f32.mrf.mxu0
        %716 = vmatprep.mubr.bf16.mxu0 0
        %717 = vmatmul.mubr.bf16.gmra.mxu0 %v469
        %v718 = vpop.f32.mrf.mxu0
        %v719 = vadd.f32 %v387, %v718
        %v720 = vpop.f32.mrf.mxu0
        %v721 = vpop.f32.mrf.mxu0
        %v722 = vadd.f32 %v387, %v721
        %v723 = vpop.f32.mrf.mxu0
        %724 = vmatprep.mubr.bf16.mxu0 0
        %725 = vmatmul.mubr.bf16.gmra.mxu0 %v472
        %v726 = vpop.f32.mrf.mxu0
        %v727 = vadd.f32 %v387, %v726
        %v728 = vpop.f32.mrf.mxu0
        %v729 = vpop.f32.mrf.mxu0
        %v730 = vadd.f32 %v387, %v729
        %v731 = vpop.f32.mrf.mxu0
        %732 = vmatprep.mubr.bf16.mxu0 0
        %733 = vmatmul.mubr.bf16.gmra.mxu0 %v475
        %v734 = vpop.f32.mrf.mxu0
        %v735 = vadd.f32 %v387, %v734
        %v736 = vpop.f32.mrf.mxu0
        %v737 = vpop.f32.mrf.mxu0
        %v738 = vadd.f32 %v387, %v737
        %v739 = vpop.f32.mrf.mxu0
        %740 = vmatprep.mubr.bf16.mxu0 0
        %741 = vmatmul.mubr.bf16.gmra.mxu0 %v478
        %v742 = vpop.f32.mrf.mxu0
        %v743 = vadd.f32 %v387, %v742
        %v744 = vpop.f32.mrf.mxu0
        %v745 = vpop.f32.mrf.mxu0
        %v746 = vadd.f32 %v387, %v745
        %v747 = vpop.f32.mrf.mxu0
        %748 = vmatprep.mubr.bf16.mxu0 0
        %749 = vmatmul.mubr.bf16.gmra.mxu0 %v481
        %v750 = vpop.f32.mrf.mxu0
        %v751 = vadd.f32 %v387, %v750
        %v752 = vpop.f32.mrf.mxu0
        %v753 = vpop.f32.mrf.mxu0
        %v754 = vadd.f32 %v387, %v753
        %v755 = vpop.f32.mrf.mxu0
        %756 = vmatprep.mubr.bf16.mxu0 0
        %757 = vmatmul.mubr.bf16.gmra.mxu0 %v484
        %v758 = vpop.f32.mrf.mxu0
        %v759 = vadd.f32 %v387, %v758
        %v760 = vpop.f32.mrf.mxu0
        %v761 = vpop.f32.mrf.mxu0
        %v762 = vadd.f32 %v387, %v761
        %v763 = vpop.f32.mrf.mxu0
        %764 = vmatprep.mubr.bf16.mxu0 0
        %765 = vmatmul.mubr.bf16.gmra.mxu0 %v487
        %v766 = vpop.f32.mrf.mxu0
        %v767 = vadd.f32 %v387, %v766
        %v768 = vpop.f32.mrf.mxu0
        %v769 = vpop.f32.mrf.mxu0
        %v770 = vadd.f32 %v387, %v769
        %v771 = vpop.f32.mrf.mxu0
        %772 = vmatprep.mubr.bf16.mxu0 0
        %773 = vmatmul.mubr.bf16.gmra.mxu0 %v490
        %v774 = vpop.f32.mrf.mxu0
        %v775 = vadd.f32 %v387, %v774
        %v776 = vpop.f32.mrf.mxu0
        %v777 = vpop.f32.mrf.mxu0
        %v778 = vadd.f32 %v387, %v777
        %v779 = vpop.f32.mrf.mxu0
        %780 = vdwg.mxu0
        %v781 = vmax.f32 %v527, 0.0
        %v782 = vmax.f32 %v530, 0.0
        %v783 = vmax.f32 %v535, 0.0
        %v784 = vmax.f32 %v538, 0.0
        %v785 = vmax.f32 %v543, 0.0
        %v786 = vmax.f32 %v546, 0.0
        %v787 = vmax.f32 %v551, 0.0
        %v788 = vmax.f32 %v554, 0.0
        %v789 = vmax.f32 %v559, 0.0
        %v790 = vmax.f32 %v562, 0.0
        %v791 = vmax.f32 %v567, 0.0
        %v792 = vmax.f32 %v570, 0.0
        %v793 = vmax.f32 %v575, 0.0
        %v794 = vmax.f32 %v578, 0.0
        %v795 = vmax.f32 %v583, 0.0
        %v796 = vmax.f32 %v586, 0.0
        %v797 = vmax.f32 %v591, 0.0
        %v798 = vmax.f32 %v594, 0.0
        %v799 = vmax.f32 %v599, 0.0
        %v800 = vmax.f32 %v602, 0.0
        %v801 = vmax.f32 %v607, 0.0
        %v802 = vmax.f32 %v610, 0.0
        %v803 = vmax.f32 %v615, 0.0
        %v804 = vmax.f32 %v618, 0.0
        %v805 = vmax.f32 %v623, 0.0
        %v806 = vmax.f32 %v626, 0.0
        %v807 = vmax.f32 %v631, 0.0
        %v808 = vmax.f32 %v634, 0.0
        %v809 = vmax.f32 %v639, 0.0
        %v810 = vmax.f32 %v642, 0.0
        %v811 = vmax.f32 %v647, 0.0
        %v812 = vmax.f32 %v650, 0.0
        %v813 = vmax.f32 %v655, 0.0
        %v814 = vmax.f32 %v658, 0.0
        %v815 = vmax.f32 %v663, 0.0
        %v816 = vmax.f32 %v666, 0.0
        %v817 = vmax.f32 %v671, 0.0
        %v818 = vmax.f32 %v674, 0.0
        %v819 = vmax.f32 %v679, 0.0
        %v820 = vmax.f32 %v682, 0.0
        %v821 = vmax.f32 %v687, 0.0
        %v822 = vmax.f32 %v690, 0.0
        %v823 = vmax.f32 %v695, 0.0
        %v824 = vmax.f32 %v698, 0.0
        %v825 = vmax.f32 %v703, 0.0
        %v826 = vmax.f32 %v706, 0.0
        %v827 = vmax.f32 %v711, 0.0
        %v828 = vmax.f32 %v714, 0.0
        %v829 = vmax.f32 %v719, 0.0
        %v830 = vmax.f32 %v722, 0.0
        %v831 = vmax.f32 %v727, 0.0
        %v832 = vmax.f32 %v730, 0.0
        %v833 = vmax.f32 %v735, 0.0
        %v834 = vmax.f32 %v738, 0.0
        %v835 = vmax.f32 %v743, 0.0
        %v836 = vmax.f32 %v746, 0.0
        %v837 = vmax.f32 %v751, 0.0
        %v838 = vmax.f32 %v754, 0.0
        %v839 = vmax.f32 %v759, 0.0
        %v840 = vmax.f32 %v762, 0.0
        %v841 = vmax.f32 %v767, 0.0
        %v842 = vmax.f32 %v770, 0.0
        %v843 = vmax.f32 %v775, 0.0
        %v844 = vmax.f32 %v778, 0.0
        %vm845 = vcmask 31744
        %846 = vst.msk [vmem:[#allocation2] sm:$0xff] %vm845, 0.0
        %vm847 = vcmask 25600
        %848 = vst.msk [vmem:[#allocation2 + $0x8] sm:$0x3] %vm847, 0.0
        %849 = vst.msk [vmem:[#allocation2 + $0xa0] sm:$0xff] %vm845, 0.0
        %850 = vst.msk [vmem:[#allocation2 + $0xa8] sm:$0x3] %vm847, 0.0
        %851 = vst.msk [vmem:[#allocation2 + $0x140] sm:$0xff] %vm845, 0.0
        %852 = vst.msk [vmem:[#allocation2 + $0x148] sm:$0x3] %vm847, 0.0
        %853 = vst.msk [vmem:[#allocation2 + $0x1e0] sm:$0xff] %vm845, 0.0
        %854 = vst.msk [vmem:[#allocation2 + $0x1e8] sm:$0x3] %vm847, 0.0
        %855 = vst.msk [vmem:[#allocation2 + $0x280] sm:$0xff] %vm845, 0.0
        %856 = vst.msk [vmem:[#allocation2 + $0x288] sm:$0x3] %vm847, 0.0
        %857 = vst.msk [vmem:[#allocation2 + $0x320] sm:$0xff] %vm845, 0.0
        %858 = vst.msk [vmem:[#allocation2 + $0x328] sm:$0x3] %vm847, 0.0
        %859 = vst.msk [vmem:[#allocation2 + $0x3c0] sm:$0xff] %vm845, 0.0
        %860 = vst.msk [vmem:[#allocation2 + $0x3c8] sm:$0x3] %vm847, 0.0
        %861 = vst.msk [vmem:[#allocation2 + $0x460] sm:$0xff] %vm845, 0.0
        %862 = vst.msk [vmem:[#allocation2 + $0x468] sm:$0x3] %vm847, 0.0
        %s863 = scalar_lea.vmem [#allocation2], 144
        %864 = vst.msk [vmem:[%s863] sm:$0xff] %vm845, 0.0
        %865 = vst.msk [vmem:[%s863 + $0x8] sm:$0x3] %vm847, 0.0
        %866 = vst.msk [vmem:[%s863 + $0xa0] sm:$0xff] %vm845, 0.0
        %867 = vst.msk [vmem:[%s863 + $0xa8] sm:$0x3] %vm847, 0.0
        %868 = vst.msk [vmem:[%s863 + $0x140] sm:$0xff] %vm845, 0.0
        %869 = vst.msk [vmem:[%s863 + $0x148] sm:$0x3] %vm847, 0.0
        %870 = vst.msk [vmem:[%s863 + $0x1e0] sm:$0xff] %vm845, 0.0
        %871 = vst.msk [vmem:[%s863 + $0x1e8] sm:$0x3] %vm847, 0.0
        %872 = vst.msk [vmem:[%s863 + $0x280] sm:$0xff] %vm845, 0.0
        %873 = vst.msk [vmem:[%s863 + $0x288] sm:$0x3] %vm847, 0.0
        %874 = vst.msk [vmem:[%s863 + $0x320] sm:$0xff] %vm845, 0.0
        %875 = vst.msk [vmem:[%s863 + $0x328] sm:$0x3] %vm847, 0.0
        %876 = vst.msk [vmem:[%s863 + $0x3c0] sm:$0xff] %vm845, 0.0
        %877 = vst.msk [vmem:[%s863 + $0x3c8] sm:$0x3] %vm847, 0.0
        %878 = vst.msk [vmem:[%s863 + $0x460] sm:$0xff] %vm845, 0.0
        %879 = vst.msk [vmem:[%s863 + $0x468] sm:$0x3] %vm847, 0.0
        %vm880 = vcmask 24576
        %881 = vst.msk [vmem:[#allocation2] sm:$0x1] %vm880, 0.0
        %882 = vst.msk [vmem:[#allocation2 + $0x10] sm:$0x1] %vm880, 0.0
        %883 = vst.msk [vmem:[#allocation2 + $0x20] sm:$0x1] %vm880, 0.0
        %884 = vst.msk [vmem:[#allocation2 + $0x30] sm:$0x1] %vm880, 0.0
        %885 = vst.msk [vmem:[#allocation2 + $0x40] sm:$0x1] %vm880, 0.0
        %886 = vst.msk [vmem:[#allocation2 + $0x50] sm:$0x1] %vm880, 0.0
        %887 = vst.msk [vmem:[#allocation2 + $0x60] sm:$0x1] %vm880, 0.0
        %888 = vst.msk [vmem:[#allocation2 + $0x70] sm:$0x1] %vm880, 0.0
        %889 = vst.msk [vmem:[#allocation2 + $0x80] sm:$0x1] %vm880, 0.0
        %890 = vst.msk [vmem:[#allocation2 + $0x90] sm:$0x1] %vm880, 0.0
        %891 = vst.msk [vmem:[#allocation2 + $0xa0] sm:$0x1] %vm880, 0.0
        %892 = vst.msk [vmem:[#allocation2 + $0xb0] sm:$0x1] %vm880, 0.0
        %893 = vst.msk [vmem:[#allocation2 + $0xc0] sm:$0x1] %vm880, 0.0
        %894 = vst.msk [vmem:[#allocation2 + $0xd0] sm:$0x1] %vm880, 0.0
        %895 = vst.msk [vmem:[#allocation2 + $0xe0] sm:$0x1] %vm880, 0.0
        %896 = vst.msk [vmem:[#allocation2 + $0xf0] sm:$0x1] %vm880, 0.0
        %897 = vst.msk [vmem:[#allocation2 + $0x100] sm:$0x1] %vm880, 0.0
        %898 = vst.msk [vmem:[#allocation2 + $0x110] sm:$0x1] %vm880, 0.0
        %899 = vst.msk [vmem:[#allocation2 + $0x120] sm:$0x1] %vm880, 0.0
        %900 = vst.msk [vmem:[#allocation2 + $0x130] sm:$0x1] %vm880, 0.0
        %901 = vst.msk [vmem:[#allocation2 + $0x140] sm:$0x1] %vm880, 0.0
        %902 = vst.msk [vmem:[#allocation2 + $0x150] sm:$0x1] %vm880, 0.0
        %903 = vst.msk [vmem:[#allocation2 + $0x160] sm:$0x1] %vm880, 0.0
        %904 = vst.msk [vmem:[#allocation2 + $0x170] sm:$0x1] %vm880, 0.0
        %905 = vst.msk [vmem:[#allocation2 + $0x180] sm:$0x1] %vm880, 0.0
        %906 = vst.msk [vmem:[#allocation2 + $0x190] sm:$0x1] %vm880, 0.0
        %907 = vst.msk [vmem:[#allocation2 + $0x1a0] sm:$0x1] %vm880, 0.0
        %908 = vst.msk [vmem:[#allocation2 + $0x1b0] sm:$0x1] %vm880, 0.0
        %909 = vst.msk [vmem:[#allocation2 + $0x1c0] sm:$0x1] %vm880, 0.0
        %910 = vst.msk [vmem:[#allocation2 + $0x1d0] sm:$0x1] %vm880, 0.0
        %911 = vst.msk [vmem:[#allocation2 + $0x1e0] sm:$0x1] %vm880, 0.0
        %912 = vst.msk [vmem:[#allocation2 + $0x1f0] sm:$0x1] %vm880, 0.0
        %913 = vst.msk [vmem:[#allocation2 + $0x200] sm:$0x1] %vm880, 0.0
        %914 = vst.msk [vmem:[#allocation2 + $0x210] sm:$0x1] %vm880, 0.0
        %915 = vst.msk [vmem:[#allocation2 + $0x220] sm:$0x1] %vm880, 0.0
        %916 = vst.msk [vmem:[#allocation2 + $0x230] sm:$0x1] %vm880, 0.0
        %917 = vst.msk [vmem:[#allocation2 + $0x240] sm:$0x1] %vm880, 0.0
        %918 = vst.msk [vmem:[#allocation2 + $0x250] sm:$0x1] %vm880, 0.0
        %919 = vst.msk [vmem:[#allocation2 + $0x260] sm:$0x1] %vm880, 0.0
        %920 = vst.msk [vmem:[#allocation2 + $0x270] sm:$0x1] %vm880, 0.0
        %921 = vst.msk [vmem:[#allocation2 + $0x280] sm:$0x1] %vm880, 0.0
        %922 = vst.msk [vmem:[#allocation2 + $0x290] sm:$0x1] %vm880, 0.0
        %923 = vst.msk [vmem:[#allocation2 + $0x2a0] sm:$0x1] %vm880, 0.0
        %924 = vst.msk [vmem:[#allocation2 + $0x2b0] sm:$0x1] %vm880, 0.0
        %925 = vst.msk [vmem:[#allocation2 + $0x2c0] sm:$0x1] %vm880, 0.0
        %926 = vst.msk [vmem:[#allocation2 + $0x2d0] sm:$0x1] %vm880, 0.0
        %927 = vst.msk [vmem:[#allocation2 + $0x2e0] sm:$0x1] %vm880, 0.0
        %928 = vst.msk [vmem:[#allocation2 + $0x2f0] sm:$0x1] %vm880, 0.0
        %929 = vst.msk [vmem:[#allocation2 + $0x300] sm:$0x1] %vm880, 0.0
        %930 = vst.msk [vmem:[#allocation2 + $0x310] sm:$0x1] %vm880, 0.0
        %931 = vst.msk [vmem:[#allocation2 + $0x320] sm:$0x1] %vm880, 0.0
        %932 = vst.msk [vmem:[#allocation2 + $0x330] sm:$0x1] %vm880, 0.0
        %933 = vst.msk [vmem:[#allocation2 + $0x340] sm:$0x1] %vm880, 0.0
        %934 = vst.msk [vmem:[#allocation2 + $0x350] sm:$0x1] %vm880, 0.0
        %935 = vst.msk [vmem:[#allocation2 + $0x360] sm:$0x1] %vm880, 0.0
        %936 = vst.msk [vmem:[#allocation2 + $0x370] sm:$0x1] %vm880, 0.0
        %937 = vst.msk [vmem:[#allocation2 + $0x380] sm:$0x1] %vm880, 0.0
        %938 = vst.msk [vmem:[#allocation2 + $0x390] sm:$0x1] %vm880, 0.0
        %939 = vst.msk [vmem:[#allocation2 + $0x3a0] sm:$0x1] %vm880, 0.0
        %940 = vst.msk [vmem:[#allocation2 + $0x3b0] sm:$0x1] %vm880, 0.0
        %941 = vst.msk [vmem:[#allocation2 + $0x3c0] sm:$0x1] %vm880, 0.0
        %942 = vst.msk [vmem:[#allocation2 + $0x3d0] sm:$0x1] %vm880, 0.0
        %943 = vst.msk [vmem:[#allocation2 + $0x3e0] sm:$0x1] %vm880, 0.0
        %944 = vst.msk [vmem:[#allocation2 + $0x3f0] sm:$0x1] %vm880, 0.0
        %945 = vst.msk [vmem:[#allocation2 + $0x400] sm:$0x1] %vm880, 0.0
        %946 = vst.msk [vmem:[#allocation2 + $0x410] sm:$0x1] %vm880, 0.0
        %947 = vst.msk [vmem:[#allocation2 + $0x420] sm:$0x1] %vm880, 0.0
        %948 = vst.msk [vmem:[#allocation2 + $0x430] sm:$0x1] %vm880, 0.0
        %949 = vst.msk [vmem:[#allocation2 + $0x440] sm:$0x1] %vm880, 0.0
        %950 = vst.msk [vmem:[#allocation2 + $0x450] sm:$0x1] %vm880, 0.0
        %951 = vst.msk [vmem:[#allocation2 + $0x460] sm:$0x1] %vm880, 0.0
        %952 = vst.msk [vmem:[#allocation2 + $0x470] sm:$0x1] %vm880, 0.0
        %953 = vst.msk [vmem:[#allocation2 + $0x480] sm:$0x1] %vm880, 0.0
        %954 = vst.msk [vmem:[#allocation2 + $0x490] sm:$0x1] %vm880, 0.0
        %955 = vst.msk [vmem:[#allocation2 + $0x4a0] sm:$0x1] %vm880, 0.0
        %956 = vst.msk [vmem:[#allocation2 + $0x4b0] sm:$0x1] %vm880, 0.0
        %957 = vst.msk [vmem:[#allocation2 + $0x4c0] sm:$0x1] %vm880, 0.0
        %958 = vst.msk [vmem:[#allocation2 + $0x4d0] sm:$0x1] %vm880, 0.0
        %959 = vst.msk [vmem:[#allocation2 + $0x4e0] sm:$0x1] %vm880, 0.0
        %960 = vst.msk [vmem:[#allocation2 + $0x4f0] sm:$0x1] %vm880, 0.0
        %961 = vst.msk [vmem:[#allocation2 + $0x9] sm:$0x1] %vm880, 0.0
        %962 = vst.msk [vmem:[#allocation2 + $0x19] sm:$0x1] %vm880, 0.0
        %963 = vst.msk [vmem:[#allocation2 + $0x29] sm:$0x1] %vm880, 0.0
        %964 = vst.msk [vmem:[#allocation2 + $0x39] sm:$0x1] %vm880, 0.0
        %965 = vst.msk [vmem:[#allocation2 + $0x49] sm:$0x1] %vm880, 0.0
        %966 = vst.msk [vmem:[#allocation2 + $0x59] sm:$0x1] %vm880, 0.0
        %967 = vst.msk [vmem:[#allocation2 + $0x69] sm:$0x1] %vm880, 0.0
        %968 = vst.msk [vmem:[#allocation2 + $0x79] sm:$0x1] %vm880, 0.0
        %969 = vst.msk [vmem:[#allocation2 + $0x89] sm:$0x1] %vm880, 0.0
        %970 = vst.msk [vmem:[#allocation2 + $0x99] sm:$0x1] %vm880, 0.0
        %971 = vst.msk [vmem:[#allocation2 + $0xa9] sm:$0x1] %vm880, 0.0
        %972 = vst.msk [vmem:[#allocation2 + $0xb9] sm:$0x1] %vm880, 0.0
        %973 = vst.msk [vmem:[#allocation2 + $0xc9] sm:$0x1] %vm880, 0.0
        %974 = vst.msk [vmem:[#allocation2 + $0xd9] sm:$0x1] %vm880, 0.0
        %975 = vst.msk [vmem:[#allocation2 + $0xe9] sm:$0x1] %vm880, 0.0
        %976 = vst.msk [vmem:[#allocation2 + $0xf9] sm:$0x1] %vm880, 0.0
        %977 = vst.msk [vmem:[#allocation2 + $0x109] sm:$0x1] %vm880, 0.0
        %978 = vst.msk [vmem:[#allocation2 + $0x119] sm:$0x1] %vm880, 0.0
        %979 = vst.msk [vmem:[#allocation2 + $0x129] sm:$0x1] %vm880, 0.0
        %980 = vst.msk [vmem:[#allocation2 + $0x139] sm:$0x1] %vm880, 0.0
        %981 = vst.msk [vmem:[#allocation2 + $0x149] sm:$0x1] %vm880, 0.0
        %982 = vst.msk [vmem:[#allocation2 + $0x159] sm:$0x1] %vm880, 0.0
        %983 = vst.msk [vmem:[#allocation2 + $0x169] sm:$0x1] %vm880, 0.0
        %984 = vst.msk [vmem:[#allocation2 + $0x179] sm:$0x1] %vm880, 0.0
        %985 = vst.msk [vmem:[#allocation2 + $0x189] sm:$0x1] %vm880, 0.0
        %986 = vst.msk [vmem:[#allocation2 + $0x199] sm:$0x1] %vm880, 0.0
        %987 = vst.msk [vmem:[#allocation2 + $0x1a9] sm:$0x1] %vm880, 0.0
        %988 = vst.msk [vmem:[#allocation2 + $0x1b9] sm:$0x1] %vm880, 0.0
        %989 = vst.msk [vmem:[#allocation2 + $0x1c9] sm:$0x1] %vm880, 0.0
        %990 = vst.msk [vmem:[#allocation2 + $0x1d9] sm:$0x1] %vm880, 0.0
        %991 = vst.msk [vmem:[#allocation2 + $0x1e9] sm:$0x1] %vm880, 0.0
        %992 = vst.msk [vmem:[#allocation2 + $0x1f9] sm:$0x1] %vm880, 0.0
        %993 = vst.msk [vmem:[#allocation2 + $0x209] sm:$0x1] %vm880, 0.0
        %994 = vst.msk [vmem:[#allocation2 + $0x219] sm:$0x1] %vm880, 0.0
        %995 = vst.msk [vmem:[#allocation2 + $0x229] sm:$0x1] %vm880, 0.0
        %996 = vst.msk [vmem:[#allocation2 + $0x239] sm:$0x1] %vm880, 0.0
        %997 = vst.msk [vmem:[#allocation2 + $0x249] sm:$0x1] %vm880, 0.0
        %998 = vst.msk [vmem:[#allocation2 + $0x259] sm:$0x1] %vm880, 0.0
        %999 = vst.msk [vmem:[#allocation2 + $0x269] sm:$0x1] %vm880, 0.0
        %1000 = vst.msk [vmem:[#allocation2 + $0x279] sm:$0x1] %vm880, 0.0
        %1001 = vst.msk [vmem:[#allocation2 + $0x289] sm:$0x1] %vm880, 0.0
        %1002 = vst.msk [vmem:[#allocation2 + $0x299] sm:$0x1] %vm880, 0.0
        %1003 = vst.msk [vmem:[#allocation2 + $0x2a9] sm:$0x1] %vm880, 0.0
        %1004 = vst.msk [vmem:[#allocation2 + $0x2b9] sm:$0x1] %vm880, 0.0
        %1005 = vst.msk [vmem:[#allocation2 + $0x2c9] sm:$0x1] %vm880, 0.0
        %1006 = vst.msk [vmem:[#allocation2 + $0x2d9] sm:$0x1] %vm880, 0.0
        %1007 = vst.msk [vmem:[#allocation2 + $0x2e9] sm:$0x1] %vm880, 0.0
        %1008 = vst.msk [vmem:[#allocation2 + $0x2f9] sm:$0x1] %vm880, 0.0
        %1009 = vst.msk [vmem:[#allocation2 + $0x309] sm:$0x1] %vm880, 0.0
        %1010 = vst.msk [vmem:[#allocation2 + $0x319] sm:$0x1] %vm880, 0.0
        %1011 = vst.msk [vmem:[#allocation2 + $0x329] sm:$0x1] %vm880, 0.0
        %1012 = vst.msk [vmem:[#allocation2 + $0x339] sm:$0x1] %vm880, 0.0
        %1013 = vst.msk [vmem:[#allocation2 + $0x349] sm:$0x1] %vm880, 0.0
        %1014 = vst.msk [vmem:[#allocation2 + $0x359] sm:$0x1] %vm880, 0.0
        %1015 = vst.msk [vmem:[#allocation2 + $0x369] sm:$0x1] %vm880, 0.0
        %1016 = vst.msk [vmem:[#allocation2 + $0x379] sm:$0x1] %vm880, 0.0
        %1017 = vst.msk [vmem:[#allocation2 + $0x389] sm:$0x1] %vm880, 0.0
        %1018 = vst.msk [vmem:[#allocation2 + $0x399] sm:$0x1] %vm880, 0.0
        %1019 = vst.msk [vmem:[#allocation2 + $0x3a9] sm:$0x1] %vm880, 0.0
        %1020 = vst.msk [vmem:[#allocation2 + $0x3b9] sm:$0x1] %vm880, 0.0
        %1021 = vst.msk [vmem:[#allocation2 + $0x3c9] sm:$0x1] %vm880, 0.0
        %1022 = vst.msk [vmem:[#allocation2 + $0x3d9] sm:$0x1] %vm880, 0.0
        %1023 = vst.msk [vmem:[#allocation2 + $0x3e9] sm:$0x1] %vm880, 0.0
        %1024 = vst.msk [vmem:[#allocation2 + $0x3f9] sm:$0x1] %vm880, 0.0
        %1025 = vst.msk [vmem:[#allocation2 + $0x409] sm:$0x1] %vm880, 0.0
        %1026 = vst.msk [vmem:[#allocation2 + $0x419] sm:$0x1] %vm880, 0.0
        %1027 = vst.msk [vmem:[#allocation2 + $0x429] sm:$0x1] %vm880, 0.0
        %1028 = vst.msk [vmem:[#allocation2 + $0x439] sm:$0x1] %vm880, 0.0
        %1029 = vst.msk [vmem:[#allocation2 + $0x449] sm:$0x1] %vm880, 0.0
        %1030 = vst.msk [vmem:[#allocation2 + $0x459] sm:$0x1] %vm880, 0.0
        %1031 = vst.msk [vmem:[#allocation2 + $0x469] sm:$0x1] %vm880, 0.0
        %1032 = vst.msk [vmem:[#allocation2 + $0x479] sm:$0x1] %vm880, 0.0
        %1033 = vst.msk [vmem:[#allocation2 + $0x489] sm:$0x1] %vm880, 0.0
        %1034 = vst.msk [vmem:[#allocation2 + $0x499] sm:$0x1] %vm880, 0.0
        %1035 = vst.msk [vmem:[#allocation2 + $0x4a9] sm:$0x1] %vm880, 0.0
        %1036 = vst.msk [vmem:[#allocation2 + $0x4b9] sm:$0x1] %vm880, 0.0
        %1037 = vst.msk [vmem:[#allocation2 + $0x4c9] sm:$0x1] %vm880, 0.0
        %1038 = vst.msk [vmem:[#allocation2 + $0x4d9] sm:$0x1] %vm880, 0.0
        %1039 = vst.msk [vmem:[#allocation2 + $0x4e9] sm:$0x1] %vm880, 0.0
        %1040 = vst.msk [vmem:[#allocation2 + $0x4f9] sm:$0x1] %vm880, 0.0
        %s1041 = scalar_lea.vmem [#allocation2], 16
        %1042 = vst.msk [vmem:[%s1041 + $0x1] sm:$0xff] %vm845, %v781
        %1043 = vst.msk [vmem:[%s1041 + $0x11] sm:$0xff] %vm845, %v782
        %1044 = vst.msk [vmem:[%s1041 + $0x21] sm:$0xff] %vm845, %v783
        %1045 = vst.msk [vmem:[%s1041 + $0x31] sm:$0xff] %vm845, %v784
        %1046 = vst.msk [vmem:[%s1041 + $0x41] sm:$0xff] %vm845, %v785
        %1047 = vst.msk [vmem:[%s1041 + $0x51] sm:$0xff] %vm845, %v786
        %1048 = vst.msk [vmem:[%s1041 + $0x61] sm:$0xff] %vm845, %v787
        %1049 = vst.msk [vmem:[%s1041 + $0x71] sm:$0xff] %vm845, %v788
        %1050 = vst.msk [vmem:[%s1041 + $0xa1] sm:$0xff] %vm845, %v789
        %1051 = vst.msk [vmem:[%s1041 + $0xb1] sm:$0xff] %vm845, %v790
        %1052 = vst.msk [vmem:[%s1041 + $0xc1] sm:$0xff] %vm845, %v791
        %1053 = vst.msk [vmem:[%s1041 + $0xd1] sm:$0xff] %vm845, %v792
        %1054 = vst.msk [vmem:[%s1041 + $0xe1] sm:$0xff] %vm845, %v793
        %1055 = vst.msk [vmem:[%s1041 + $0xf1] sm:$0xff] %vm845, %v794
        %1056 = vst.msk [vmem:[%s1041 + $0x101] sm:$0xff] %vm845, %v795
        %1057 = vst.msk [vmem:[%s1041 + $0x111] sm:$0xff] %vm845, %v796
        %1058 = vst.msk [vmem:[%s1041 + $0x141] sm:$0xff] %vm845, %v797
        %1059 = vst.msk [vmem:[%s1041 + $0x151] sm:$0xff] %vm845, %v798
        %1060 = vst.msk [vmem:[%s1041 + $0x161] sm:$0xff] %vm845, %v799
        %1061 = vst.msk [vmem:[%s1041 + $0x171] sm:$0xff] %vm845, %v800
        %1062 = vst.msk [vmem:[%s1041 + $0x181] sm:$0xff] %vm845, %v801
        %1063 = vst.msk [vmem:[%s1041 + $0x191] sm:$0xff] %vm845, %v802
        %1064 = vst.msk [vmem:[%s1041 + $0x1a1] sm:$0xff] %vm845, %v803
        %1065 = vst.msk [vmem:[%s1041 + $0x1b1] sm:$0xff] %vm845, %v804
        %1066 = vst.msk [vmem:[%s1041 + $0x1e1] sm:$0xff] %vm845, %v805
        %1067 = vst.msk [vmem:[%s1041 + $0x1f1] sm:$0xff] %vm845, %v806
        %1068 = vst.msk [vmem:[%s1041 + $0x201] sm:$0xff] %vm845, %v807
        %1069 = vst.msk [vmem:[%s1041 + $0x211] sm:$0xff] %vm845, %v808
        %1070 = vst.msk [vmem:[%s1041 + $0x221] sm:$0xff] %vm845, %v809
        %1071 = vst.msk [vmem:[%s1041 + $0x231] sm:$0xff] %vm845, %v810
        %1072 = vst.msk [vmem:[%s1041 + $0x241] sm:$0xff] %vm845, %v811
        %1073 = vst.msk [vmem:[%s1041 + $0x251] sm:$0xff] %vm845, %v812
        %1074 = vst.msk [vmem:[%s1041 + $0x281] sm:$0xff] %vm845, %v813
        %1075 = vst.msk [vmem:[%s1041 + $0x291] sm:$0xff] %vm845, %v814
        %1076 = vst.msk [vmem:[%s1041 + $0x2a1] sm:$0xff] %vm845, %v815
        %1077 = vst.msk [vmem:[%s1041 + $0x2b1] sm:$0xff] %vm845, %v816
        %1078 = vst.msk [vmem:[%s1041 + $0x2c1] sm:$0xff] %vm845, %v817
        %1079 = vst.msk [vmem:[%s1041 + $0x2d1] sm:$0xff] %vm845, %v818
        %1080 = vst.msk [vmem:[%s1041 + $0x2e1] sm:$0xff] %vm845, %v819
        %1081 = vst.msk [vmem:[%s1041 + $0x2f1] sm:$0xff] %vm845, %v820
        %1082 = vst.msk [vmem:[%s1041 + $0x321] sm:$0xff] %vm845, %v821
        %1083 = vst.msk [vmem:[%s1041 + $0x331] sm:$0xff] %vm845, %v822
        %1084 = vst.msk [vmem:[%s1041 + $0x341] sm:$0xff] %vm845, %v823
        %1085 = vst.msk [vmem:[%s1041 + $0x351] sm:$0xff] %vm845, %v824
        %1086 = vst.msk [vmem:[%s1041 + $0x361] sm:$0xff] %vm845, %v825
        %1087 = vst.msk [vmem:[%s1041 + $0x371] sm:$0xff] %vm845, %v826
        %1088 = vst.msk [vmem:[%s1041 + $0x381] sm:$0xff] %vm845, %v827
        %1089 = vst.msk [vmem:[%s1041 + $0x391] sm:$0xff] %vm845, %v828
        %1090 = vst.msk [vmem:[%s1041 + $0x3c1] sm:$0xff] %vm845, %v829
        %1091 = vst.msk [vmem:[%s1041 + $0x3d1] sm:$0xff] %vm845, %v830
        %1092 = vst.msk [vmem:[%s1041 + $0x3e1] sm:$0xff] %vm845, %v831
        %1093 = vst.msk [vmem:[%s1041 + $0x3f1] sm:$0xff] %vm845, %v832
        %1094 = vst.msk [vmem:[%s1041 + $0x401] sm:$0xff] %vm845, %v833
        %1095 = vst.msk [vmem:[%s1041 + $0x411] sm:$0xff] %vm845, %v834
        %1096 = vst.msk [vmem:[%s1041 + $0x421] sm:$0xff] %vm845, %v835
        %1097 = vst.msk [vmem:[%s1041 + $0x431] sm:$0xff] %vm845, %v836
        %1098 = vst.msk [vmem:[%s1041 + $0x461] sm:$0xff] %vm845, %v837
        %1099 = vst.msk [vmem:[%s1041 + $0x471] sm:$0xff] %vm845, %v838
        %1100 = vst.msk [vmem:[%s1041 + $0x481] sm:$0xff] %vm845, %v839
        %1101 = vst.msk [vmem:[%s1041 + $0x491] sm:$0xff] %vm845, %v840
        %1102 = vst.msk [vmem:[%s1041 + $0x4a1] sm:$0xff] %vm845, %v841
        %1103 = vst.msk [vmem:[%s1041 + $0x4b1] sm:$0xff] %vm845, %v842
        %1104 = vst.msk [vmem:[%s1041 + $0x4c1] sm:$0xff] %vm845, %v843
        %1105 = vst.msk [vmem:[%s1041 + $0x4d1] sm:$0xff] %vm845, %v844
        %v1106 = vld [vmem:[#allocation2] sm:$0xff]
        %v1107 = vld [vmem:[#allocation2 + $0x10] sm:$0xff]
        %v1108 = vld [vmem:[#allocation2 + $0x20] sm:$0xff]
        %v1109 = vld [vmem:[#allocation2 + $0x30] sm:$0xff]
        %v1110 = vld [vmem:[#allocation2 + $0x40] sm:$0xff]
        %v1111 = vld [vmem:[#allocation2 + $0x50] sm:$0xff]
        %v1112 = vld [vmem:[#allocation2 + $0x60] sm:$0xff]
        %v1113 = vld [vmem:[#allocation2 + $0x70] sm:$0xff]
        %v1114 = vld [vmem:[#allocation2 + $0xa0] sm:$0xff]
        %v1115 = vld [vmem:[#allocation2 + $0xb0] sm:$0xff]
        %v1116 = vld [vmem:[#allocation2 + $0xc0] sm:$0xff]
        %v1117 = vld [vmem:[#allocation2 + $0xd0] sm:$0xff]
        %v1118 = vld [vmem:[#allocation2 + $0xe0] sm:$0xff]
        %v1119 = vld [vmem:[#allocation2 + $0xf0] sm:$0xff]
        %v1120 = vld [vmem:[#allocation2 + $0x100] sm:$0xff]
        %v1121 = vld [vmem:[#allocation2 + $0x110] sm:$0xff]
        %v1122 = vld [vmem:[#allocation2 + $0x140] sm:$0xff]
        %v1123 = vld [vmem:[#allocation2 + $0x150] sm:$0xff]
        %v1124 = vld [vmem:[#allocation2 + $0x160] sm:$0xff]
        %v1125 = vld [vmem:[#allocation2 + $0x170] sm:$0xff]
        %v1126 = vld [vmem:[#allocation2 + $0x180] sm:$0xff]
        %v1127 = vld [vmem:[#allocation2 + $0x190] sm:$0xff]
        %v1128 = vld [vmem:[#allocation2 + $0x1a0] sm:$0xff]
        %v1129 = vld [vmem:[#allocation2 + $0x1b0] sm:$0xff]
        %v1130 = vld [vmem:[#allocation2 + $0x1e0] sm:$0xff]
        %v1131 = vld [vmem:[#allocation2 + $0x1f0] sm:$0xff]
        %v1132 = vld [vmem:[#allocation2 + $0x200] sm:$0xff]
        %v1133 = vld [vmem:[#allocation2 + $0x210] sm:$0xff]
        %v1134 = vld [vmem:[#allocation2 + $0x220] sm:$0xff]
        %v1135 = vld [vmem:[#allocation2 + $0x230] sm:$0xff]
        %v1136 = vld [vmem:[#allocation2 + $0x240] sm:$0xff]
        %v1137 = vld [vmem:[#allocation2 + $0x250] sm:$0xff]
        %v1138 = vld [vmem:[#allocation2 + $0x280] sm:$0xff]
        %v1139 = vld [vmem:[#allocation2 + $0x290] sm:$0xff]
        %v1140 = vld [vmem:[#allocation2 + $0x2a0] sm:$0xff]
        %v1141 = vld [vmem:[#allocation2 + $0x2b0] sm:$0xff]
        %v1142 = vld [vmem:[#allocation2 + $0x2c0] sm:$0xff]
        %v1143 = vld [vmem:[#allocation2 + $0x2d0] sm:$0xff]
        %v1144 = vld [vmem:[#allocation2 + $0x2e0] sm:$0xff]
        %v1145 = vld [vmem:[#allocation2 + $0x2f0] sm:$0xff]
        %v1146 = vld [vmem:[#allocation2 + $0x320] sm:$0xff]
        %v1147 = vld [vmem:[#allocation2 + $0x330] sm:$0xff]
        %v1148 = vld [vmem:[#allocation2 + $0x340] sm:$0xff]
        %v1149 = vld [vmem:[#allocation2 + $0x350] sm:$0xff]
        %v1150 = vld [vmem:[#allocation2 + $0x360] sm:$0xff]
        %v1151 = vld [vmem:[#allocation2 + $0x370] sm:$0xff]
        %v1152 = vld [vmem:[#allocation2 + $0x380] sm:$0xff]
        %v1153 = vld [vmem:[#allocation2 + $0x390] sm:$0xff]
        %v1154 = vld [vmem:[#allocation2 + $0x3c0] sm:$0xff]
        %v1155 = vld [vmem:[#allocation2 + $0x3d0] sm:$0xff]
        %v1156 = vld [vmem:[#allocation2 + $0x3e0] sm:$0xff]
        %v1157 = vld [vmem:[#allocation2 + $0x3f0] sm:$0xff]
        %v1158 = vld [vmem:[#allocation2 + $0x400] sm:$0xff]
        %v1159 = vld [vmem:[#allocation2 + $0x410] sm:$0xff]
        %v1160 = vld [vmem:[#allocation2 + $0x420] sm:$0xff]
        %v1161 = vld [vmem:[#allocation2 + $0x430] sm:$0xff]
        %v1162 = vld [vmem:[#allocation2 + $0x460] sm:$0xff]
        %v1163 = vld [vmem:[#allocation2 + $0x470] sm:$0xff]
        %v1164 = vld [vmem:[#allocation2 + $0x480] sm:$0xff]
        %v1165 = vld [vmem:[#allocation2 + $0x490] sm:$0xff]
        %v1166 = vld [vmem:[#allocation2 + $0x4a0] sm:$0xff]
        %v1167 = vld [vmem:[#allocation2 + $0x4b0] sm:$0xff]
        %v1168 = vld [vmem:[#allocation2 + $0x4c0] sm:$0xff]
        %v1169 = vld [vmem:[#allocation2 + $0x4d0] sm:$0xff]
        %v1170 = vpack.c.bf16 %v1107, %v1106
        %v1171 = vpack.c.bf16 %v1109, %v1108
        %v1172 = vpack.c.bf16 %v1111, %v1110
        %v1173 = vpack.c.bf16 %v1113, %v1112
        %v1174 = vpack.c.bf16 %v1115, %v1114
        %v1175 = vpack.c.bf16 %v1117, %v1116
        %v1176 = vpack.c.bf16 %v1119, %v1118
        %v1177 = vpack.c.bf16 %v1121, %v1120
        %v1178 = vpack.c.bf16 %v1123, %v1122
        %v1179 = vpack.c.bf16 %v1125, %v1124
        %v1180 = vpack.c.bf16 %v1127, %v1126
        %v1181 = vpack.c.bf16 %v1129, %v1128
        %v1182 = vpack.c.bf16 %v1131, %v1130
        %v1183 = vpack.c.bf16 %v1133, %v1132
        %v1184 = vpack.c.bf16 %v1135, %v1134
        %v1185 = vpack.c.bf16 %v1137, %v1136
        %v1186 = vpack.c.bf16 %v1139, %v1138
        %v1187 = vpack.c.bf16 %v1141, %v1140
        %v1188 = vpack.c.bf16 %v1143, %v1142
        %v1189 = vpack.c.bf16 %v1145, %v1144
        %v1190 = vpack.c.bf16 %v1147, %v1146
        %v1191 = vpack.c.bf16 %v1149, %v1148
        %v1192 = vpack.c.bf16 %v1151, %v1150
        %v1193 = vpack.c.bf16 %v1153, %v1152
        %v1194 = vpack.c.bf16 %v1155, %v1154
        %v1195 = vpack.c.bf16 %v1157, %v1156
        %v1196 = vpack.c.bf16 %v1159, %v1158
        %v1197 = vpack.c.bf16 %v1161, %v1160
        %v1198 = vpack.c.bf16 %v1163, %v1162
        %v1199 = vpack.c.bf16 %v1165, %v1164
        %v1200 = vpack.c.bf16 %v1167, %v1166
        %v1201 = vpack.c.bf16 %v1169, %v1168
        %v1202 = vld [vmem:[#allocation2 + $0x1] sm:$0xff]
        %v1203 = vld [vmem:[#allocation2 + $0x11] sm:$0xff]
        %v1204 = vld [vmem:[#allocation2 + $0x21] sm:$0xff]
        %v1205 = vld [vmem:[#allocation2 + $0x31] sm:$0xff]
        %v1206 = vld [vmem:[#allocation2 + $0x41] sm:$0xff]
        %v1207 = vld [vmem:[#allocation2 + $0x51] sm:$0xff]
        %v1208 = vld [vmem:[#allocation2 + $0x61] sm:$0xff]
        %v1209 = vld [vmem:[#allocation2 + $0x71] sm:$0xff]
        %v1210 = vld [vmem:[#allocation2 + $0xa1] sm:$0xff]
        %v1211 = vld [vmem:[#allocation2 + $0xb1] sm:$0xff]
        %v1212 = vld [vmem:[#allocation2 + $0xc1] sm:$0xff]
        %v1213 = vld [vmem:[#allocation2 + $0xd1] sm:$0xff]
        %v1214 = vld [vmem:[#allocation2 + $0xe1] sm:$0xff]
        %v1215 = vld [vmem:[#allocation2 + $0xf1] sm:$0xff]
        %v1216 = vld [vmem:[#allocation2 + $0x101] sm:$0xff]
        %v1217 = vld [vmem:[#allocation2 + $0x111] sm:$0xff]
        %v1218 = vld [vmem:[#allocation2 + $0x141] sm:$0xff]
        %v1219 = vld [vmem:[#allocation2 + $0x151] sm:$0xff]
        %v1220 = vld [vmem:[#allocation2 + $0x161] sm:$0xff]
        %v1221 = vld [vmem:[#allocation2 + $0x171] sm:$0xff]
        %v1222 = vld [vmem:[#allocation2 + $0x181] sm:$0xff]
        %v1223 = vld [vmem:[#allocation2 + $0x191] sm:$0xff]
        %v1224 = vld [vmem:[#allocation2 + $0x1a1] sm:$0xff]
        %v1225 = vld [vmem:[#allocation2 + $0x1b1] sm:$0xff]
        %v1226 = vld [vmem:[#allocation2 + $0x1e1] sm:$0xff]
        %v1227 = vld [vmem:[#allocation2 + $0x1f1] sm:$0xff]
        %v1228 = vld [vmem:[#allocation2 + $0x201] sm:$0xff]
        %v1229 = vld [vmem:[#allocation2 + $0x211] sm:$0xff]
        %v1230 = vld [vmem:[#allocation2 + $0x221] sm:$0xff]
        %v1231 = vld [vmem:[#allocation2 + $0x231] sm:$0xff]
        %v1232 = vld [vmem:[#allocation2 + $0x241] sm:$0xff]
        %v1233 = vld [vmem:[#allocation2 + $0x251] sm:$0xff]
        %v1234 = vld [vmem:[#allocation2 + $0x281] sm:$0xff]
        %v1235 = vld [vmem:[#allocation2 + $0x291] sm:$0xff]
        %v1236 = vld [vmem:[#allocation2 + $0x2a1] sm:$0xff]
        %v1237 = vld [vmem:[#allocation2 + $0x2b1] sm:$0xff]
        %v1238 = vld [vmem:[#allocation2 + $0x2c1] sm:$0xff]
        %v1239 = vld [vmem:[#allocation2 + $0x2d1] sm:$0xff]
        %v1240 = vld [vmem:[#allocation2 + $0x2e1] sm:$0xff]
        %v1241 = vld [vmem:[#allocation2 + $0x2f1] sm:$0xff]
        %v1242 = vld [vmem:[#allocation2 + $0x321] sm:$0xff]
        %v1243 = vld [vmem:[#allocation2 + $0x331] sm:$0xff]
        %v1244 = vld [vmem:[#allocation2 + $0x341] sm:$0xff]
        %v1245 = vld [vmem:[#allocation2 + $0x351] sm:$0xff]
        %v1246 = vld [vmem:[#allocation2 + $0x361] sm:$0xff]
        %v1247 = vld [vmem:[#allocation2 + $0x371] sm:$0xff]
        %v1248 = vld [vmem:[#allocation2 + $0x381] sm:$0xff]
        %v1249 = vld [vmem:[#allocation2 + $0x391] sm:$0xff]
        %v1250 = vld [vmem:[#allocation2 + $0x3c1] sm:$0xff]
        %v1251 = vld [vmem:[#allocation2 + $0x3d1] sm:$0xff]
        %v1252 = vld [vmem:[#allocation2 + $0x3e1] sm:$0xff]
        %v1253 = vld [vmem:[#allocation2 + $0x3f1] sm:$0xff]
        %v1254 = vld [vmem:[#allocation2 + $0x401] sm:$0xff]
        %v1255 = vld [vmem:[#allocation2 + $0x411] sm:$0xff]
        %v1256 = vld [vmem:[#allocation2 + $0x421] sm:$0xff]
        %v1257 = vld [vmem:[#allocation2 + $0x431] sm:$0xff]
        %v1258 = vld [vmem:[#allocation2 + $0x461] sm:$0xff]
        %v1259 = vld [vmem:[#allocation2 + $0x471] sm:$0xff]
        %v1260 = vld [vmem:[#allocation2 + $0x481] sm:$0xff]
        %v1261 = vld [vmem:[#allocation2 + $0x491] sm:$0xff]
        %v1262 = vld [vmem:[#allocation2 + $0x4a1] sm:$0xff]
        %v1263 = vld [vmem:[#allocation2 + $0x4b1] sm:$0xff]
        %v1264 = vld [vmem:[#allocation2 + $0x4c1] sm:$0xff]
        %v1265 = vld [vmem:[#allocation2 + $0x4d1] sm:$0xff]
        %v1266 = vpack.c.bf16 %v1203, %v1202
        %v1267 = vpack.c.bf16 %v1205, %v1204
        %v1268 = vpack.c.bf16 %v1207, %v1206
        %v1269 = vpack.c.bf16 %v1209, %v1208
        %v1270 = vpack.c.bf16 %v1211, %v1210
        %v1271 = vpack.c.bf16 %v1213, %v1212
        %v1272 = vpack.c.bf16 %v1215, %v1214
        %v1273 = vpack.c.bf16 %v1217, %v1216
        %v1274 = vpack.c.bf16 %v1219, %v1218
        %v1275 = vpack.c.bf16 %v1221, %v1220
        %v1276 = vpack.c.bf16 %v1223, %v1222
        %v1277 = vpack.c.bf16 %v1225, %v1224
        %v1278 = vpack.c.bf16 %v1227, %v1226
        %v1279 = vpack.c.bf16 %v1229, %v1228
        %v1280 = vpack.c.bf16 %v1231, %v1230
        %v1281 = vpack.c.bf16 %v1233, %v1232
        %v1282 = vpack.c.bf16 %v1235, %v1234
        %v1283 = vpack.c.bf16 %v1237, %v1236
        %v1284 = vpack.c.bf16 %v1239, %v1238
        %v1285 = vpack.c.bf16 %v1241, %v1240
        %v1286 = vpack.c.bf16 %v1243, %v1242
        %v1287 = vpack.c.bf16 %v1245, %v1244
        %v1288 = vpack.c.bf16 %v1247, %v1246
        %v1289 = vpack.c.bf16 %v1249, %v1248
        %v1290 = vpack.c.bf16 %v1251, %v1250
        %v1291 = vpack.c.bf16 %v1253, %v1252
        %v1292 = vpack.c.bf16 %v1255, %v1254
        %v1293 = vpack.c.bf16 %v1257, %v1256
        %v1294 = vpack.c.bf16 %v1259, %v1258
        %v1295 = vpack.c.bf16 %v1261, %v1260
        %v1296 = vpack.c.bf16 %v1263, %v1262
        %v1297 = vpack.c.bf16 %v1265, %v1264
        %v1298 = vld [vmem:[#allocation2 + $0x2] sm:$0xff]
        %v1299 = vld [vmem:[#allocation2 + $0x12] sm:$0xff]
        %v1300 = vld [vmem:[#allocation2 + $0x22] sm:$0xff]
        %v1301 = vld [vmem:[#allocation2 + $0x32] sm:$0xff]
        %v1302 = vld [vmem:[#allocation2 + $0x42] sm:$0xff]
        %v1303 = vld [vmem:[#allocation2 + $0x52] sm:$0xff]
        %v1304 = vld [vmem:[#allocation2 + $0x62] sm:$0xff]
        %v1305 = vld [vmem:[#allocation2 + $0x72] sm:$0xff]
        %v1306 = vld [vmem:[#allocation2 + $0xa2] sm:$0xff]
        %v1307 = vld [vmem:[#allocation2 + $0xb2] sm:$0xff]
        %v1308 = vld [vmem:[#allocation2 + $0xc2] sm:$0xff]
        %v1309 = vld [vmem:[#allocation2 + $0xd2] sm:$0xff]
        %v1310 = vld [vmem:[#allocation2 + $0xe2] sm:$0xff]
        %v1311 = vld [vmem:[#allocation2 + $0xf2] sm:$0xff]
        %v1312 = vld [vmem:[#allocation2 + $0x102] sm:$0xff]
        %v1313 = vld [vmem:[#allocation2 + $0x112] sm:$0xff]
        %v1314 = vld [vmem:[#allocation2 + $0x142] sm:$0xff]
        %v1315 = vld [vmem:[#allocation2 + $0x152] sm:$0xff]
        %v1316 = vld [vmem:[#allocation2 + $0x162] sm:$0xff]
        %v1317 = vld [vmem:[#allocation2 + $0x172] sm:$0xff]
        %v1318 = vld [vmem:[#allocation2 + $0x182] sm:$0xff]
        %v1319 = vld [vmem:[#allocation2 + $0x192] sm:$0xff]
        %v1320 = vld [vmem:[#allocation2 + $0x1a2] sm:$0xff]
        %v1321 = vld [vmem:[#allocation2 + $0x1b2] sm:$0xff]
        %v1322 = vld [vmem:[#allocation2 + $0x1e2] sm:$0xff]
        %v1323 = vld [vmem:[#allocation2 + $0x1f2] sm:$0xff]
        %v1324 = vld [vmem:[#allocation2 + $0x202] sm:$0xff]
        %v1325 = vld [vmem:[#allocation2 + $0x212] sm:$0xff]
        %v1326 = vld [vmem:[#allocation2 + $0x222] sm:$0xff]
        %v1327 = vld [vmem:[#allocation2 + $0x232] sm:$0xff]
        %v1328 = vld [vmem:[#allocation2 + $0x242] sm:$0xff]
        %v1329 = vld [vmem:[#allocation2 + $0x252] sm:$0xff]
        %v1330 = vld [vmem:[#allocation2 + $0x282] sm:$0xff]
        %v1331 = vld [vmem:[#allocation2 + $0x292] sm:$0xff]
        %v1332 = vld [vmem:[#allocation2 + $0x2a2] sm:$0xff]
        %v1333 = vld [vmem:[#allocation2 + $0x2b2] sm:$0xff]
        %v1334 = vld [vmem:[#allocation2 + $0x2c2] sm:$0xff]
        %v1335 = vld [vmem:[#allocation2 + $0x2d2] sm:$0xff]
        %v1336 = vld [vmem:[#allocation2 + $0x2e2] sm:$0xff]
        %v1337 = vld [vmem:[#allocation2 + $0x2f2] sm:$0xff]
        %v1338 = vld [vmem:[#allocation2 + $0x322] sm:$0xff]
        %v1339 = vld [vmem:[#allocation2 + $0x332] sm:$0xff]
        %v1340 = vld [vmem:[#allocation2 + $0x342] sm:$0xff]
        %v1341 = vld [vmem:[#allocation2 + $0x352] sm:$0xff]
        %v1342 = vld [vmem:[#allocation2 + $0x362] sm:$0xff]
        %v1343 = vld [vmem:[#allocation2 + $0x372] sm:$0xff]
        %v1344 = vld [vmem:[#allocation2 + $0x382] sm:$0xff]
        %v1345 = vld [vmem:[#allocation2 + $0x392] sm:$0xff]
        %v1346 = vld [vmem:[#allocation2 + $0x3c2] sm:$0xff]
        %v1347 = vld [vmem:[#allocation2 + $0x3d2] sm:$0xff]
        %v1348 = vld [vmem:[#allocation2 + $0x3e2] sm:$0xff]
        %v1349 = vld [vmem:[#allocation2 + $0x3f2] sm:$0xff]
        %v1350 = vld [vmem:[#allocation2 + $0x402] sm:$0xff]
        %v1351 = vld [vmem:[#allocation2 + $0x412] sm:$0xff]
        %v1352 = vld [vmem:[#allocation2 + $0x422] sm:$0xff]
        %v1353 = vld [vmem:[#allocation2 + $0x432] sm:$0xff]
        %v1354 = vld [vmem:[#allocation2 + $0x462] sm:$0xff]
        %v1355 = vld [vmem:[#allocation2 + $0x472] sm:$0xff]
        %v1356 = vld [vmem:[#allocation2 + $0x482] sm:$0xff]
        %v1357 = vld [vmem:[#allocation2 + $0x492] sm:$0xff]
        %v1358 = vld [vmem:[#allocation2 + $0x4a2] sm:$0xff]
        %v1359 = vld [vmem:[#allocation2 + $0x4b2] sm:$0xff]
        %v1360 = vld [vmem:[#allocation2 + $0x4c2] sm:$0xff]
        %v1361 = vld [vmem:[#allocation2 + $0x4d2] sm:$0xff]
        %v1362 = vpack.c.bf16 %v1299, %v1298
        %v1363 = vpack.c.bf16 %v1301, %v1300
        %v1364 = vpack.c.bf16 %v1303, %v1302
        %v1365 = vpack.c.bf16 %v1305, %v1304
        %v1366 = vpack.c.bf16 %v1307, %v1306
        %v1367 = vpack.c.bf16 %v1309, %v1308
        %v1368 = vpack.c.bf16 %v1311, %v1310
        %v1369 = vpack.c.bf16 %v1313, %v1312
        %v1370 = vpack.c.bf16 %v1315, %v1314
        %v1371 = vpack.c.bf16 %v1317, %v1316
        %v1372 = vpack.c.bf16 %v1319, %v1318
        %v1373 = vpack.c.bf16 %v1321, %v1320
        %v1374 = vpack.c.bf16 %v1323, %v1322
        %v1375 = vpack.c.bf16 %v1325, %v1324
        %v1376 = vpack.c.bf16 %v1327, %v1326
        %v1377 = vpack.c.bf16 %v1329, %v1328
        %v1378 = vpack.c.bf16 %v1331, %v1330
        %v1379 = vpack.c.bf16 %v1333, %v1332
        %v1380 = vpack.c.bf16 %v1335, %v1334
        %v1381 = vpack.c.bf16 %v1337, %v1336
        %v1382 = vpack.c.bf16 %v1339, %v1338
        %v1383 = vpack.c.bf16 %v1341, %v1340
        %v1384 = vpack.c.bf16 %v1343, %v1342
        %v1385 = vpack.c.bf16 %v1345, %v1344
        %v1386 = vpack.c.bf16 %v1347, %v1346
        %v1387 = vpack.c.bf16 %v1349, %v1348
        %v1388 = vpack.c.bf16 %v1351, %v1350
        %v1389 = vpack.c.bf16 %v1353, %v1352
        %v1390 = vpack.c.bf16 %v1355, %v1354
        %v1391 = vpack.c.bf16 %v1357, %v1356
        %v1392 = vpack.c.bf16 %v1359, %v1358
        %v1393 = vpack.c.bf16 %v1361, %v1360
        %v1394 = vld [vmem:[%s1041] sm:$0xff]
        %v1395 = vld [vmem:[%s1041 + $0x10] sm:$0xff]
        %v1396 = vld [vmem:[%s1041 + $0x20] sm:$0xff]
        %v1397 = vld [vmem:[%s1041 + $0x30] sm:$0xff]
        %v1398 = vld [vmem:[%s1041 + $0x40] sm:$0xff]
        %v1399 = vld [vmem:[%s1041 + $0x50] sm:$0xff]
        %v1400 = vld [vmem:[%s1041 + $0x60] sm:$0xff]
        %v1401 = vld [vmem:[%s1041 + $0x70] sm:$0xff]
        %v1402 = vld [vmem:[%s1041 + $0xa0] sm:$0xff]
        %v1403 = vld [vmem:[%s1041 + $0xb0] sm:$0xff]
        %v1404 = vld [vmem:[%s1041 + $0xc0] sm:$0xff]
        %v1405 = vld [vmem:[%s1041 + $0xd0] sm:$0xff]
        %v1406 = vld [vmem:[%s1041 + $0xe0] sm:$0xff]
        %v1407 = vld [vmem:[%s1041 + $0xf0] sm:$0xff]
        %v1408 = vld [vmem:[%s1041 + $0x100] sm:$0xff]
        %v1409 = vld [vmem:[%s1041 + $0x110] sm:$0xff]
        %v1410 = vld [vmem:[%s1041 + $0x140] sm:$0xff]
        %v1411 = vld [vmem:[%s1041 + $0x150] sm:$0xff]
        %v1412 = vld [vmem:[%s1041 + $0x160] sm:$0xff]
        %v1413 = vld [vmem:[%s1041 + $0x170] sm:$0xff]
        %v1414 = vld [vmem:[%s1041 + $0x180] sm:$0xff]
        %v1415 = vld [vmem:[%s1041 + $0x190] sm:$0xff]
        %v1416 = vld [vmem:[%s1041 + $0x1a0] sm:$0xff]
        %v1417 = vld [vmem:[%s1041 + $0x1b0] sm:$0xff]
        %v1418 = vld [vmem:[%s1041 + $0x1e0] sm:$0xff]
        %v1419 = vld [vmem:[%s1041 + $0x1f0] sm:$0xff]
        %v1420 = vld [vmem:[%s1041 + $0x200] sm:$0xff]
        %v1421 = vld [vmem:[%s1041 + $0x210] sm:$0xff]
        %v1422 = vld [vmem:[%s1041 + $0x220] sm:$0xff]
        %v1423 = vld [vmem:[%s1041 + $0x230] sm:$0xff]
        %v1424 = vld [vmem:[%s1041 + $0x240] sm:$0xff]
        %v1425 = vld [vmem:[%s1041 + $0x250] sm:$0xff]
        %v1426 = vld [vmem:[%s1041 + $0x280] sm:$0xff]
        %v1427 = vld [vmem:[%s1041 + $0x290] sm:$0xff]
        %v1428 = vld [vmem:[%s1041 + $0x2a0] sm:$0xff]
        %v1429 = vld [vmem:[%s1041 + $0x2b0] sm:$0xff]
        %v1430 = vld [vmem:[%s1041 + $0x2c0] sm:$0xff]
        %v1431 = vld [vmem:[%s1041 + $0x2d0] sm:$0xff]
        %v1432 = vld [vmem:[%s1041 + $0x2e0] sm:$0xff]
        %v1433 = vld [vmem:[%s1041 + $0x2f0] sm:$0xff]
        %v1434 = vld [vmem:[%s1041 + $0x320] sm:$0xff]
        %v1435 = vld [vmem:[%s1041 + $0x330] sm:$0xff]
        %v1436 = vld [vmem:[%s1041 + $0x340] sm:$0xff]
        %v1437 = vld [vmem:[%s1041 + $0x350] sm:$0xff]
        %v1438 = vld [vmem:[%s1041 + $0x360] sm:$0xff]
        %v1439 = vld [vmem:[%s1041 + $0x370] sm:$0xff]
        %v1440 = vld [vmem:[%s1041 + $0x380] sm:$0xff]
        %v1441 = vld [vmem:[%s1041 + $0x390] sm:$0xff]
        %v1442 = vld [vmem:[%s1041 + $0x3c0] sm:$0xff]
        %v1443 = vld [vmem:[%s1041 + $0x3d0] sm:$0xff]
        %v1444 = vld [vmem:[%s1041 + $0x3e0] sm:$0xff]
        %v1445 = vld [vmem:[%s1041 + $0x3f0] sm:$0xff]
        %v1446 = vld [vmem:[%s1041 + $0x400] sm:$0xff]
        %v1447 = vld [vmem:[%s1041 + $0x410] sm:$0xff]
        %v1448 = vld [vmem:[%s1041 + $0x420] sm:$0xff]
        %v1449 = vld [vmem:[%s1041 + $0x430] sm:$0xff]
        %v1450 = vld [vmem:[%s1041 + $0x460] sm:$0xff]
        %v1451 = vld [vmem:[%s1041 + $0x470] sm:$0xff]
        %v1452 = vld [vmem:[%s1041 + $0x480] sm:$0xff]
        %v1453 = vld [vmem:[%s1041 + $0x490] sm:$0xff]
        %v1454 = vld [vmem:[%s1041 + $0x4a0] sm:$0xff]
        %v1455 = vld [vmem:[%s1041 + $0x4b0] sm:$0xff]
        %v1456 = vld [vmem:[%s1041 + $0x4c0] sm:$0xff]
        %v1457 = vld [vmem:[%s1041 + $0x4d0] sm:$0xff]
        %v1458 = vpack.c.bf16 %v1395, %v1394
        %v1459 = vpack.c.bf16 %v1397, %v1396
        %v1460 = vpack.c.bf16 %v1399, %v1398
        %v1461 = vpack.c.bf16 %v1401, %v1400
        %v1462 = vpack.c.bf16 %v1403, %v1402
        %v1463 = vpack.c.bf16 %v1405, %v1404
        %v1464 = vpack.c.bf16 %v1407, %v1406
        %v1465 = vpack.c.bf16 %v1409, %v1408
        %v1466 = vpack.c.bf16 %v1411, %v1410
        %v1467 = vpack.c.bf16 %v1413, %v1412
        %v1468 = vpack.c.bf16 %v1415, %v1414
        %v1469 = vpack.c.bf16 %v1417, %v1416
        %v1470 = vpack.c.bf16 %v1419, %v1418
        %v1471 = vpack.c.bf16 %v1421, %v1420
        %v1472 = vpack.c.bf16 %v1423, %v1422
        %v1473 = vpack.c.bf16 %v1425, %v1424
        %v1474 = vpack.c.bf16 %v1427, %v1426
        %v1475 = vpack.c.bf16 %v1429, %v1428
        %v1476 = vpack.c.bf16 %v1431, %v1430
        %v1477 = vpack.c.bf16 %v1433, %v1432
        %v1478 = vpack.c.bf16 %v1435, %v1434
        %v1479 = vpack.c.bf16 %v1437, %v1436
        %v1480 = vpack.c.bf16 %v1439, %v1438
        %v1481 = vpack.c.bf16 %v1441, %v1440
        %v1482 = vpack.c.bf16 %v1443, %v1442
        %v1483 = vpack.c.bf16 %v1445, %v1444
        %v1484 = vpack.c.bf16 %v1447, %v1446
        %v1485 = vpack.c.bf16 %v1449, %v1448
        %v1486 = vpack.c.bf16 %v1451, %v1450
        %v1487 = vpack.c.bf16 %v1453, %v1452
        %v1488 = vpack.c.bf16 %v1455, %v1454
        %v1489 = vpack.c.bf16 %v1457, %v1456
        %v1490 = vld [vmem:[%s1041 + $0x1] sm:$0xff]
        %v1491 = vld [vmem:[%s1041 + $0x11] sm:$0xff]
        %v1492 = vld [vmem:[%s1041 + $0x21] sm:$0xff]
        %v1493 = vld [vmem:[%s1041 + $0x31] sm:$0xff]
        %v1494 = vld [vmem:[%s1041 + $0x41] sm:$0xff]
        %v1495 = vld [vmem:[%s1041 + $0x51] sm:$0xff]
        %v1496 = vld [vmem:[%s1041 + $0x61] sm:$0xff]
        %v1497 = vld [vmem:[%s1041 + $0x71] sm:$0xff]
        %v1498 = vld [vmem:[%s1041 + $0xa1] sm:$0xff]
        %v1499 = vld [vmem:[%s1041 + $0xb1] sm:$0xff]
        %v1500 = vld [vmem:[%s1041 + $0xc1] sm:$0xff]
        %v1501 = vld [vmem:[%s1041 + $0xd1] sm:$0xff]
        %v1502 = vld [vmem:[%s1041 + $0xe1] sm:$0xff]
        %v1503 = vld [vmem:[%s1041 + $0xf1] sm:$0xff]
        %v1504 = vld [vmem:[%s1041 + $0x101] sm:$0xff]
        %v1505 = vld [vmem:[%s1041 + $0x111] sm:$0xff]
        %v1506 = vld [vmem:[%s1041 + $0x141] sm:$0xff]
        %v1507 = vld [vmem:[%s1041 + $0x151] sm:$0xff]
        %v1508 = vld [vmem:[%s1041 + $0x161] sm:$0xff]
        %v1509 = vld [vmem:[%s1041 + $0x171] sm:$0xff]
        %v1510 = vld [vmem:[%s1041 + $0x181] sm:$0xff]
        %v1511 = vld [vmem:[%s1041 + $0x191] sm:$0xff]
        %v1512 = vld [vmem:[%s1041 + $0x1a1] sm:$0xff]
        %v1513 = vld [vmem:[%s1041 + $0x1b1] sm:$0xff]
        %v1514 = vld [vmem:[%s1041 + $0x1e1] sm:$0xff]
        %v1515 = vld [vmem:[%s1041 + $0x1f1] sm:$0xff]
        %v1516 = vld [vmem:[%s1041 + $0x201] sm:$0xff]
        %v1517 = vld [vmem:[%s1041 + $0x211] sm:$0xff]
        %v1518 = vld [vmem:[%s1041 + $0x221] sm:$0xff]
        %v1519 = vld [vmem:[%s1041 + $0x231] sm:$0xff]
        %v1520 = vld [vmem:[%s1041 + $0x241] sm:$0xff]
        %v1521 = vld [vmem:[%s1041 + $0x251] sm:$0xff]
        %v1522 = vld [vmem:[%s1041 + $0x281] sm:$0xff]
        %v1523 = vld [vmem:[%s1041 + $0x291] sm:$0xff]
        %v1524 = vld [vmem:[%s1041 + $0x2a1] sm:$0xff]
        %v1525 = vld [vmem:[%s1041 + $0x2b1] sm:$0xff]
        %v1526 = vld [vmem:[%s1041 + $0x2c1] sm:$0xff]
        %v1527 = vld [vmem:[%s1041 + $0x2d1] sm:$0xff]
        %v1528 = vld [vmem:[%s1041 + $0x2e1] sm:$0xff]
        %v1529 = vld [vmem:[%s1041 + $0x2f1] sm:$0xff]
        %v1530 = vld [vmem:[%s1041 + $0x321] sm:$0xff]
        %v1531 = vld [vmem:[%s1041 + $0x331] sm:$0xff]
        %v1532 = vld [vmem:[%s1041 + $0x341] sm:$0xff]
        %v1533 = vld [vmem:[%s1041 + $0x351] sm:$0xff]
        %v1534 = vld [vmem:[%s1041 + $0x361] sm:$0xff]
        %v1535 = vld [vmem:[%s1041 + $0x371] sm:$0xff]
        %v1536 = vld [vmem:[%s1041 + $0x381] sm:$0xff]
        %v1537 = vld [vmem:[%s1041 + $0x391] sm:$0xff]
        %v1538 = vld [vmem:[%s1041 + $0x3c1] sm:$0xff]
        %v1539 = vld [vmem:[%s1041 + $0x3d1] sm:$0xff]
        %v1540 = vld [vmem:[%s1041 + $0x3e1] sm:$0xff]
        %v1541 = vld [vmem:[%s1041 + $0x3f1] sm:$0xff]
        %v1542 = vld [vmem:[%s1041 + $0x401] sm:$0xff]
        %v1543 = vld [vmem:[%s1041 + $0x411] sm:$0xff]
        %v1544 = vld [vmem:[%s1041 + $0x421] sm:$0xff]
        %v1545 = vld [vmem:[%s1041 + $0x431] sm:$0xff]
        %v1546 = vld [vmem:[%s1041 + $0x461] sm:$0xff]
        %v1547 = vld [vmem:[%s1041 + $0x471] sm:$0xff]
        %v1548 = vld [vmem:[%s1041 + $0x481] sm:$0xff]
        %v1549 = vld [vmem:[%s1041 + $0x491] sm:$0xff]
        %v1550 = vld [vmem:[%s1041 + $0x4a1] sm:$0xff]
        %v1551 = vld [vmem:[%s1041 + $0x4b1] sm:$0xff]
        %v1552 = vld [vmem:[%s1041 + $0x4c1] sm:$0xff]
        %v1553 = vld [vmem:[%s1041 + $0x4d1] sm:$0xff]
        %v1554 = vpack.c.bf16 %v1491, %v1490
        %v1555 = vpack.c.bf16 %v1493, %v1492
        %v1556 = vpack.c.bf16 %v1495, %v1494
        %v1557 = vpack.c.bf16 %v1497, %v1496
        %v1558 = vpack.c.bf16 %v1499, %v1498
        %v1559 = vpack.c.bf16 %v1501, %v1500
        %v1560 = vpack.c.bf16 %v1503, %v1502
        %v1561 = vpack.c.bf16 %v1505, %v1504
        %v1562 = vpack.c.bf16 %v1507, %v1506
        %v1563 = vpack.c.bf16 %v1509, %v1508
        %v1564 = vpack.c.bf16 %v1511, %v1510
        %v1565 = vpack.c.bf16 %v1513, %v1512
        %v1566 = vpack.c.bf16 %v1515, %v1514
        %v1567 = vpack.c.bf16 %v1517, %v1516
        %v1568 = vpack.c.bf16 %v1519, %v1518
        %v1569 = vpack.c.bf16 %v1521, %v1520
        %v1570 = vpack.c.bf16 %v1523, %v1522
        %v1571 = vpack.c.bf16 %v1525, %v1524
        %v1572 = vpack.c.bf16 %v1527, %v1526
        %v1573 = vpack.c.bf16 %v1529, %v1528
        %v1574 = vpack.c.bf16 %v1531, %v1530
        %v1575 = vpack.c.bf16 %v1533, %v1532
        %v1576 = vpack.c.bf16 %v1535, %v1534
        %v1577 = vpack.c.bf16 %v1537, %v1536
        %v1578 = vpack.c.bf16 %v1539, %v1538
        %v1579 = vpack.c.bf16 %v1541, %v1540
        %v1580 = vpack.c.bf16 %v1543, %v1542
        %v1581 = vpack.c.bf16 %v1545, %v1544
        %v1582 = vpack.c.bf16 %v1547, %v1546
        %v1583 = vpack.c.bf16 %v1549, %v1548
        %v1584 = vpack.c.bf16 %v1551, %v1550
        %v1585 = vpack.c.bf16 %v1553, %v1552
        %v1586 = vld [vmem:[%s1041 + $0x2] sm:$0xff]
        %v1587 = vld [vmem:[%s1041 + $0x12] sm:$0xff]
        %v1588 = vld [vmem:[%s1041 + $0x22] sm:$0xff]
        %v1589 = vld [vmem:[%s1041 + $0x32] sm:$0xff]
        %v1590 = vld [vmem:[%s1041 + $0x42] sm:$0xff]
        %v1591 = vld [vmem:[%s1041 + $0x52] sm:$0xff]
        %v1592 = vld [vmem:[%s1041 + $0x62] sm:$0xff]
        %v1593 = vld [vmem:[%s1041 + $0x72] sm:$0xff]
        %v1594 = vld [vmem:[%s1041 + $0xa2] sm:$0xff]
        %v1595 = vld [vmem:[%s1041 + $0xb2] sm:$0xff]
        %v1596 = vld [vmem:[%s1041 + $0xc2] sm:$0xff]
        %v1597 = vld [vmem:[%s1041 + $0xd2] sm:$0xff]
        %v1598 = vld [vmem:[%s1041 + $0xe2] sm:$0xff]
        %v1599 = vld [vmem:[%s1041 + $0xf2] sm:$0xff]
        %v1600 = vld [vmem:[%s1041 + $0x102] sm:$0xff]
        %v1601 = vld [vmem:[%s1041 + $0x112] sm:$0xff]
        %v1602 = vld [vmem:[%s1041 + $0x142] sm:$0xff]
        %v1603 = vld [vmem:[%s1041 + $0x152] sm:$0xff]
        %v1604 = vld [vmem:[%s1041 + $0x162] sm:$0xff]
        %v1605 = vld [vmem:[%s1041 + $0x172] sm:$0xff]
        %v1606 = vld [vmem:[%s1041 + $0x182] sm:$0xff]
        %v1607 = vld [vmem:[%s1041 + $0x192] sm:$0xff]
        %v1608 = vld [vmem:[%s1041 + $0x1a2] sm:$0xff]
        %v1609 = vld [vmem:[%s1041 + $0x1b2] sm:$0xff]
        %v1610 = vld [vmem:[%s1041 + $0x1e2] sm:$0xff]
        %v1611 = vld [vmem:[%s1041 + $0x1f2] sm:$0xff]
        %v1612 = vld [vmem:[%s1041 + $0x202] sm:$0xff]
        %v1613 = vld [vmem:[%s1041 + $0x212] sm:$0xff]
        %v1614 = vld [vmem:[%s1041 + $0x222] sm:$0xff]
        %v1615 = vld [vmem:[%s1041 + $0x232] sm:$0xff]
        %v1616 = vld [vmem:[%s1041 + $0x242] sm:$0xff]
        %v1617 = vld [vmem:[%s1041 + $0x252] sm:$0xff]
        %v1618 = vld [vmem:[%s1041 + $0x282] sm:$0xff]
        %v1619 = vld [vmem:[%s1041 + $0x292] sm:$0xff]
        %v1620 = vld [vmem:[%s1041 + $0x2a2] sm:$0xff]
        %v1621 = vld [vmem:[%s1041 + $0x2b2] sm:$0xff]
        %v1622 = vld [vmem:[%s1041 + $0x2c2] sm:$0xff]
        %v1623 = vld [vmem:[%s1041 + $0x2d2] sm:$0xff]
        %v1624 = vld [vmem:[%s1041 + $0x2e2] sm:$0xff]
        %v1625 = vld [vmem:[%s1041 + $0x2f2] sm:$0xff]
        %v1626 = vld [vmem:[%s1041 + $0x322] sm:$0xff]
        %v1627 = vld [vmem:[%s1041 + $0x332] sm:$0xff]
        %v1628 = vld [vmem:[%s1041 + $0x342] sm:$0xff]
        %v1629 = vld [vmem:[%s1041 + $0x352] sm:$0xff]
        %v1630 = vld [vmem:[%s1041 + $0x362] sm:$0xff]
        %v1631 = vld [vmem:[%s1041 + $0x372] sm:$0xff]
        %v1632 = vld [vmem:[%s1041 + $0x382] sm:$0xff]
        %v1633 = vld [vmem:[%s1041 + $0x392] sm:$0xff]
        %v1634 = vld [vmem:[%s1041 + $0x3c2] sm:$0xff]
        %v1635 = vld [vmem:[%s1041 + $0x3d2] sm:$0xff]
        %v1636 = vld [vmem:[%s1041 + $0x3e2] sm:$0xff]
        %v1637 = vld [vmem:[%s1041 + $0x3f2] sm:$0xff]
        %v1638 = vld [vmem:[%s1041 + $0x402] sm:$0xff]
        %v1639 = vld [vmem:[%s1041 + $0x412] sm:$0xff]
        %v1640 = vld [vmem:[%s1041 + $0x422] sm:$0xff]
        %v1641 = vld [vmem:[%s1041 + $0x432] sm:$0xff]
        %v1642 = vld [vmem:[%s1041 + $0x462] sm:$0xff]
        %v1643 = vld [vmem:[%s1041 + $0x472] sm:$0xff]
        %v1644 = vld [vmem:[%s1041 + $0x482] sm:$0xff]
        %v1645 = vld [vmem:[%s1041 + $0x492] sm:$0xff]
        %v1646 = vld [vmem:[%s1041 + $0x4a2] sm:$0xff]
        %v1647 = vld [vmem:[%s1041 + $0x4b2] sm:$0xff]
        %v1648 = vld [vmem:[%s1041 + $0x4c2] sm:$0xff]
        %v1649 = vld [vmem:[%s1041 + $0x4d2] sm:$0xff]
        %v1650 = vpack.c.bf16 %v1587, %v1586
        %v1651 = vpack.c.bf16 %v1589, %v1588
        %v1652 = vpack.c.bf16 %v1591, %v1590
        %v1653 = vpack.c.bf16 %v1593, %v1592
        %v1654 = vpack.c.bf16 %v1595, %v1594
        %v1655 = vpack.c.bf16 %v1597, %v1596
        %v1656 = vpack.c.bf16 %v1599, %v1598
        %v1657 = vpack.c.bf16 %v1601, %v1600
        %v1658 = vpack.c.bf16 %v1603, %v1602
        %v1659 = vpack.c.bf16 %v1605, %v1604
        %v1660 = vpack.c.bf16 %v1607, %v1606
        %v1661 = vpack.c.bf16 %v1609, %v1608
        %v1662 = vpack.c.bf16 %v1611, %v1610
        %v1663 = vpack.c.bf16 %v1613, %v1612
        %v1664 = vpack.c.bf16 %v1615, %v1614
        %v1665 = vpack.c.bf16 %v1617, %v1616
        %v1666 = vpack.c.bf16 %v1619, %v1618
        %v1667 = vpack.c.bf16 %v1621, %v1620
        %v1668 = vpack.c.bf16 %v1623, %v1622
        %v1669 = vpack.c.bf16 %v1625, %v1624
        %v1670 = vpack.c.bf16 %v1627, %v1626
        %v1671 = vpack.c.bf16 %v1629, %v1628
        %v1672 = vpack.c.bf16 %v1631, %v1630
        %v1673 = vpack.c.bf16 %v1633, %v1632
        %v1674 = vpack.c.bf16 %v1635, %v1634
        %v1675 = vpack.c.bf16 %v1637, %v1636
        %v1676 = vpack.c.bf16 %v1639, %v1638
        %v1677 = vpack.c.bf16 %v1641, %v1640
        %v1678 = vpack.c.bf16 %v1643, %v1642
        %v1679 = vpack.c.bf16 %v1645, %v1644
        %v1680 = vpack.c.bf16 %v1647, %v1646
        %v1681 = vpack.c.bf16 %v1649, %v1648
        %s1682 = scalar_lea.vmem [#allocation2], 32
        %v1683 = vld [vmem:[%s1682] sm:$0xff]
        %v1684 = vld [vmem:[%s1682 + $0x10] sm:$0xff]
        %v1685 = vld [vmem:[%s1682 + $0x20] sm:$0xff]
        %v1686 = vld [vmem:[%s1682 + $0x30] sm:$0xff]
        %v1687 = vld [vmem:[%s1682 + $0x40] sm:$0xff]
        %v1688 = vld [vmem:[%s1682 + $0x50] sm:$0xff]
        %v1689 = vld [vmem:[%s1682 + $0x60] sm:$0xff]
        %v1690 = vld [vmem:[%s1682 + $0x70] sm:$0xff]
        %v1691 = vld [vmem:[%s1682 + $0xa0] sm:$0xff]
        %v1692 = vld [vmem:[%s1682 + $0xb0] sm:$0xff]
        %v1693 = vld [vmem:[%s1682 + $0xc0] sm:$0xff]
        %v1694 = vld [vmem:[%s1682 + $0xd0] sm:$0xff]
        %v1695 = vld [vmem:[%s1682 + $0xe0] sm:$0xff]
        %v1696 = vld [vmem:[%s1682 + $0xf0] sm:$0xff]
        %v1697 = vld [vmem:[%s1682 + $0x100] sm:$0xff]
        %v1698 = vld [vmem:[%s1682 + $0x110] sm:$0xff]
        %v1699 = vld [vmem:[%s1682 + $0x140] sm:$0xff]
        %v1700 = vld [vmem:[%s1682 + $0x150] sm:$0xff]
        %v1701 = vld [vmem:[%s1682 + $0x160] sm:$0xff]
        %v1702 = vld [vmem:[%s1682 + $0x170] sm:$0xff]
        %v1703 = vld [vmem:[%s1682 + $0x180] sm:$0xff]
        %v1704 = vld [vmem:[%s1682 + $0x190] sm:$0xff]
        %v1705 = vld [vmem:[%s1682 + $0x1a0] sm:$0xff]
        %v1706 = vld [vmem:[%s1682 + $0x1b0] sm:$0xff]
        %v1707 = vld [vmem:[%s1682 + $0x1e0] sm:$0xff]
        %v1708 = vld [vmem:[%s1682 + $0x1f0] sm:$0xff]
        %v1709 = vld [vmem:[%s1682 + $0x200] sm:$0xff]
        %v1710 = vld [vmem:[%s1682 + $0x210] sm:$0xff]
        %v1711 = vld [vmem:[%s1682 + $0x220] sm:$0xff]
        %v1712 = vld [vmem:[%s1682 + $0x230] sm:$0xff]
        %v1713 = vld [vmem:[%s1682 + $0x240] sm:$0xff]
        %v1714 = vld [vmem:[%s1682 + $0x250] sm:$0xff]
        %v1715 = vld [vmem:[%s1682 + $0x280] sm:$0xff]
        %v1716 = vld [vmem:[%s1682 + $0x290] sm:$0xff]
        %v1717 = vld [vmem:[%s1682 + $0x2a0] sm:$0xff]
        %v1718 = vld [vmem:[%s1682 + $0x2b0] sm:$0xff]
        %v1719 = vld [vmem:[%s1682 + $0x2c0] sm:$0xff]
        %v1720 = vld [vmem:[%s1682 + $0x2d0] sm:$0xff]
        %v1721 = vld [vmem:[%s1682 + $0x2e0] sm:$0xff]
        %v1722 = vld [vmem:[%s1682 + $0x2f0] sm:$0xff]
        %v1723 = vld [vmem:[%s1682 + $0x320] sm:$0xff]
        %v1724 = vld [vmem:[%s1682 + $0x330] sm:$0xff]
        %v1725 = vld [vmem:[%s1682 + $0x340] sm:$0xff]
        %v1726 = vld [vmem:[%s1682 + $0x350] sm:$0xff]
        %v1727 = vld [vmem:[%s1682 + $0x360] sm:$0xff]
        %v1728 = vld [vmem:[%s1682 + $0x370] sm:$0xff]
        %v1729 = vld [vmem:[%s1682 + $0x380] sm:$0xff]
        %v1730 = vld [vmem:[%s1682 + $0x390] sm:$0xff]
        %v1731 = vld [vmem:[%s1682 + $0x3c0] sm:$0xff]
        %v1732 = vld [vmem:[%s1682 + $0x3d0] sm:$0xff]
        %v1733 = vld [vmem:[%s1682 + $0x3e0] sm:$0xff]
        %v1734 = vld [vmem:[%s1682 + $0x3f0] sm:$0xff]
        %v1735 = vld [vmem:[%s1682 + $0x400] sm:$0xff]
        %v1736 = vld [vmem:[%s1682 + $0x410] sm:$0xff]
        %v1737 = vld [vmem:[%s1682 + $0x420] sm:$0xff]
        %v1738 = vld [vmem:[%s1682 + $0x430] sm:$0xff]
        %v1739 = vld [vmem:[%s1682 + $0x460] sm:$0xff]
        %v1740 = vld [vmem:[%s1682 + $0x470] sm:$0xff]
        %v1741 = vld [vmem:[%s1682 + $0x480] sm:$0xff]
        %v1742 = vld [vmem:[%s1682 + $0x490] sm:$0xff]
        %v1743 = vld [vmem:[%s1682 + $0x4a0] sm:$0xff]
        %v1744 = vld [vmem:[%s1682 + $0x4b0] sm:$0xff]
        %v1745 = vld [vmem:[%s1682 + $0x4c0] sm:$0xff]
        %v1746 = vld [vmem:[%s1682 + $0x4d0] sm:$0xff]
        %v1747 = vpack.c.bf16 %v1684, %v1683
        %v1748 = vpack.c.bf16 %v1686, %v1685
        %v1749 = vpack.c.bf16 %v1688, %v1687
        %v1750 = vpack.c.bf16 %v1690, %v1689
        %v1751 = vpack.c.bf16 %v1692, %v1691
        %v1752 = vpack.c.bf16 %v1694, %v1693
        %v1753 = vpack.c.bf16 %v1696, %v1695
        %v1754 = vpack.c.bf16 %v1698, %v1697
        %v1755 = vpack.c.bf16 %v1700, %v1699
        %v1756 = vpack.c.bf16 %v1702, %v1701
        %v1757 = vpack.c.bf16 %v1704, %v1703
        %v1758 = vpack.c.bf16 %v1706, %v1705
        %v1759 = vpack.c.bf16 %v1708, %v1707
        %v1760 = vpack.c.bf16 %v1710, %v1709
        %v1761 = vpack.c.bf16 %v1712, %v1711
        %v1762 = vpack.c.bf16 %v1714, %v1713
        %v1763 = vpack.c.bf16 %v1716, %v1715
        %v1764 = vpack.c.bf16 %v1718, %v1717
        %v1765 = vpack.c.bf16 %v1720, %v1719
        %v1766 = vpack.c.bf16 %v1722, %v1721
        %v1767 = vpack.c.bf16 %v1724, %v1723
        %v1768 = vpack.c.bf16 %v1726, %v1725
        %v1769 = vpack.c.bf16 %v1728, %v1727
        %v1770 = vpack.c.bf16 %v1730, %v1729
        %v1771 = vpack.c.bf16 %v1732, %v1731
        %v1772 = vpack.c.bf16 %v1734, %v1733
        %v1773 = vpack.c.bf16 %v1736, %v1735
        %v1774 = vpack.c.bf16 %v1738, %v1737
        %v1775 = vpack.c.bf16 %v1740, %v1739
        %v1776 = vpack.c.bf16 %v1742, %v1741
        %v1777 = vpack.c.bf16 %v1744, %v1743
        %v1778 = vpack.c.bf16 %v1746, %v1745
        %v1779 = vld [vmem:[%s1682 + $0x1] sm:$0xff]
        %v1780 = vld [vmem:[%s1682 + $0x11] sm:$0xff]
        %v1781 = vld [vmem:[%s1682 + $0x21] sm:$0xff]
        %v1782 = vld [vmem:[%s1682 + $0x31] sm:$0xff]
        %v1783 = vld [vmem:[%s1682 + $0x41] sm:$0xff]
        %v1784 = vld [vmem:[%s1682 + $0x51] sm:$0xff]
        %v1785 = vld [vmem:[%s1682 + $0x61] sm:$0xff]
        %v1786 = vld [vmem:[%s1682 + $0x71] sm:$0xff]
        %v1787 = vld [vmem:[%s1682 + $0xa1] sm:$0xff]
        %v1788 = vld [vmem:[%s1682 + $0xb1] sm:$0xff]
        %v1789 = vld [vmem:[%s1682 + $0xc1] sm:$0xff]
        %v1790 = vld [vmem:[%s1682 + $0xd1] sm:$0xff]
        %v1791 = vld [vmem:[%s1682 + $0xe1] sm:$0xff]
        %v1792 = vld [vmem:[%s1682 + $0xf1] sm:$0xff]
        %v1793 = vld [vmem:[%s1682 + $0x101] sm:$0xff]
        %v1794 = vld [vmem:[%s1682 + $0x111] sm:$0xff]
        %v1795 = vld [vmem:[%s1682 + $0x141] sm:$0xff]
        %v1796 = vld [vmem:[%s1682 + $0x151] sm:$0xff]
        %v1797 = vld [vmem:[%s1682 + $0x161] sm:$0xff]
        %v1798 = vld [vmem:[%s1682 + $0x171] sm:$0xff]
        %v1799 = vld [vmem:[%s1682 + $0x181] sm:$0xff]
        %v1800 = vld [vmem:[%s1682 + $0x191] sm:$0xff]
        %v1801 = vld [vmem:[%s1682 + $0x1a1] sm:$0xff]
        %v1802 = vld [vmem:[%s1682 + $0x1b1] sm:$0xff]
        %v1803 = vld [vmem:[%s1682 + $0x1e1] sm:$0xff]
        %v1804 = vld [vmem:[%s1682 + $0x1f1] sm:$0xff]
        %v1805 = vld [vmem:[%s1682 + $0x201] sm:$0xff]
        %v1806 = vld [vmem:[%s1682 + $0x211] sm:$0xff]
        %v1807 = vld [vmem:[%s1682 + $0x221] sm:$0xff]
        %v1808 = vld [vmem:[%s1682 + $0x231] sm:$0xff]
        %v1809 = vld [vmem:[%s1682 + $0x241] sm:$0xff]
        %v1810 = vld [vmem:[%s1682 + $0x251] sm:$0xff]
        %v1811 = vld [vmem:[%s1682 + $0x281] sm:$0xff]
        %v1812 = vld [vmem:[%s1682 + $0x291] sm:$0xff]
        %v1813 = vld [vmem:[%s1682 + $0x2a1] sm:$0xff]
        %v1814 = vld [vmem:[%s1682 + $0x2b1] sm:$0xff]
        %v1815 = vld [vmem:[%s1682 + $0x2c1] sm:$0xff]
        %v1816 = vld [vmem:[%s1682 + $0x2d1] sm:$0xff]
        %v1817 = vld [vmem:[%s1682 + $0x2e1] sm:$0xff]
        %v1818 = vld [vmem:[%s1682 + $0x2f1] sm:$0xff]
        %v1819 = vld [vmem:[%s1682 + $0x321] sm:$0xff]
        %v1820 = vld [vmem:[%s1682 + $0x331] sm:$0xff]
        %v1821 = vld [vmem:[%s1682 + $0x341] sm:$0xff]
        %v1822 = vld [vmem:[%s1682 + $0x351] sm:$0xff]
        %v1823 = vld [vmem:[%s1682 + $0x361] sm:$0xff]
        %v1824 = vld [vmem:[%s1682 + $0x371] sm:$0xff]
        %v1825 = vld [vmem:[%s1682 + $0x381] sm:$0xff]
        %v1826 = vld [vmem:[%s1682 + $0x391] sm:$0xff]
        %v1827 = vld [vmem:[%s1682 + $0x3c1] sm:$0xff]
        %v1828 = vld [vmem:[%s1682 + $0x3d1] sm:$0xff]
        %v1829 = vld [vmem:[%s1682 + $0x3e1] sm:$0xff]
        %v1830 = vld [vmem:[%s1682 + $0x3f1] sm:$0xff]
        %v1831 = vld [vmem:[%s1682 + $0x401] sm:$0xff]
        %v1832 = vld [vmem:[%s1682 + $0x411] sm:$0xff]
        %v1833 = vld [vmem:[%s1682 + $0x421] sm:$0xff]
        %v1834 = vld [vmem:[%s1682 + $0x431] sm:$0xff]
        %v1835 = vld [vmem:[%s1682 + $0x461] sm:$0xff]
        %v1836 = vld [vmem:[%s1682 + $0x471] sm:$0xff]
        %v1837 = vld [vmem:[%s1682 + $0x481] sm:$0xff]
        %v1838 = vld [vmem:[%s1682 + $0x491] sm:$0xff]
        %v1839 = vld [vmem:[%s1682 + $0x4a1] sm:$0xff]
        %v1840 = vld [vmem:[%s1682 + $0x4b1] sm:$0xff]
        %v1841 = vld [vmem:[%s1682 + $0x4c1] sm:$0xff]
        %v1842 = vld [vmem:[%s1682 + $0x4d1] sm:$0xff]
        %v1843 = vpack.c.bf16 %v1780, %v1779
        %v1844 = vpack.c.bf16 %v1782, %v1781
        %v1845 = vpack.c.bf16 %v1784, %v1783
        %v1846 = vpack.c.bf16 %v1786, %v1785
        %v1847 = vpack.c.bf16 %v1788, %v1787
        %v1848 = vpack.c.bf16 %v1790, %v1789
        %v1849 = vpack.c.bf16 %v1792, %v1791
        %v1850 = vpack.c.bf16 %v1794, %v1793
        %v1851 = vpack.c.bf16 %v1796, %v1795
        %v1852 = vpack.c.bf16 %v1798, %v1797
        %v1853 = vpack.c.bf16 %v1800, %v1799
        %v1854 = vpack.c.bf16 %v1802, %v1801
        %v1855 = vpack.c.bf16 %v1804, %v1803
        %v1856 = vpack.c.bf16 %v1806, %v1805
        %v1857 = vpack.c.bf16 %v1808, %v1807
        %v1858 = vpack.c.bf16 %v1810, %v1809
        %v1859 = vpack.c.bf16 %v1812, %v1811
        %v1860 = vpack.c.bf16 %v1814, %v1813
        %v1861 = vpack.c.bf16 %v1816, %v1815
        %v1862 = vpack.c.bf16 %v1818, %v1817
        %v1863 = vpack.c.bf16 %v1820, %v1819
        %v1864 = vpack.c.bf16 %v1822, %v1821
        %v1865 = vpack.c.bf16 %v1824, %v1823
        %v1866 = vpack.c.bf16 %v1826, %v1825
        %v1867 = vpack.c.bf16 %v1828, %v1827
        %v1868 = vpack.c.bf16 %v1830, %v1829
        %v1869 = vpack.c.bf16 %v1832, %v1831
        %v1870 = vpack.c.bf16 %v1834, %v1833
        %v1871 = vpack.c.bf16 %v1836, %v1835
        %v1872 = vpack.c.bf16 %v1838, %v1837
        %v1873 = vpack.c.bf16 %v1840, %v1839
        %v1874 = vpack.c.bf16 %v1842, %v1841
        %v1875 = vld [vmem:[%s1682 + $0x2] sm:$0xff]
        %v1876 = vld [vmem:[%s1682 + $0x12] sm:$0xff]
        %v1877 = vld [vmem:[%s1682 + $0x22] sm:$0xff]
        %v1878 = vld [vmem:[%s1682 + $0x32] sm:$0xff]
        %v1879 = vld [vmem:[%s1682 + $0x42] sm:$0xff]
        %v1880 = vld [vmem:[%s1682 + $0x52] sm:$0xff]
        %v1881 = vld [vmem:[%s1682 + $0x62] sm:$0xff]
        %v1882 = vld [vmem:[%s1682 + $0x72] sm:$0xff]
        %v1883 = vld [vmem:[%s1682 + $0xa2] sm:$0xff]
        %v1884 = vld [vmem:[%s1682 + $0xb2] sm:$0xff]
        %v1885 = vld [vmem:[%s1682 + $0xc2] sm:$0xff]
        %v1886 = vld [vmem:[%s1682 + $0xd2] sm:$0xff]
        %v1887 = vld [vmem:[%s1682 + $0xe2] sm:$0xff]
        %v1888 = vld [vmem:[%s1682 + $0xf2] sm:$0xff]
        %v1889 = vld [vmem:[%s1682 + $0x102] sm:$0xff]
        %v1890 = vld [vmem:[%s1682 + $0x112] sm:$0xff]
        %v1891 = vld [vmem:[%s1682 + $0x142] sm:$0xff]
        %v1892 = vld [vmem:[%s1682 + $0x152] sm:$0xff]
        %v1893 = vld [vmem:[%s1682 + $0x162] sm:$0xff]
        %v1894 = vld [vmem:[%s1682 + $0x172] sm:$0xff]
        %v1895 = vld [vmem:[%s1682 + $0x182] sm:$0xff]
        %v1896 = vld [vmem:[%s1682 + $0x192] sm:$0xff]
        %v1897 = vld [vmem:[%s1682 + $0x1a2] sm:$0xff]
        %v1898 = vld [vmem:[%s1682 + $0x1b2] sm:$0xff]
        %v1899 = vld [vmem:[%s1682 + $0x1e2] sm:$0xff]
        %v1900 = vld [vmem:[%s1682 + $0x1f2] sm:$0xff]
        %v1901 = vld [vmem:[%s1682 + $0x202] sm:$0xff]
        %v1902 = vld [vmem:[%s1682 + $0x212] sm:$0xff]
        %v1903 = vld [vmem:[%s1682 + $0x222] sm:$0xff]
        %v1904 = vld [vmem:[%s1682 + $0x232] sm:$0xff]
        %v1905 = vld [vmem:[%s1682 + $0x242] sm:$0xff]
        %v1906 = vld [vmem:[%s1682 + $0x252] sm:$0xff]
        %v1907 = vld [vmem:[%s1682 + $0x282] sm:$0xff]
        %v1908 = vld [vmem:[%s1682 + $0x292] sm:$0xff]
        %v1909 = vld [vmem:[%s1682 + $0x2a2] sm:$0xff]
        %v1910 = vld [vmem:[%s1682 + $0x2b2] sm:$0xff]
        %v1911 = vld [vmem:[%s1682 + $0x2c2] sm:$0xff]
        %v1912 = vld [vmem:[%s1682 + $0x2d2] sm:$0xff]
        %v1913 = vld [vmem:[%s1682 + $0x2e2] sm:$0xff]
        %v1914 = vld [vmem:[%s1682 + $0x2f2] sm:$0xff]
        %v1915 = vld [vmem:[%s1682 + $0x322] sm:$0xff]
        %v1916 = vld [vmem:[%s1682 + $0x332] sm:$0xff]
        %v1917 = vld [vmem:[%s1682 + $0x342] sm:$0xff]
        %v1918 = vld [vmem:[%s1682 + $0x352] sm:$0xff]
        %v1919 = vld [vmem:[%s1682 + $0x362] sm:$0xff]
        %v1920 = vld [vmem:[%s1682 + $0x372] sm:$0xff]
        %v1921 = vld [vmem:[%s1682 + $0x382] sm:$0xff]
        %v1922 = vld [vmem:[%s1682 + $0x392] sm:$0xff]
        %v1923 = vld [vmem:[%s1682 + $0x3c2] sm:$0xff]
        %v1924 = vld [vmem:[%s1682 + $0x3d2] sm:$0xff]
        %v1925 = vld [vmem:[%s1682 + $0x3e2] sm:$0xff]
        %v1926 = vld [vmem:[%s1682 + $0x3f2] sm:$0xff]
        %v1927 = vld [vmem:[%s1682 + $0x402] sm:$0xff]
        %v1928 = vld [vmem:[%s1682 + $0x412] sm:$0xff]
        %v1929 = vld [vmem:[%s1682 + $0x422] sm:$0xff]
        %v1930 = vld [vmem:[%s1682 + $0x432] sm:$0xff]
        %v1931 = vld [vmem:[%s1682 + $0x462] sm:$0xff]
        %v1932 = vld [vmem:[%s1682 + $0x472] sm:$0xff]
        %v1933 = vld [vmem:[%s1682 + $0x482] sm:$0xff]
        %v1934 = vld [vmem:[%s1682 + $0x492] sm:$0xff]
        %v1935 = vld [vmem:[%s1682 + $0x4a2] sm:$0xff]
        %v1936 = vld [vmem:[%s1682 + $0x4b2] sm:$0xff]
        %v1937 = vld [vmem:[%s1682 + $0x4c2] sm:$0xff]
        %v1938 = vld [vmem:[%s1682 + $0x4d2] sm:$0xff]
        %v1939 = vpack.c.bf16 %v1876, %v1875
        %v1940 = vpack.c.bf16 %v1878, %v1877
        %v1941 = vpack.c.bf16 %v1880, %v1879
        %v1942 = vpack.c.bf16 %v1882, %v1881
        %v1943 = vpack.c.bf16 %v1884, %v1883
        %v1944 = vpack.c.bf16 %v1886, %v1885
        %v1945 = vpack.c.bf16 %v1888, %v1887
        %v1946 = vpack.c.bf16 %v1890, %v1889
        %v1947 = vpack.c.bf16 %v1892, %v1891
        %v1948 = vpack.c.bf16 %v1894, %v1893
        %v1949 = vpack.c.bf16 %v1896, %v1895
        %v1950 = vpack.c.bf16 %v1898, %v1897
        %v1951 = vpack.c.bf16 %v1900, %v1899
        %v1952 = vpack.c.bf16 %v1902, %v1901
        %v1953 = vpack.c.bf16 %v1904, %v1903
        %v1954 = vpack.c.bf16 %v1906, %v1905
        %v1955 = vpack.c.bf16 %v1908, %v1907
        %v1956 = vpack.c.bf16 %v1910, %v1909
        %v1957 = vpack.c.bf16 %v1912, %v1911
        %v1958 = vpack.c.bf16 %v1914, %v1913
        %v1959 = vpack.c.bf16 %v1916, %v1915
        %v1960 = vpack.c.bf16 %v1918, %v1917
        %v1961 = vpack.c.bf16 %v1920, %v1919
        %v1962 = vpack.c.bf16 %v1922, %v1921
        %v1963 = vpack.c.bf16 %v1924, %v1923
        %v1964 = vpack.c.bf16 %v1926, %v1925
        %v1965 = vpack.c.bf16 %v1928, %v1927
        %v1966 = vpack.c.bf16 %v1930, %v1929
        %v1967 = vpack.c.bf16 %v1932, %v1931
        %v1968 = vpack.c.bf16 %v1934, %v1933
        %v1969 = vpack.c.bf16 %v1936, %v1935
        %v1970 = vpack.c.bf16 %v1938, %v1937
        %2003 = vrot.lane.b32.xlu0 %v1266, 4
        %v2004 = vpop.permute.xlu0 %2003
        %2005 = vrot.lane.b32.xlu0 %v1267, 4
        %v2006 = vpop.permute.xlu0 %2005
        %2007 = vrot.lane.b32.xlu0 %v1268, 4
        %v2008 = vpop.permute.xlu0 %2007
        %2009 = vrot.lane.b32.xlu0 %v1269, 4
        %v2010 = vpop.permute.xlu0 %2009
        %2011 = vrot.lane.b32.xlu0 %v1270, 4
        %v2012 = vpop.permute.xlu0 %2011
        %2013 = vrot.lane.b32.xlu0 %v1271, 4
        %v2014 = vpop.permute.xlu0 %2013
        %2015 = vrot.lane.b32.xlu0 %v1272, 4
        %v2016 = vpop.permute.xlu0 %2015
        %2017 = vrot.lane.b32.xlu0 %v1273, 4
        %v2018 = vpop.permute.xlu0 %2017
        %2019 = vrot.lane.b32.xlu0 %v1274, 4
        %v2020 = vpop.permute.xlu0 %2019
        %2021 = vrot.lane.b32.xlu0 %v1275, 4
        %v2022 = vpop.permute.xlu0 %2021
        %2023 = vrot.lane.b32.xlu0 %v1276, 4
        %v2024 = vpop.permute.xlu0 %2023
        %2025 = vrot.lane.b32.xlu0 %v1277, 4
        %v2026 = vpop.permute.xlu0 %2025
        %2027 = vrot.lane.b32.xlu0 %v1278, 4
        %v2028 = vpop.permute.xlu0 %2027
        %2029 = vrot.lane.b32.xlu0 %v1279, 4
        %v2030 = vpop.permute.xlu0 %2029
        %2031 = vrot.lane.b32.xlu0 %v1280, 4
        %v2032 = vpop.permute.xlu0 %2031
        %2033 = vrot.lane.b32.xlu0 %v1281, 4
        %v2034 = vpop.permute.xlu0 %2033
        %2035 = vrot.lane.b32.xlu0 %v1282, 4
        %v2036 = vpop.permute.xlu0 %2035
        %2037 = vrot.lane.b32.xlu0 %v1283, 4
        %v2038 = vpop.permute.xlu0 %2037
        %2039 = vrot.lane.b32.xlu0 %v1284, 4
        %v2040 = vpop.permute.xlu0 %2039
        %2041 = vrot.lane.b32.xlu0 %v1285, 4
        %v2042 = vpop.permute.xlu0 %2041
        %2043 = vrot.lane.b32.xlu0 %v1286, 4
        %v2044 = vpop.permute.xlu0 %2043
        %2045 = vrot.lane.b32.xlu0 %v1287, 4
        %v2046 = vpop.permute.xlu0 %2045
        %2047 = vrot.lane.b32.xlu0 %v1288, 4
        %v2048 = vpop.permute.xlu0 %2047
        %2049 = vrot.lane.b32.xlu0 %v1289, 4
        %v2050 = vpop.permute.xlu0 %2049
        %2051 = vrot.lane.b32.xlu0 %v1290, 4
        %v2052 = vpop.permute.xlu0 %2051
        %2053 = vrot.lane.b32.xlu0 %v1291, 4
        %v2054 = vpop.permute.xlu0 %2053
        %2055 = vrot.lane.b32.xlu0 %v1292, 4
        %v2056 = vpop.permute.xlu0 %2055
        %2057 = vrot.lane.b32.xlu0 %v1293, 4
        %v2058 = vpop.permute.xlu0 %2057
        %2059 = vrot.lane.b32.xlu0 %v1294, 4
        %v2060 = vpop.permute.xlu0 %2059
        %2061 = vrot.lane.b32.xlu0 %v1295, 4
        %v2062 = vpop.permute.xlu0 %2061
        %2063 = vrot.lane.b32.xlu0 %v1296, 4
        %v2064 = vpop.permute.xlu0 %2063
        %2065 = vrot.lane.b32.xlu0 %v1297, 4
        %v2066 = vpop.permute.xlu0 %2065
        %2099 = vrot.lane.b32.xlu0 %v1362, 8
        %v2100 = vpop.permute.xlu0 %2099
        %2101 = vrot.lane.b32.xlu0 %v1363, 8
        %v2102 = vpop.permute.xlu0 %2101
        %2103 = vrot.lane.b32.xlu0 %v1364, 8
        %v2104 = vpop.permute.xlu0 %2103
        %2105 = vrot.lane.b32.xlu0 %v1365, 8
        %v2106 = vpop.permute.xlu0 %2105
        %2107 = vrot.lane.b32.xlu0 %v1366, 8
        %v2108 = vpop.permute.xlu0 %2107
        %2109 = vrot.lane.b32.xlu0 %v1367, 8
        %v2110 = vpop.permute.xlu0 %2109
        %2111 = vrot.lane.b32.xlu0 %v1368, 8
        %v2112 = vpop.permute.xlu0 %2111
        %2113 = vrot.lane.b32.xlu0 %v1369, 8
        %v2114 = vpop.permute.xlu0 %2113
        %2115 = vrot.lane.b32.xlu0 %v1370, 8
        %v2116 = vpop.permute.xlu0 %2115
        %2117 = vrot.lane.b32.xlu0 %v1371, 8
        %v2118 = vpop.permute.xlu0 %2117
        %2119 = vrot.lane.b32.xlu0 %v1372, 8
        %v2120 = vpop.permute.xlu0 %2119
        %2121 = vrot.lane.b32.xlu0 %v1373, 8
        %v2122 = vpop.permute.xlu0 %2121
        %2123 = vrot.lane.b32.xlu0 %v1374, 8
        %v2124 = vpop.permute.xlu0 %2123
        %2125 = vrot.lane.b32.xlu0 %v1375, 8
        %v2126 = vpop.permute.xlu0 %2125
        %2127 = vrot.lane.b32.xlu0 %v1376, 8
        %v2128 = vpop.permute.xlu0 %2127
        %2129 = vrot.lane.b32.xlu0 %v1377, 8
        %v2130 = vpop.permute.xlu0 %2129
        %2131 = vrot.lane.b32.xlu0 %v1378, 8
        %v2132 = vpop.permute.xlu0 %2131
        %2133 = vrot.lane.b32.xlu0 %v1379, 8
        %v2134 = vpop.permute.xlu0 %2133
        %2135 = vrot.lane.b32.xlu0 %v1380, 8
        %v2136 = vpop.permute.xlu0 %2135
        %2137 = vrot.lane.b32.xlu0 %v1381, 8
        %v2138 = vpop.permute.xlu0 %2137
        %2139 = vrot.lane.b32.xlu0 %v1382, 8
        %v2140 = vpop.permute.xlu0 %2139
        %2141 = vrot.lane.b32.xlu0 %v1383, 8
        %v2142 = vpop.permute.xlu0 %2141
        %2143 = vrot.lane.b32.xlu0 %v1384, 8
        %v2144 = vpop.permute.xlu0 %2143
        %2145 = vrot.lane.b32.xlu0 %v1385, 8
        %v2146 = vpop.permute.xlu0 %2145
        %2147 = vrot.lane.b32.xlu0 %v1386, 8
        %v2148 = vpop.permute.xlu0 %2147
        %2149 = vrot.lane.b32.xlu0 %v1387, 8
        %v2150 = vpop.permute.xlu0 %2149
        %2151 = vrot.lane.b32.xlu0 %v1388, 8
        %v2152 = vpop.permute.xlu0 %2151
        %2153 = vrot.lane.b32.xlu0 %v1389, 8
        %v2154 = vpop.permute.xlu0 %2153
        %2155 = vrot.lane.b32.xlu0 %v1390, 8
        %v2156 = vpop.permute.xlu0 %2155
        %2157 = vrot.lane.b32.xlu0 %v1391, 8
        %v2158 = vpop.permute.xlu0 %2157
        %2159 = vrot.lane.b32.xlu0 %v1392, 8
        %v2160 = vpop.permute.xlu0 %2159
        %2161 = vrot.lane.b32.xlu0 %v1393, 8
        %v2162 = vpop.permute.xlu0 %2161
        %2195 = vrot.lane.b32.xlu0 %v1458, 12
        %v2196 = vpop.permute.xlu0 %2195
        %2197 = vrot.lane.b32.xlu0 %v1459, 12
        %v2198 = vpop.permute.xlu0 %2197
        %2199 = vrot.lane.b32.xlu0 %v1460, 12
        %v2200 = vpop.permute.xlu0 %2199
        %2201 = vrot.lane.b32.xlu0 %v1461, 12
        %v2202 = vpop.permute.xlu0 %2201
        %2203 = vrot.lane.b32.xlu0 %v1462, 12
        %v2204 = vpop.permute.xlu0 %2203
        %2205 = vrot.lane.b32.xlu0 %v1463, 12
        %v2206 = vpop.permute.xlu0 %2205
        %2207 = vrot.lane.b32.xlu0 %v1464, 12
        %v2208 = vpop.permute.xlu0 %2207
        %2209 = vrot.lane.b32.xlu0 %v1465, 12
        %v2210 = vpop.permute.xlu0 %2209
        %2211 = vrot.lane.b32.xlu0 %v1466, 12
        %v2212 = vpop.permute.xlu0 %2211
        %2213 = vrot.lane.b32.xlu0 %v1467, 12
        %v2214 = vpop.permute.xlu0 %2213
        %2215 = vrot.lane.b32.xlu0 %v1468, 12
        %v2216 = vpop.permute.xlu0 %2215
        %2217 = vrot.lane.b32.xlu0 %v1469, 12
        %v2218 = vpop.permute.xlu0 %2217
        %2219 = vrot.lane.b32.xlu0 %v1470, 12
        %v2220 = vpop.permute.xlu0 %2219
        %2221 = vrot.lane.b32.xlu0 %v1471, 12
        %v2222 = vpop.permute.xlu0 %2221
        %2223 = vrot.lane.b32.xlu0 %v1472, 12
        %v2224 = vpop.permute.xlu0 %2223
        %2225 = vrot.lane.b32.xlu0 %v1473, 12
        %v2226 = vpop.permute.xlu0 %2225
        %2227 = vrot.lane.b32.xlu0 %v1474, 12
        %v2228 = vpop.permute.xlu0 %2227
        %2229 = vrot.lane.b32.xlu0 %v1475, 12
        %v2230 = vpop.permute.xlu0 %2229
        %2231 = vrot.lane.b32.xlu0 %v1476, 12
        %v2232 = vpop.permute.xlu0 %2231
        %2233 = vrot.lane.b32.xlu0 %v1477, 12
        %v2234 = vpop.permute.xlu0 %2233
        %2235 = vrot.lane.b32.xlu0 %v1478, 12
        %v2236 = vpop.permute.xlu0 %2235
        %2237 = vrot.lane.b32.xlu0 %v1479, 12
        %v2238 = vpop.permute.xlu0 %2237
        %2239 = vrot.lane.b32.xlu0 %v1480, 12
        %v2240 = vpop.permute.xlu0 %2239
        %2241 = vrot.lane.b32.xlu0 %v1481, 12
        %v2242 = vpop.permute.xlu0 %2241
        %2243 = vrot.lane.b32.xlu0 %v1482, 12
        %v2244 = vpop.permute.xlu0 %2243
        %2245 = vrot.lane.b32.xlu0 %v1483, 12
        %v2246 = vpop.permute.xlu0 %2245
        %2247 = vrot.lane.b32.xlu0 %v1484, 12
        %v2248 = vpop.permute.xlu0 %2247
        %2249 = vrot.lane.b32.xlu0 %v1485, 12
        %v2250 = vpop.permute.xlu0 %2249
        %2251 = vrot.lane.b32.xlu0 %v1486, 12
        %v2252 = vpop.permute.xlu0 %2251
        %2253 = vrot.lane.b32.xlu0 %v1487, 12
        %v2254 = vpop.permute.xlu0 %2253
        %2255 = vrot.lane.b32.xlu0 %v1488, 12
        %v2256 = vpop.permute.xlu0 %2255
        %2257 = vrot.lane.b32.xlu0 %v1489, 12
        %v2258 = vpop.permute.xlu0 %2257
        %2291 = vrot.lane.b32.xlu0 %v1554, 16
        %v2292 = vpop.permute.xlu0 %2291
        %2293 = vrot.lane.b32.xlu0 %v1555, 16
        %v2294 = vpop.permute.xlu0 %2293
        %2295 = vrot.lane.b32.xlu0 %v1556, 16
        %v2296 = vpop.permute.xlu0 %2295
        %2297 = vrot.lane.b32.xlu0 %v1557, 16
        %v2298 = vpop.permute.xlu0 %2297
        %2299 = vrot.lane.b32.xlu0 %v1558, 16
        %v2300 = vpop.permute.xlu0 %2299
        %2301 = vrot.lane.b32.xlu0 %v1559, 16
        %v2302 = vpop.permute.xlu0 %2301
        %2303 = vrot.lane.b32.xlu0 %v1560, 16
        %v2304 = vpop.permute.xlu0 %2303
        %2305 = vrot.lane.b32.xlu0 %v1561, 16
        %v2306 = vpop.permute.xlu0 %2305
        %2307 = vrot.lane.b32.xlu0 %v1562, 16
        %v2308 = vpop.permute.xlu0 %2307
        %2309 = vrot.lane.b32.xlu0 %v1563, 16
        %v2310 = vpop.permute.xlu0 %2309
        %2311 = vrot.lane.b32.xlu0 %v1564, 16
        %v2312 = vpop.permute.xlu0 %2311
        %2313 = vrot.lane.b32.xlu0 %v1565, 16
        %v2314 = vpop.permute.xlu0 %2313
        %2315 = vrot.lane.b32.xlu0 %v1566, 16
        %v2316 = vpop.permute.xlu0 %2315
        %2317 = vrot.lane.b32.xlu0 %v1567, 16
        %v2318 = vpop.permute.xlu0 %2317
        %2319 = vrot.lane.b32.xlu0 %v1568, 16
        %v2320 = vpop.permute.xlu0 %2319
        %2321 = vrot.lane.b32.xlu0 %v1569, 16
        %v2322 = vpop.permute.xlu0 %2321
        %2323 = vrot.lane.b32.xlu0 %v1570, 16
        %v2324 = vpop.permute.xlu0 %2323
        %2325 = vrot.lane.b32.xlu0 %v1571, 16
        %v2326 = vpop.permute.xlu0 %2325
        %2327 = vrot.lane.b32.xlu0 %v1572, 16
        %v2328 = vpop.permute.xlu0 %2327
        %2329 = vrot.lane.b32.xlu0 %v1573, 16
        %v2330 = vpop.permute.xlu0 %2329
        %2331 = vrot.lane.b32.xlu0 %v1574, 16
        %v2332 = vpop.permute.xlu0 %2331
        %2333 = vrot.lane.b32.xlu0 %v1575, 16
        %v2334 = vpop.permute.xlu0 %2333
        %2335 = vrot.lane.b32.xlu0 %v1576, 16
        %v2336 = vpop.permute.xlu0 %2335
        %2337 = vrot.lane.b32.xlu0 %v1577, 16
        %v2338 = vpop.permute.xlu0 %2337
        %2339 = vrot.lane.b32.xlu0 %v1578, 16
        %v2340 = vpop.permute.xlu0 %2339
        %2341 = vrot.lane.b32.xlu0 %v1579, 16
        %v2342 = vpop.permute.xlu0 %2341
        %2343 = vrot.lane.b32.xlu0 %v1580, 16
        %v2344 = vpop.permute.xlu0 %2343
        %2345 = vrot.lane.b32.xlu0 %v1581, 16
        %v2346 = vpop.permute.xlu0 %2345
        %2347 = vrot.lane.b32.xlu0 %v1582, 16
        %v2348 = vpop.permute.xlu0 %2347
        %2349 = vrot.lane.b32.xlu0 %v1583, 16
        %v2350 = vpop.permute.xlu0 %2349
        %2351 = vrot.lane.b32.xlu0 %v1584, 16
        %v2352 = vpop.permute.xlu0 %2351
        %2353 = vrot.lane.b32.xlu0 %v1585, 16
        %v2354 = vpop.permute.xlu0 %2353
        %2387 = vrot.lane.b32.xlu0 %v1650, 20
        %v2388 = vpop.permute.xlu0 %2387
        %2389 = vrot.lane.b32.xlu0 %v1651, 20
        %v2390 = vpop.permute.xlu0 %2389
        %2391 = vrot.lane.b32.xlu0 %v1652, 20
        %v2392 = vpop.permute.xlu0 %2391
        %2393 = vrot.lane.b32.xlu0 %v1653, 20
        %v2394 = vpop.permute.xlu0 %2393
        %2395 = vrot.lane.b32.xlu0 %v1654, 20
        %v2396 = vpop.permute.xlu0 %2395
        %2397 = vrot.lane.b32.xlu0 %v1655, 20
        %v2398 = vpop.permute.xlu0 %2397
        %2399 = vrot.lane.b32.xlu0 %v1656, 20
        %v2400 = vpop.permute.xlu0 %2399
        %2401 = vrot.lane.b32.xlu0 %v1657, 20
        %v2402 = vpop.permute.xlu0 %2401
        %2403 = vrot.lane.b32.xlu0 %v1658, 20
        %v2404 = vpop.permute.xlu0 %2403
        %2405 = vrot.lane.b32.xlu0 %v1659, 20
        %v2406 = vpop.permute.xlu0 %2405
        %2407 = vrot.lane.b32.xlu0 %v1660, 20
        %v2408 = vpop.permute.xlu0 %2407
        %2409 = vrot.lane.b32.xlu0 %v1661, 20
        %v2410 = vpop.permute.xlu0 %2409
        %2411 = vrot.lane.b32.xlu0 %v1662, 20
        %v2412 = vpop.permute.xlu0 %2411
        %2413 = vrot.lane.b32.xlu0 %v1663, 20
        %v2414 = vpop.permute.xlu0 %2413
        %2415 = vrot.lane.b32.xlu0 %v1664, 20
        %v2416 = vpop.permute.xlu0 %2415
        %2417 = vrot.lane.b32.xlu0 %v1665, 20
        %v2418 = vpop.permute.xlu0 %2417
        %2419 = vrot.lane.b32.xlu0 %v1666, 20
        %v2420 = vpop.permute.xlu0 %2419
        %2421 = vrot.lane.b32.xlu0 %v1667, 20
        %v2422 = vpop.permute.xlu0 %2421
        %2423 = vrot.lane.b32.xlu0 %v1668, 20
        %v2424 = vpop.permute.xlu0 %2423
        %2425 = vrot.lane.b32.xlu0 %v1669, 20
        %v2426 = vpop.permute.xlu0 %2425
        %2427 = vrot.lane.b32.xlu0 %v1670, 20
        %v2428 = vpop.permute.xlu0 %2427
        %2429 = vrot.lane.b32.xlu0 %v1671, 20
        %v2430 = vpop.permute.xlu0 %2429
        %2431 = vrot.lane.b32.xlu0 %v1672, 20
        %v2432 = vpop.permute.xlu0 %2431
        %2433 = vrot.lane.b32.xlu0 %v1673, 20
        %v2434 = vpop.permute.xlu0 %2433
        %2435 = vrot.lane.b32.xlu0 %v1674, 20
        %v2436 = vpop.permute.xlu0 %2435
        %2437 = vrot.lane.b32.xlu0 %v1675, 20
        %v2438 = vpop.permute.xlu0 %2437
        %2439 = vrot.lane.b32.xlu0 %v1676, 20
        %v2440 = vpop.permute.xlu0 %2439
        %2441 = vrot.lane.b32.xlu0 %v1677, 20
        %v2442 = vpop.permute.xlu0 %2441
        %2443 = vrot.lane.b32.xlu0 %v1678, 20
        %v2444 = vpop.permute.xlu0 %2443
        %2445 = vrot.lane.b32.xlu0 %v1679, 20
        %v2446 = vpop.permute.xlu0 %2445
        %2447 = vrot.lane.b32.xlu0 %v1680, 20
        %v2448 = vpop.permute.xlu0 %2447
        %2449 = vrot.lane.b32.xlu0 %v1681, 20
        %v2450 = vpop.permute.xlu0 %2449
        %2483 = vrot.lane.b32.xlu0 %v1747, 24
        %v2484 = vpop.permute.xlu0 %2483
        %2485 = vrot.lane.b32.xlu0 %v1748, 24
        %v2486 = vpop.permute.xlu0 %2485
        %2487 = vrot.lane.b32.xlu0 %v1749, 24
        %v2488 = vpop.permute.xlu0 %2487
        %2489 = vrot.lane.b32.xlu0 %v1750, 24
        %v2490 = vpop.permute.xlu0 %2489
        %2491 = vrot.lane.b32.xlu0 %v1751, 24
        %v2492 = vpop.permute.xlu0 %2491
        %2493 = vrot.lane.b32.xlu0 %v1752, 24
        %v2494 = vpop.permute.xlu0 %2493
        %2495 = vrot.lane.b32.xlu0 %v1753, 24
        %v2496 = vpop.permute.xlu0 %2495
        %2497 = vrot.lane.b32.xlu0 %v1754, 24
        %v2498 = vpop.permute.xlu0 %2497
        %2499 = vrot.lane.b32.xlu0 %v1755, 24
        %v2500 = vpop.permute.xlu0 %2499
        %2501 = vrot.lane.b32.xlu0 %v1756, 24
        %v2502 = vpop.permute.xlu0 %2501
        %2503 = vrot.lane.b32.xlu0 %v1757, 24
        %v2504 = vpop.permute.xlu0 %2503
        %2505 = vrot.lane.b32.xlu0 %v1758, 24
        %v2506 = vpop.permute.xlu0 %2505
        %2507 = vrot.lane.b32.xlu0 %v1759, 24
        %v2508 = vpop.permute.xlu0 %2507
        %2509 = vrot.lane.b32.xlu0 %v1760, 24
        %v2510 = vpop.permute.xlu0 %2509
        %2511 = vrot.lane.b32.xlu0 %v1761, 24
        %v2512 = vpop.permute.xlu0 %2511
        %2513 = vrot.lane.b32.xlu0 %v1762, 24
        %v2514 = vpop.permute.xlu0 %2513
        %2515 = vrot.lane.b32.xlu0 %v1763, 24
        %v2516 = vpop.permute.xlu0 %2515
        %2517 = vrot.lane.b32.xlu0 %v1764, 24
        %v2518 = vpop.permute.xlu0 %2517
        %2519 = vrot.lane.b32.xlu0 %v1765, 24
        %v2520 = vpop.permute.xlu0 %2519
        %2521 = vrot.lane.b32.xlu0 %v1766, 24
        %v2522 = vpop.permute.xlu0 %2521
        %2523 = vrot.lane.b32.xlu0 %v1767, 24
        %v2524 = vpop.permute.xlu0 %2523
        %2525 = vrot.lane.b32.xlu0 %v1768, 24
        %v2526 = vpop.permute.xlu0 %2525
        %2527 = vrot.lane.b32.xlu0 %v1769, 24
        %v2528 = vpop.permute.xlu0 %2527
        %2529 = vrot.lane.b32.xlu0 %v1770, 24
        %v2530 = vpop.permute.xlu0 %2529
        %2531 = vrot.lane.b32.xlu0 %v1771, 24
        %v2532 = vpop.permute.xlu0 %2531
        %2533 = vrot.lane.b32.xlu0 %v1772, 24
        %v2534 = vpop.permute.xlu0 %2533
        %2535 = vrot.lane.b32.xlu0 %v1773, 24
        %v2536 = vpop.permute.xlu0 %2535
        %2537 = vrot.lane.b32.xlu0 %v1774, 24
        %v2538 = vpop.permute.xlu0 %2537
        %2539 = vrot.lane.b32.xlu0 %v1775, 24
        %v2540 = vpop.permute.xlu0 %2539
        %2541 = vrot.lane.b32.xlu0 %v1776, 24
        %v2542 = vpop.permute.xlu0 %2541
        %2543 = vrot.lane.b32.xlu0 %v1777, 24
        %v2544 = vpop.permute.xlu0 %2543
        %2545 = vrot.lane.b32.xlu0 %v1778, 24
        %v2546 = vpop.permute.xlu0 %2545
        %2579 = vrot.lane.b32.xlu0 %v1843, 28
        %v2580 = vpop.permute.xlu0 %2579
        %2581 = vrot.lane.b32.xlu0 %v1844, 28
        %v2582 = vpop.permute.xlu0 %2581
        %2583 = vrot.lane.b32.xlu0 %v1845, 28
        %v2584 = vpop.permute.xlu0 %2583
        %2585 = vrot.lane.b32.xlu0 %v1846, 28
        %v2586 = vpop.permute.xlu0 %2585
        %2587 = vrot.lane.b32.xlu0 %v1847, 28
        %v2588 = vpop.permute.xlu0 %2587
        %2589 = vrot.lane.b32.xlu0 %v1848, 28
        %v2590 = vpop.permute.xlu0 %2589
        %2591 = vrot.lane.b32.xlu0 %v1849, 28
        %v2592 = vpop.permute.xlu0 %2591
        %2593 = vrot.lane.b32.xlu0 %v1850, 28
        %v2594 = vpop.permute.xlu0 %2593
        %2595 = vrot.lane.b32.xlu0 %v1851, 28
        %v2596 = vpop.permute.xlu0 %2595
        %2597 = vrot.lane.b32.xlu0 %v1852, 28
        %v2598 = vpop.permute.xlu0 %2597
        %2599 = vrot.lane.b32.xlu0 %v1853, 28
        %v2600 = vpop.permute.xlu0 %2599
        %2601 = vrot.lane.b32.xlu0 %v1854, 28
        %v2602 = vpop.permute.xlu0 %2601
        %2603 = vrot.lane.b32.xlu0 %v1855, 28
        %v2604 = vpop.permute.xlu0 %2603
        %2605 = vrot.lane.b32.xlu0 %v1856, 28
        %v2606 = vpop.permute.xlu0 %2605
        %2607 = vrot.lane.b32.xlu0 %v1857, 28
        %v2608 = vpop.permute.xlu0 %2607
        %2609 = vrot.lane.b32.xlu0 %v1858, 28
        %v2610 = vpop.permute.xlu0 %2609
        %2611 = vrot.lane.b32.xlu0 %v1859, 28
        %v2612 = vpop.permute.xlu0 %2611
        %2613 = vrot.lane.b32.xlu0 %v1860, 28
        %v2614 = vpop.permute.xlu0 %2613
        %2615 = vrot.lane.b32.xlu0 %v1861, 28
        %v2616 = vpop.permute.xlu0 %2615
        %2617 = vrot.lane.b32.xlu0 %v1862, 28
        %v2618 = vpop.permute.xlu0 %2617
        %2619 = vrot.lane.b32.xlu0 %v1863, 28
        %v2620 = vpop.permute.xlu0 %2619
        %2621 = vrot.lane.b32.xlu0 %v1864, 28
        %v2622 = vpop.permute.xlu0 %2621
        %2623 = vrot.lane.b32.xlu0 %v1865, 28
        %v2624 = vpop.permute.xlu0 %2623
        %2625 = vrot.lane.b32.xlu0 %v1866, 28
        %v2626 = vpop.permute.xlu0 %2625
        %2627 = vrot.lane.b32.xlu0 %v1867, 28
        %v2628 = vpop.permute.xlu0 %2627
        %2629 = vrot.lane.b32.xlu0 %v1868, 28
        %v2630 = vpop.permute.xlu0 %2629
        %2631 = vrot.lane.b32.xlu0 %v1869, 28
        %v2632 = vpop.permute.xlu0 %2631
        %2633 = vrot.lane.b32.xlu0 %v1870, 28
        %v2634 = vpop.permute.xlu0 %2633
        %2635 = vrot.lane.b32.xlu0 %v1871, 28
        %v2636 = vpop.permute.xlu0 %2635
        %2637 = vrot.lane.b32.xlu0 %v1872, 28
        %v2638 = vpop.permute.xlu0 %2637
        %2639 = vrot.lane.b32.xlu0 %v1873, 28
        %v2640 = vpop.permute.xlu0 %2639
        %2641 = vrot.lane.b32.xlu0 %v1874, 28
        %v2642 = vpop.permute.xlu0 %2641
        %2675 = vrot.lane.b32.xlu0 %v1939, 32
        %v2676 = vpop.permute.xlu0 %2675
        %2677 = vrot.lane.b32.xlu0 %v1940, 32
        %v2678 = vpop.permute.xlu0 %2677
        %2679 = vrot.lane.b32.xlu0 %v1941, 32
        %v2680 = vpop.permute.xlu0 %2679
        %2681 = vrot.lane.b32.xlu0 %v1942, 32
        %v2682 = vpop.permute.xlu0 %2681
        %2683 = vrot.lane.b32.xlu0 %v1943, 32
        %v2684 = vpop.permute.xlu0 %2683
        %2685 = vrot.lane.b32.xlu0 %v1944, 32
        %v2686 = vpop.permute.xlu0 %2685
        %2687 = vrot.lane.b32.xlu0 %v1945, 32
        %v2688 = vpop.permute.xlu0 %2687
        %2689 = vrot.lane.b32.xlu0 %v1946, 32
        %v2690 = vpop.permute.xlu0 %2689
        %2691 = vrot.lane.b32.xlu0 %v1947, 32
        %v2692 = vpop.permute.xlu0 %2691
        %2693 = vrot.lane.b32.xlu0 %v1948, 32
        %v2694 = vpop.permute.xlu0 %2693
        %2695 = vrot.lane.b32.xlu0 %v1949, 32
        %v2696 = vpop.permute.xlu0 %2695
        %2697 = vrot.lane.b32.xlu0 %v1950, 32
        %v2698 = vpop.permute.xlu0 %2697
        %2699 = vrot.lane.b32.xlu0 %v1951, 32
        %v2700 = vpop.permute.xlu0 %2699
        %2701 = vrot.lane.b32.xlu0 %v1952, 32
        %v2702 = vpop.permute.xlu0 %2701
        %2703 = vrot.lane.b32.xlu0 %v1953, 32
        %v2704 = vpop.permute.xlu0 %2703
        %2705 = vrot.lane.b32.xlu0 %v1954, 32
        %v2706 = vpop.permute.xlu0 %2705
        %2707 = vrot.lane.b32.xlu0 %v1955, 32
        %v2708 = vpop.permute.xlu0 %2707
        %2709 = vrot.lane.b32.xlu0 %v1956, 32
        %v2710 = vpop.permute.xlu0 %2709
        %2711 = vrot.lane.b32.xlu0 %v1957, 32
        %v2712 = vpop.permute.xlu0 %2711
        %2713 = vrot.lane.b32.xlu0 %v1958, 32
        %v2714 = vpop.permute.xlu0 %2713
        %2715 = vrot.lane.b32.xlu0 %v1959, 32
        %v2716 = vpop.permute.xlu0 %2715
        %2717 = vrot.lane.b32.xlu0 %v1960, 32
        %v2718 = vpop.permute.xlu0 %2717
        %2719 = vrot.lane.b32.xlu0 %v1961, 32
        %v2720 = vpop.permute.xlu0 %2719
        %2721 = vrot.lane.b32.xlu0 %v1962, 32
        %v2722 = vpop.permute.xlu0 %2721
        %2723 = vrot.lane.b32.xlu0 %v1963, 32
        %v2724 = vpop.permute.xlu0 %2723
        %2725 = vrot.lane.b32.xlu0 %v1964, 32
        %v2726 = vpop.permute.xlu0 %2725
        %2727 = vrot.lane.b32.xlu0 %v1965, 32
        %v2728 = vpop.permute.xlu0 %2727
        %2729 = vrot.lane.b32.xlu0 %v1966, 32
        %v2730 = vpop.permute.xlu0 %2729
        %2731 = vrot.lane.b32.xlu0 %v1967, 32
        %v2732 = vpop.permute.xlu0 %2731
        %2733 = vrot.lane.b32.xlu0 %v1968, 32
        %v2734 = vpop.permute.xlu0 %2733
        %2735 = vrot.lane.b32.xlu0 %v1969, 32
        %v2736 = vpop.permute.xlu0 %2735
        %2737 = vrot.lane.b32.xlu0 %v1970, 32
        %v2738 = vpop.permute.xlu0 %2737
        %v2741 = vsel %vm845, %v1170, %v2004
        %v2744 = vsel %vm845, %v1171, %v2006
        %v2747 = vsel %vm845, %v1172, %v2008
        %v2750 = vsel %vm845, %v1173, %v2010
        %v2753 = vsel %vm845, %v1174, %v2012
        %v2756 = vsel %vm845, %v1175, %v2014
        %v2759 = vsel %vm845, %v1176, %v2016
        %v2762 = vsel %vm845, %v1177, %v2018
        %v2765 = vsel %vm845, %v1178, %v2020
        %v2768 = vsel %vm845, %v1179, %v2022
        %v2771 = vsel %vm845, %v1180, %v2024
        %v2774 = vsel %vm845, %v1181, %v2026
        %v2777 = vsel %vm845, %v1182, %v2028
        %v2780 = vsel %vm845, %v1183, %v2030
        %v2783 = vsel %vm845, %v1184, %v2032
        %v2786 = vsel %vm845, %v1185, %v2034
        %v2789 = vsel %vm845, %v1186, %v2036
        %v2792 = vsel %vm845, %v1187, %v2038
        %v2795 = vsel %vm845, %v1188, %v2040
        %v2798 = vsel %vm845, %v1189, %v2042
        %v2801 = vsel %vm845, %v1190, %v2044
        %v2804 = vsel %vm845, %v1191, %v2046
        %v2807 = vsel %vm845, %v1192, %v2048
        %v2810 = vsel %vm845, %v1193, %v2050
        %v2813 = vsel %vm845, %v1194, %v2052
        %v2816 = vsel %vm845, %v1195, %v2054
        %v2819 = vsel %vm845, %v1196, %v2056
        %v2822 = vsel %vm845, %v1197, %v2058
        %v2825 = vsel %vm845, %v1198, %v2060
        %v2828 = vsel %vm845, %v1199, %v2062
        %v2831 = vsel %vm845, %v1200, %v2064
        %v2834 = vsel %vm845, %v1201, %v2066
        %vm2835 = vcmask 64512
        %v2837 = vsel %vm2835, %v2741, %v2100
        %v2839 = vsel %vm2835, %v2744, %v2102
        %v2841 = vsel %vm2835, %v2747, %v2104
        %v2843 = vsel %vm2835, %v2750, %v2106
        %v2845 = vsel %vm2835, %v2753, %v2108
        %v2847 = vsel %vm2835, %v2756, %v2110
        %v2849 = vsel %vm2835, %v2759, %v2112
        %v2851 = vsel %vm2835, %v2762, %v2114
        %v2853 = vsel %vm2835, %v2765, %v2116
        %v2855 = vsel %vm2835, %v2768, %v2118
        %v2857 = vsel %vm2835, %v2771, %v2120
        %v2859 = vsel %vm2835, %v2774, %v2122
        %v2861 = vsel %vm2835, %v2777, %v2124
        %v2863 = vsel %vm2835, %v2780, %v2126
        %v2865 = vsel %vm2835, %v2783, %v2128
        %v2867 = vsel %vm2835, %v2786, %v2130
        %v2869 = vsel %vm2835, %v2789, %v2132
        %v2871 = vsel %vm2835, %v2792, %v2134
        %v2873 = vsel %vm2835, %v2795, %v2136
        %v2875 = vsel %vm2835, %v2798, %v2138
        %v2877 = vsel %vm2835, %v2801, %v2140
        %v2879 = vsel %vm2835, %v2804, %v2142
        %v2881 = vsel %vm2835, %v2807, %v2144
        %v2883 = vsel %vm2835, %v2810, %v2146
        %v2885 = vsel %vm2835, %v2813, %v2148
        %v2887 = vsel %vm2835, %v2816, %v2150
        %v2889 = vsel %vm2835, %v2819, %v2152
        %v2891 = vsel %vm2835, %v2822, %v2154
        %v2893 = vsel %vm2835, %v2825, %v2156
        %v2895 = vsel %vm2835, %v2828, %v2158
        %v2897 = vsel %vm2835, %v2831, %v2160
        %v2899 = vsel %vm2835, %v2834, %v2162
        %vm2900 = vcmask 97280
        %v2902 = vsel %vm2900, %v2837, %v2196
        %v2904 = vsel %vm2900, %v2839, %v2198
        %v2906 = vsel %vm2900, %v2841, %v2200
        %v2908 = vsel %vm2900, %v2843, %v2202
        %v2910 = vsel %vm2900, %v2845, %v2204
        %v2912 = vsel %vm2900, %v2847, %v2206
        %v2914 = vsel %vm2900, %v2849, %v2208
        %v2916 = vsel %vm2900, %v2851, %v2210
        %v2918 = vsel %vm2900, %v2853, %v2212
        %v2920 = vsel %vm2900, %v2855, %v2214
        %v2922 = vsel %vm2900, %v2857, %v2216
        %v2924 = vsel %vm2900, %v2859, %v2218
        %v2926 = vsel %vm2900, %v2861, %v2220
        %v2928 = vsel %vm2900, %v2863, %v2222
        %v2930 = vsel %vm2900, %v2865, %v2224
        %v2932 = vsel %vm2900, %v2867, %v2226
        %v2934 = vsel %vm2900, %v2869, %v2228
        %v2936 = vsel %vm2900, %v2871, %v2230
        %v2938 = vsel %vm2900, %v2873, %v2232
        %v2940 = vsel %vm2900, %v2875, %v2234
        %v2942 = vsel %vm2900, %v2877, %v2236
        %v2944 = vsel %vm2900, %v2879, %v2238
        %v2946 = vsel %vm2900, %v2881, %v2240
        %v2948 = vsel %vm2900, %v2883, %v2242
        %v2950 = vsel %vm2900, %v2885, %v2244
        %v2952 = vsel %vm2900, %v2887, %v2246
        %v2954 = vsel %vm2900, %v2889, %v2248
        %v2956 = vsel %vm2900, %v2891, %v2250
        %v2958 = vsel %vm2900, %v2893, %v2252
        %v2960 = vsel %vm2900, %v2895, %v2254
        %v2962 = vsel %vm2900, %v2897, %v2256
        %v2964 = vsel %vm2900, %v2899, %v2258
        %v2966 = vsel %vm395, %v2902, %v2292
        %v2968 = vsel %vm395, %v2904, %v2294
        %v2970 = vsel %vm395, %v2906, %v2296
        %v2972 = vsel %vm395, %v2908, %v2298
        %v2974 = vsel %vm395, %v2910, %v2300
        %v2976 = vsel %vm395, %v2912, %v2302
        %v2978 = vsel %vm395, %v2914, %v2304
        %v2980 = vsel %vm395, %v2916, %v2306
        %v2982 = vsel %vm395, %v2918, %v2308
        %v2984 = vsel %vm395, %v2920, %v2310
        %v2986 = vsel %vm395, %v2922, %v2312
        %v2988 = vsel %vm395, %v2924, %v2314
        %v2990 = vsel %vm395, %v2926, %v2316
        %v2992 = vsel %vm395, %v2928, %v2318
        %v2994 = vsel %vm395, %v2930, %v2320
        %v2996 = vsel %vm395, %v2932, %v2322
        %v2998 = vsel %vm395, %v2934, %v2324
        %v3000 = vsel %vm395, %v2936, %v2326
        %v3002 = vsel %vm395, %v2938, %v2328
        %v3004 = vsel %vm395, %v2940, %v2330
        %v3006 = vsel %vm395, %v2942, %v2332
        %v3008 = vsel %vm395, %v2944, %v2334
        %v3010 = vsel %vm395, %v2946, %v2336
        %v3012 = vsel %vm395, %v2948, %v2338
        %v3014 = vsel %vm395, %v2950, %v2340
        %v3016 = vsel %vm395, %v2952, %v2342
        %v3018 = vsel %vm395, %v2954, %v2344
        %v3020 = vsel %vm395, %v2956, %v2346
        %v3022 = vsel %vm395, %v2958, %v2348
        %v3024 = vsel %vm395, %v2960, %v2350
        %v3026 = vsel %vm395, %v2962, %v2352
        %v3028 = vsel %vm395, %v2964, %v2354
        %vm3029 = vcmask 162816
        %v3031 = vsel %vm3029, %v2966, %v2388
        %v3033 = vsel %vm3029, %v2968, %v2390
        %v3035 = vsel %vm3029, %v2970, %v2392
        %v3037 = vsel %vm3029, %v2972, %v2394
        %v3039 = vsel %vm3029, %v2974, %v2396
        %v3041 = vsel %vm3029, %v2976, %v2398
        %v3043 = vsel %vm3029, %v2978, %v2400
        %v3045 = vsel %vm3029, %v2980, %v2402
        %v3047 = vsel %vm3029, %v2982, %v2404
        %v3049 = vsel %vm3029, %v2984, %v2406
        %v3051 = vsel %vm3029, %v2986, %v2408
        %v3053 = vsel %vm3029, %v2988, %v2410
        %v3055 = vsel %vm3029, %v2990, %v2412
        %v3057 = vsel %vm3029, %v2992, %v2414
        %v3059 = vsel %vm3029, %v2994, %v2416
        %v3061 = vsel %vm3029, %v2996, %v2418
        %v3063 = vsel %vm3029, %v2998, %v2420
        %v3065 = vsel %vm3029, %v3000, %v2422
        %v3067 = vsel %vm3029, %v3002, %v2424
        %v3069 = vsel %vm3029, %v3004, %v2426
        %v3071 = vsel %vm3029, %v3006, %v2428
        %v3073 = vsel %vm3029, %v3008, %v2430
        %v3075 = vsel %vm3029, %v3010, %v2432
        %v3077 = vsel %vm3029, %v3012, %v2434
        %v3079 = vsel %vm3029, %v3014, %v2436
        %v3081 = vsel %vm3029, %v3016, %v2438
        %v3083 = vsel %vm3029, %v3018, %v2440
        %v3085 = vsel %vm3029, %v3020, %v2442
        %v3087 = vsel %vm3029, %v3022, %v2444
        %v3089 = vsel %vm3029, %v3024, %v2446
        %v3091 = vsel %vm3029, %v3026, %v2448
        %v3093 = vsel %vm3029, %v3028, %v2450
        %vm3094 = vcmask 195584
        %v3096 = vsel %vm3094, %v3031, %v2484
        %v3098 = vsel %vm3094, %v3033, %v2486
        %v3100 = vsel %vm3094, %v3035, %v2488
        %v3102 = vsel %vm3094, %v3037, %v2490
        %v3104 = vsel %vm3094, %v3039, %v2492
        %v3106 = vsel %vm3094, %v3041, %v2494
        %v3108 = vsel %vm3094, %v3043, %v2496
        %v3110 = vsel %vm3094, %v3045, %v2498
        %v3112 = vsel %vm3094, %v3047, %v2500
        %v3114 = vsel %vm3094, %v3049, %v2502
        %v3116 = vsel %vm3094, %v3051, %v2504
        %v3118 = vsel %vm3094, %v3053, %v2506
        %v3120 = vsel %vm3094, %v3055, %v2508
        %v3122 = vsel %vm3094, %v3057, %v2510
        %v3124 = vsel %vm3094, %v3059, %v2512
        %v3126 = vsel %vm3094, %v3061, %v2514
        %v3128 = vsel %vm3094, %v3063, %v2516
        %v3130 = vsel %vm3094, %v3065, %v2518
        %v3132 = vsel %vm3094, %v3067, %v2520
        %v3134 = vsel %vm3094, %v3069, %v2522
        %v3136 = vsel %vm3094, %v3071, %v2524
        %v3138 = vsel %vm3094, %v3073, %v2526
        %v3140 = vsel %vm3094, %v3075, %v2528
        %v3142 = vsel %vm3094, %v3077, %v2530
        %v3144 = vsel %vm3094, %v3079, %v2532
        %v3146 = vsel %vm3094, %v3081, %v2534
        %v3148 = vsel %vm3094, %v3083, %v2536
        %v3150 = vsel %vm3094, %v3085, %v2538
        %v3152 = vsel %vm3094, %v3087, %v2540
        %v3154 = vsel %vm3094, %v3089, %v2542
        %v3156 = vsel %vm3094, %v3091, %v2544
        %v3158 = vsel %vm3094, %v3093, %v2546
        %vm3159 = vcmask 228352
        %v3161 = vsel %vm3159, %v3096, %v2580
        %v3163 = vsel %vm3159, %v3098, %v2582
        %v3165 = vsel %vm3159, %v3100, %v2584
        %v3167 = vsel %vm3159, %v3102, %v2586
        %v3169 = vsel %vm3159, %v3104, %v2588
        %v3171 = vsel %vm3159, %v3106, %v2590
        %v3173 = vsel %vm3159, %v3108, %v2592
        %v3175 = vsel %vm3159, %v3110, %v2594
        %v3177 = vsel %vm3159, %v3112, %v2596
        %v3179 = vsel %vm3159, %v3114, %v2598
        %v3181 = vsel %vm3159, %v3116, %v2600
        %v3183 = vsel %vm3159, %v3118, %v2602
        %v3185 = vsel %vm3159, %v3120, %v2604
        %v3187 = vsel %vm3159, %v3122, %v2606
        %v3189 = vsel %vm3159, %v3124, %v2608
        %v3191 = vsel %vm3159, %v3126, %v2610
        %v3193 = vsel %vm3159, %v3128, %v2612
        %v3195 = vsel %vm3159, %v3130, %v2614
        %v3197 = vsel %vm3159, %v3132, %v2616
        %v3199 = vsel %vm3159, %v3134, %v2618
        %v3201 = vsel %vm3159, %v3136, %v2620
        %v3203 = vsel %vm3159, %v3138, %v2622
        %v3205 = vsel %vm3159, %v3140, %v2624
        %v3207 = vsel %vm3159, %v3142, %v2626
        %v3209 = vsel %vm3159, %v3144, %v2628
        %v3211 = vsel %vm3159, %v3146, %v2630
        %v3213 = vsel %vm3159, %v3148, %v2632
        %v3215 = vsel %vm3159, %v3150, %v2634
        %v3217 = vsel %vm3159, %v3152, %v2636
        %v3219 = vsel %vm3159, %v3154, %v2638
        %v3221 = vsel %vm3159, %v3156, %v2640
        %v3223 = vsel %vm3159, %v3158, %v2642
        %vm3224 = vcmask 261120
        %v3226 = vsel %vm3224, %v3161, %v2676
        %v3228 = vsel %vm3224, %v3163, %v2678
        %v3230 = vsel %vm3224, %v3165, %v2680
        %v3232 = vsel %vm3224, %v3167, %v2682
        %v3234 = vsel %vm3224, %v3169, %v2684
        %v3236 = vsel %vm3224, %v3171, %v2686
        %v3238 = vsel %vm3224, %v3173, %v2688
        %v3240 = vsel %vm3224, %v3175, %v2690
        %v3242 = vsel %vm3224, %v3177, %v2692
        %v3244 = vsel %vm3224, %v3179, %v2694
        %v3246 = vsel %vm3224, %v3181, %v2696
        %v3248 = vsel %vm3224, %v3183, %v2698
        %v3250 = vsel %vm3224, %v3185, %v2700
        %v3252 = vsel %vm3224, %v3187, %v2702
        %v3254 = vsel %vm3224, %v3189, %v2704
        %v3256 = vsel %vm3224, %v3191, %v2706
        %v3258 = vsel %vm3224, %v3193, %v2708
        %v3260 = vsel %vm3224, %v3195, %v2710
        %v3262 = vsel %vm3224, %v3197, %v2712
        %v3264 = vsel %vm3224, %v3199, %v2714
        %v3266 = vsel %vm3224, %v3201, %v2716
        %v3268 = vsel %vm3224, %v3203, %v2718
        %v3270 = vsel %vm3224, %v3205, %v2720
        %v3272 = vsel %vm3224, %v3207, %v2722
        %v3274 = vsel %vm3224, %v3209, %v2724
        %v3276 = vsel %vm3224, %v3211, %v2726
        %v3278 = vsel %vm3224, %v3213, %v2728
        %v3280 = vsel %vm3224, %v3215, %v2730
        %v3282 = vsel %vm3224, %v3217, %v2732
        %v3284 = vsel %vm3224, %v3219, %v2734
        %v3286 = vsel %vm3224, %v3221, %v2736
        %v3288 = vsel %vm3224, %v3223, %v2738
        %v3289 = vld [vmem:[%s3] sm:$0xf]
        %v3290 = vld [vmem:[%s3 + $0x4] sm:$0xf]
        %v3291 = vld [vmem:[%s3 + $0x8] sm:$0xf]
        %v3292 = vld [vmem:[%s3 + $0xc] sm:$0xf]
        %v3293 = vld [vmem:[%s3 + $0x10] sm:$0x3]
        %v3294 = vld [vmem:[%s4] sm:$0x1]
        %v3296 = vlaneseq
        %v3297 = vshrl.u32 %v3296, 7
        %v3298 = vsub.s32 0, %v3297
        %v3299 = vrot.slane %v3294, %v3298
        %v3306 = vunpack.c.l.b16 %v3289
        %v3307 = vunpack.c.l.b16 %v3290
        %v3308 = vunpack.c.l.b16 %v3291
        %v3309 = vunpack.c.l.b16 %v3292
        %v3310 = vunpack.c.l.b16 %v3293
        %v3311 = vpack.c.b16 %v3307, %v3306
        %v3312 = vpack.c.b16 %v3309, %v3308
        %v3313 = vpack.c.b16 %v3310, %v3310
        %vm3316 = vcmask 293888
        %v3317 = vsel %vm3316, %v3226, 0
        %v3319 = vsel %vm3316, %v3228, 0
        %v3321 = vsel %vm3316, %v3230, 0
        %v3323 = vsel %vm3316, %v3232, 0
        %v3325 = vsel %vm3316, %v3234, 0
        %v3327 = vsel %vm3316, %v3236, 0
        %v3329 = vsel %vm3316, %v3238, 0
        %v3331 = vsel %vm3316, %v3240, 0
        %v3333 = vsel %vm3316, %v3242, 0
        %v3335 = vsel %vm3316, %v3244, 0
        %v3337 = vsel %vm3316, %v3246, 0
        %v3339 = vsel %vm3316, %v3248, 0
        %v3341 = vsel %vm3316, %v3250, 0
        %v3343 = vsel %vm3316, %v3252, 0
        %v3345 = vsel %vm3316, %v3254, 0
        %v3347 = vsel %vm3316, %v3256, 0
        %v3349 = vsel %vm3316, %v3258, 0
        %v3351 = vsel %vm3316, %v3260, 0
        %v3353 = vsel %vm3316, %v3262, 0
        %v3355 = vsel %vm3316, %v3264, 0
        %v3357 = vsel %vm3316, %v3266, 0
        %v3359 = vsel %vm3316, %v3268, 0
        %v3361 = vsel %vm3316, %v3270, 0
        %v3363 = vsel %vm3316, %v3272, 0
        %v3365 = vsel %vm3316, %v3274, 0
        %v3367 = vsel %vm3316, %v3276, 0
        %v3369 = vsel %vm3316, %v3278, 0
        %v3371 = vsel %vm3316, %v3280, 0
        %v3373 = vsel %vm3316, %v3282, 0
        %v3375 = vsel %vm3316, %v3284, 0
        %v3377 = vsel %vm3316, %v3286, 0
        %v3379 = vsel %vm3316, %v3288, 0
        %vm3381 = vcmask 1041408
        %v3383 = vsel %vm3381, %v3313, 0
        %3385 = vmatprep.subr.bf16.mxu0 0
        %3386 = vmatpush1.bf16.msra.mxu0 0
        %3387 = vmatprep.subr.bf16.mxu0 0
        %3388 = vmatpush1.bf16.msra.mxu0 0
        %3389 = vmatprep.subr.bf16.mxu0 0
        %3390 = vmatpush1.bf16.msra.mxu0 0
        %3391 = vmatprep.subr.bf16.mxu0 0
        %3392 = vmatpush1.bf16.msra.mxu0 0
        %3393 = vmatprep.subr.bf16.mxu0 0
        %3394 = vmatpush1.bf16.msra.mxu0 0
        %3395 = vmatprep.subr.bf16.mxu0 0
        %3396 = vmatpush1.bf16.msra.mxu0 %v3383
        %3397 = vmatprep.subr.bf16.mxu0 0
        %3398 = vmatpush1.bf16.msra.mxu0 %v3312
        %3399 = vmatprep.subr.bf16.mxu0 0
        %3400 = vmatpush1.bf16.msra.mxu0 %v3311
        %3401 = vmatprep.subr.bf16.mxu0 0
        %3402 = vmatpush2.bf16.msra.mxu0 0
        %3403 = vmatprep.subr.bf16.mxu0 0
        %3404 = vmatpush2.bf16.msra.mxu0 0
        %3405 = vmatprep.subr.bf16.mxu0 0
        %3406 = vmatpush2.bf16.msra.mxu0 0
        %3407 = vmatprep.subr.bf16.mxu0 0
        %3408 = vmatpush2.bf16.msra.mxu0 0
        %3409 = vmatprep.subr.bf16.mxu0 0
        %3410 = vmatpush2.bf16.msra.mxu0 0
        %3411 = vmatprep.subr.bf16.mxu0 0
        %3412 = vmatpush2.bf16.msra.mxu0 0
        %3413 = vmatprep.subr.bf16.mxu0 0
        %3414 = vmatpush2.bf16.msra.mxu0 0
        %3415 = vmatprep.subr.bf16.mxu0 0
        %3416 = vmatpush2.bf16.msra.mxu0 0
        %3417 = vmatprep.mubr.bf16.mxu0 0
        %3418 = vmatmul.mubr.bf16.gmra.mxu0 %v3317
        %v3419 = vpop.f32.mrf.mxu0
        %v3420 = vadd.f32 %v3299, %v3419
        %v3421 = vpop.f32.mrf.mxu0
        %v3422 = vpop.f32.mrf.mxu0
        %v3423 = vadd.f32 %v3299, %v3422
        %v3424 = vpop.f32.mrf.mxu0
        %3425 = vmatprep.mubr.bf16.mxu0 0
        %3426 = vmatmul.mubr.bf16.gmra.mxu0 %v3319
        %v3427 = vpop.f32.mrf.mxu0
        %v3428 = vadd.f32 %v3299, %v3427
        %v3429 = vpop.f32.mrf.mxu0
        %v3430 = vpop.f32.mrf.mxu0
        %v3431 = vadd.f32 %v3299, %v3430
        %v3432 = vpop.f32.mrf.mxu0
        %3433 = vmatprep.mubr.bf16.mxu0 0
        %3434 = vmatmul.mubr.bf16.gmra.mxu0 %v3321
        %v3435 = vpop.f32.mrf.mxu0
        %v3436 = vadd.f32 %v3299, %v3435
        %v3437 = vpop.f32.mrf.mxu0
        %v3438 = vpop.f32.mrf.mxu0
        %v3439 = vadd.f32 %v3299, %v3438
        %v3440 = vpop.f32.mrf.mxu0
        %3441 = vmatprep.mubr.bf16.mxu0 0
        %3442 = vmatmul.mubr.bf16.gmra.mxu0 %v3323
        %v3443 = vpop.f32.mrf.mxu0
        %v3444 = vadd.f32 %v3299, %v3443
        %v3445 = vpop.f32.mrf.mxu0
        %v3446 = vpop.f32.mrf.mxu0
        %v3447 = vadd.f32 %v3299, %v3446
        %v3448 = vpop.f32.mrf.mxu0
        %3449 = vmatprep.mubr.bf16.mxu0 0
        %3450 = vmatmul.mubr.bf16.gmra.mxu0 %v3325
        %v3451 = vpop.f32.mrf.mxu0
        %v3452 = vadd.f32 %v3299, %v3451
        %v3453 = vpop.f32.mrf.mxu0
        %v3454 = vpop.f32.mrf.mxu0
        %v3455 = vadd.f32 %v3299, %v3454
        %v3456 = vpop.f32.mrf.mxu0
        %3457 = vmatprep.mubr.bf16.mxu0 0
        %3458 = vmatmul.mubr.bf16.gmra.mxu0 %v3327
        %v3459 = vpop.f32.mrf.mxu0
        %v3460 = vadd.f32 %v3299, %v3459
        %v3461 = vpop.f32.mrf.mxu0
        %v3462 = vpop.f32.mrf.mxu0
        %v3463 = vadd.f32 %v3299, %v3462
        %v3464 = vpop.f32.mrf.mxu0
        %3465 = vmatprep.mubr.bf16.mxu0 0
        %3466 = vmatmul.mubr.bf16.gmra.mxu0 %v3329
        %v3467 = vpop.f32.mrf.mxu0
        %v3468 = vadd.f32 %v3299, %v3467
        %v3469 = vpop.f32.mrf.mxu0
        %v3470 = vpop.f32.mrf.mxu0
        %v3471 = vadd.f32 %v3299, %v3470
        %v3472 = vpop.f32.mrf.mxu0
        %3473 = vmatprep.mubr.bf16.mxu0 0
        %3474 = vmatmul.mubr.bf16.gmra.mxu0 %v3331
        %v3475 = vpop.f32.mrf.mxu0
        %v3476 = vadd.f32 %v3299, %v3475
        %v3477 = vpop.f32.mrf.mxu0
        %v3478 = vpop.f32.mrf.mxu0
        %v3479 = vadd.f32 %v3299, %v3478
        %v3480 = vpop.f32.mrf.mxu0
        %3481 = vmatprep.mubr.bf16.mxu0 0
        %3482 = vmatmul.mubr.bf16.gmra.mxu0 %v3333
        %v3483 = vpop.f32.mrf.mxu0
        %v3484 = vadd.f32 %v3299, %v3483
        %v3485 = vpop.f32.mrf.mxu0
        %v3486 = vpop.f32.mrf.mxu0
        %v3487 = vadd.f32 %v3299, %v3486
        %v3488 = vpop.f32.mrf.mxu0
        %3489 = vmatprep.mubr.bf16.mxu0 0
        %3490 = vmatmul.mubr.bf16.gmra.mxu0 %v3335
        %v3491 = vpop.f32.mrf.mxu0
        %v3492 = vadd.f32 %v3299, %v3491
        %v3493 = vpop.f32.mrf.mxu0
        %v3494 = vpop.f32.mrf.mxu0
        %v3495 = vadd.f32 %v3299, %v3494
        %v3496 = vpop.f32.mrf.mxu0
        %3497 = vmatprep.mubr.bf16.mxu0 0
        %3498 = vmatmul.mubr.bf16.gmra.mxu0 %v3337
        %v3499 = vpop.f32.mrf.mxu0
        %v3500 = vadd.f32 %v3299, %v3499
        %v3501 = vpop.f32.mrf.mxu0
        %v3502 = vpop.f32.mrf.mxu0
        %v3503 = vadd.f32 %v3299, %v3502
        %v3504 = vpop.f32.mrf.mxu0
        %3505 = vmatprep.mubr.bf16.mxu0 0
        %3506 = vmatmul.mubr.bf16.gmra.mxu0 %v3339
        %v3507 = vpop.f32.mrf.mxu0
        %v3508 = vadd.f32 %v3299, %v3507
        %v3509 = vpop.f32.mrf.mxu0
        %v3510 = vpop.f32.mrf.mxu0
        %v3511 = vadd.f32 %v3299, %v3510
        %v3512 = vpop.f32.mrf.mxu0
        %3513 = vmatprep.mubr.bf16.mxu0 0
        %3514 = vmatmul.mubr.bf16.gmra.mxu0 %v3341
        %v3515 = vpop.f32.mrf.mxu0
        %v3516 = vadd.f32 %v3299, %v3515
        %v3517 = vpop.f32.mrf.mxu0
        %v3518 = vpop.f32.mrf.mxu0
        %v3519 = vadd.f32 %v3299, %v3518
        %v3520 = vpop.f32.mrf.mxu0
        %3521 = vmatprep.mubr.bf16.mxu0 0
        %3522 = vmatmul.mubr.bf16.gmra.mxu0 %v3343
        %v3523 = vpop.f32.mrf.mxu0
        %v3524 = vadd.f32 %v3299, %v3523
        %v3525 = vpop.f32.mrf.mxu0
        %v3526 = vpop.f32.mrf.mxu0
        %v3527 = vadd.f32 %v3299, %v3526
        %v3528 = vpop.f32.mrf.mxu0
        %3529 = vmatprep.mubr.bf16.mxu0 0
        %3530 = vmatmul.mubr.bf16.gmra.mxu0 %v3345
        %v3531 = vpop.f32.mrf.mxu0
        %v3532 = vadd.f32 %v3299, %v3531
        %v3533 = vpop.f32.mrf.mxu0
        %v3534 = vpop.f32.mrf.mxu0
        %v3535 = vadd.f32 %v3299, %v3534
        %v3536 = vpop.f32.mrf.mxu0
        %3537 = vmatprep.mubr.bf16.mxu0 0
        %3538 = vmatmul.mubr.bf16.gmra.mxu0 %v3347
        %v3539 = vpop.f32.mrf.mxu0
        %v3540 = vadd.f32 %v3299, %v3539
        %v3541 = vpop.f32.mrf.mxu0
        %v3542 = vpop.f32.mrf.mxu0
        %v3543 = vadd.f32 %v3299, %v3542
        %v3544 = vpop.f32.mrf.mxu0
        %3545 = vmatprep.mubr.bf16.mxu0 0
        %3546 = vmatmul.mubr.bf16.gmra.mxu0 %v3349
        %v3547 = vpop.f32.mrf.mxu0
        %v3548 = vadd.f32 %v3299, %v3547
        %v3549 = vpop.f32.mrf.mxu0
        %v3550 = vpop.f32.mrf.mxu0
        %v3551 = vadd.f32 %v3299, %v3550
        %v3552 = vpop.f32.mrf.mxu0
        %3553 = vmatprep.mubr.bf16.mxu0 0
        %3554 = vmatmul.mubr.bf16.gmra.mxu0 %v3351
        %v3555 = vpop.f32.mrf.mxu0
        %v3556 = vadd.f32 %v3299, %v3555
        %v3557 = vpop.f32.mrf.mxu0
        %v3558 = vpop.f32.mrf.mxu0
        %v3559 = vadd.f32 %v3299, %v3558
        %v3560 = vpop.f32.mrf.mxu0
        %3561 = vmatprep.mubr.bf16.mxu0 0
        %3562 = vmatmul.mubr.bf16.gmra.mxu0 %v3353
        %v3563 = vpop.f32.mrf.mxu0
        %v3564 = vadd.f32 %v3299, %v3563
        %v3565 = vpop.f32.mrf.mxu0
        %v3566 = vpop.f32.mrf.mxu0
        %v3567 = vadd.f32 %v3299, %v3566
        %v3568 = vpop.f32.mrf.mxu0
        %3569 = vmatprep.mubr.bf16.mxu0 0
        %3570 = vmatmul.mubr.bf16.gmra.mxu0 %v3355
        %v3571 = vpop.f32.mrf.mxu0
        %v3572 = vadd.f32 %v3299, %v3571
        %v3573 = vpop.f32.mrf.mxu0
        %v3574 = vpop.f32.mrf.mxu0
        %v3575 = vadd.f32 %v3299, %v3574
        %v3576 = vpop.f32.mrf.mxu0
        %3577 = vmatprep.mubr.bf16.mxu0 0
        %3578 = vmatmul.mubr.bf16.gmra.mxu0 %v3357
        %v3579 = vpop.f32.mrf.mxu0
        %v3580 = vadd.f32 %v3299, %v3579
        %v3581 = vpop.f32.mrf.mxu0
        %v3582 = vpop.f32.mrf.mxu0
        %v3583 = vadd.f32 %v3299, %v3582
        %v3584 = vpop.f32.mrf.mxu0
        %3585 = vmatprep.mubr.bf16.mxu0 0
        %3586 = vmatmul.mubr.bf16.gmra.mxu0 %v3359
        %v3587 = vpop.f32.mrf.mxu0
        %v3588 = vadd.f32 %v3299, %v3587
        %v3589 = vpop.f32.mrf.mxu0
        %v3590 = vpop.f32.mrf.mxu0
        %v3591 = vadd.f32 %v3299, %v3590
        %v3592 = vpop.f32.mrf.mxu0
        %3593 = vmatprep.mubr.bf16.mxu0 0
        %3594 = vmatmul.mubr.bf16.gmra.mxu0 %v3361
        %v3595 = vpop.f32.mrf.mxu0
        %v3596 = vadd.f32 %v3299, %v3595
        %v3597 = vpop.f32.mrf.mxu0
        %v3598 = vpop.f32.mrf.mxu0
        %v3599 = vadd.f32 %v3299, %v3598
        %v3600 = vpop.f32.mrf.mxu0
        %3601 = vmatprep.mubr.bf16.mxu0 0
        %3602 = vmatmul.mubr.bf16.gmra.mxu0 %v3363
        %v3603 = vpop.f32.mrf.mxu0
        %v3604 = vadd.f32 %v3299, %v3603
        %v3605 = vpop.f32.mrf.mxu0
        %v3606 = vpop.f32.mrf.mxu0
        %v3607 = vadd.f32 %v3299, %v3606
        %v3608 = vpop.f32.mrf.mxu0
        %3609 = vmatprep.mubr.bf16.mxu0 0
        %3610 = vmatmul.mubr.bf16.gmra.mxu0 %v3365
        %v3611 = vpop.f32.mrf.mxu0
        %v3612 = vadd.f32 %v3299, %v3611
        %v3613 = vpop.f32.mrf.mxu0
        %v3614 = vpop.f32.mrf.mxu0
        %v3615 = vadd.f32 %v3299, %v3614
        %v3616 = vpop.f32.mrf.mxu0
        %3617 = vmatprep.mubr.bf16.mxu0 0
        %3618 = vmatmul.mubr.bf16.gmra.mxu0 %v3367
        %v3619 = vpop.f32.mrf.mxu0
        %v3620 = vadd.f32 %v3299, %v3619
        %v3621 = vpop.f32.mrf.mxu0
        %v3622 = vpop.f32.mrf.mxu0
        %v3623 = vadd.f32 %v3299, %v3622
        %v3624 = vpop.f32.mrf.mxu0
        %3625 = vmatprep.mubr.bf16.mxu0 0
        %3626 = vmatmul.mubr.bf16.gmra.mxu0 %v3369
        %v3627 = vpop.f32.mrf.mxu0
        %v3628 = vadd.f32 %v3299, %v3627
        %v3629 = vpop.f32.mrf.mxu0
        %v3630 = vpop.f32.mrf.mxu0
        %v3631 = vadd.f32 %v3299, %v3630
        %v3632 = vpop.f32.mrf.mxu0
        %3633 = vmatprep.mubr.bf16.mxu0 0
        %3634 = vmatmul.mubr.bf16.gmra.mxu0 %v3371
        %v3635 = vpop.f32.mrf.mxu0
        %v3636 = vadd.f32 %v3299, %v3635
        %v3637 = vpop.f32.mrf.mxu0
        %v3638 = vpop.f32.mrf.mxu0
        %v3639 = vadd.f32 %v3299, %v3638
        %v3640 = vpop.f32.mrf.mxu0
        %3641 = vmatprep.mubr.bf16.mxu0 0
        %3642 = vmatmul.mubr.bf16.gmra.mxu0 %v3373
        %v3643 = vpop.f32.mrf.mxu0
        %v3644 = vadd.f32 %v3299, %v3643
        %v3645 = vpop.f32.mrf.mxu0
        %v3646 = vpop.f32.mrf.mxu0
        %v3647 = vadd.f32 %v3299, %v3646
        %v3648 = vpop.f32.mrf.mxu0
        %3649 = vmatprep.mubr.bf16.mxu0 0
        %3650 = vmatmul.mubr.bf16.gmra.mxu0 %v3375
        %v3651 = vpop.f32.mrf.mxu0
        %v3652 = vadd.f32 %v3299, %v3651
        %v3653 = vpop.f32.mrf.mxu0
        %v3654 = vpop.f32.mrf.mxu0
        %v3655 = vadd.f32 %v3299, %v3654
        %v3656 = vpop.f32.mrf.mxu0
        %3657 = vmatprep.mubr.bf16.mxu0 0
        %3658 = vmatmul.mubr.bf16.gmra.mxu0 %v3377
        %v3659 = vpop.f32.mrf.mxu0
        %v3660 = vadd.f32 %v3299, %v3659
        %v3661 = vpop.f32.mrf.mxu0
        %v3662 = vpop.f32.mrf.mxu0
        %v3663 = vadd.f32 %v3299, %v3662
        %v3664 = vpop.f32.mrf.mxu0
        %3665 = vmatprep.mubr.bf16.mxu0 0
        %3666 = vmatmul.mubr.bf16.gmra.mxu0 %v3379
        %v3667 = vpop.f32.mrf.mxu0
        %v3668 = vadd.f32 %v3299, %v3667
        %v3669 = vpop.f32.mrf.mxu0
        %v3670 = vpop.f32.mrf.mxu0
        %v3671 = vadd.f32 %v3299, %v3670
        %v3672 = vpop.f32.mrf.mxu0
        %3673 = vdwg.mxu0
        %v3674 = vmax.f32 %v3420, 0.0
        %v3675 = vmax.f32 %v3423, 0.0
        %v3676 = vmax.f32 %v3428, 0.0
        %v3677 = vmax.f32 %v3431, 0.0
        %v3678 = vmax.f32 %v3436, 0.0
        %v3679 = vmax.f32 %v3439, 0.0
        %v3680 = vmax.f32 %v3444, 0.0
        %v3681 = vmax.f32 %v3447, 0.0
        %v3682 = vmax.f32 %v3452, 0.0
        %v3683 = vmax.f32 %v3455, 0.0
        %v3684 = vmax.f32 %v3460, 0.0
        %v3685 = vmax.f32 %v3463, 0.0
        %v3686 = vmax.f32 %v3468, 0.0
        %v3687 = vmax.f32 %v3471, 0.0
        %v3688 = vmax.f32 %v3476, 0.0
        %v3689 = vmax.f32 %v3479, 0.0
        %v3690 = vmax.f32 %v3484, 0.0
        %v3691 = vmax.f32 %v3487, 0.0
        %v3692 = vmax.f32 %v3492, 0.0
        %v3693 = vmax.f32 %v3495, 0.0
        %v3694 = vmax.f32 %v3500, 0.0
        %v3695 = vmax.f32 %v3503, 0.0
        %v3696 = vmax.f32 %v3508, 0.0
        %v3697 = vmax.f32 %v3511, 0.0
        %v3698 = vmax.f32 %v3516, 0.0
        %v3699 = vmax.f32 %v3519, 0.0
        %v3700 = vmax.f32 %v3524, 0.0
        %v3701 = vmax.f32 %v3527, 0.0
        %v3702 = vmax.f32 %v3532, 0.0
        %v3703 = vmax.f32 %v3535, 0.0
        %v3704 = vmax.f32 %v3540, 0.0
        %v3705 = vmax.f32 %v3543, 0.0
        %v3706 = vmax.f32 %v3548, 0.0
        %v3707 = vmax.f32 %v3551, 0.0
        %v3708 = vmax.f32 %v3556, 0.0
        %v3709 = vmax.f32 %v3559, 0.0
        %v3710 = vmax.f32 %v3564, 0.0
        %v3711 = vmax.f32 %v3567, 0.0
        %v3712 = vmax.f32 %v3572, 0.0
        %v3713 = vmax.f32 %v3575, 0.0
        %v3714 = vmax.f32 %v3580, 0.0
        %v3715 = vmax.f32 %v3583, 0.0
        %v3716 = vmax.f32 %v3588, 0.0
        %v3717 = vmax.f32 %v3591, 0.0
        %v3718 = vmax.f32 %v3596, 0.0
        %v3719 = vmax.f32 %v3599, 0.0
        %v3720 = vmax.f32 %v3604, 0.0
        %v3721 = vmax.f32 %v3607, 0.0
        %v3722 = vmax.f32 %v3612, 0.0
        %v3723 = vmax.f32 %v3615, 0.0
        %v3724 = vmax.f32 %v3620, 0.0
        %v3725 = vmax.f32 %v3623, 0.0
        %v3726 = vmax.f32 %v3628, 0.0
        %v3727 = vmax.f32 %v3631, 0.0
        %v3728 = vmax.f32 %v3636, 0.0
        %v3729 = vmax.f32 %v3639, 0.0
        %v3730 = vmax.f32 %v3644, 0.0
        %v3731 = vmax.f32 %v3647, 0.0
        %v3732 = vmax.f32 %v3652, 0.0
        %v3733 = vmax.f32 %v3655, 0.0
        %v3734 = vmax.f32 %v3660, 0.0
        %v3735 = vmax.f32 %v3663, 0.0
        %v3736 = vmax.f32 %v3668, 0.0
        %v3737 = vmax.f32 %v3671, 0.0
        %v3738 = vpack.c.bf16 %v3675, %v3674
        %v3739 = vpack.c.bf16 %v3677, %v3676
        %v3740 = vpack.c.bf16 %v3679, %v3678
        %v3741 = vpack.c.bf16 %v3681, %v3680
        %v3742 = vpack.c.bf16 %v3683, %v3682
        %v3743 = vpack.c.bf16 %v3685, %v3684
        %v3744 = vpack.c.bf16 %v3687, %v3686
        %v3745 = vpack.c.bf16 %v3689, %v3688
        %v3746 = vpack.c.bf16 %v3691, %v3690
        %v3747 = vpack.c.bf16 %v3693, %v3692
        %v3748 = vpack.c.bf16 %v3695, %v3694
        %v3749 = vpack.c.bf16 %v3697, %v3696
        %v3750 = vpack.c.bf16 %v3699, %v3698
        %v3751 = vpack.c.bf16 %v3701, %v3700
        %v3752 = vpack.c.bf16 %v3703, %v3702
        %v3753 = vpack.c.bf16 %v3705, %v3704
        %v3754 = vpack.c.bf16 %v3707, %v3706
        %v3755 = vpack.c.bf16 %v3709, %v3708
        %v3756 = vpack.c.bf16 %v3711, %v3710
        %v3757 = vpack.c.bf16 %v3713, %v3712
        %v3758 = vpack.c.bf16 %v3715, %v3714
        %v3759 = vpack.c.bf16 %v3717, %v3716
        %v3760 = vpack.c.bf16 %v3719, %v3718
        %v3761 = vpack.c.bf16 %v3721, %v3720
        %v3762 = vpack.c.bf16 %v3723, %v3722
        %v3763 = vpack.c.bf16 %v3725, %v3724
        %v3764 = vpack.c.bf16 %v3727, %v3726
        %v3765 = vpack.c.bf16 %v3729, %v3728
        %v3766 = vpack.c.bf16 %v3731, %v3730
        %v3767 = vpack.c.bf16 %v3733, %v3732
        %v3768 = vpack.c.bf16 %v3735, %v3734
        %v3769 = vpack.c.bf16 %v3737, %v3736
        %v3770 = vld [vmem:[%s5] sm:$0x3]
        %v3771 = vld [vmem:[%s280] sm:$0xff]
        %v3772 = vld [vmem:[%s280 + $0x8] sm:$0xff]
        %v3773 = vld [vmem:[%s280 + $0x10] sm:$0xff]
        %v3774 = vld [vmem:[%s280 + $0x18] sm:$0xff]
        %v3775 = vld [vmem:[%s280 + $0x20] sm:$0xff]
        %v3776 = vld [vmem:[%s280 + $0x28] sm:$0xff]
        %v3777 = vld [vmem:[%s280 + $0x30] sm:$0xff]
        %v3778 = vld [vmem:[%s280 + $0x38] sm:$0xff]
        %v3779 = vld [vmem:[%s280 + $0x40] sm:$0xff]
        %v3780 = vld [vmem:[%s280 + $0x48] sm:$0xff]
        %v3781 = vld [vmem:[%s280 + $0x50] sm:$0xff]
        %v3782 = vld [vmem:[%s280 + $0x58] sm:$0xff]
        %v3783 = vld [vmem:[%s280 + $0x60] sm:$0xff]
        %v3784 = vld [vmem:[%s280 + $0x68] sm:$0xff]
        %v3785 = vld [vmem:[%s280 + $0x70] sm:$0xff]
        %v3786 = vld [vmem:[%s280 + $0x78] sm:$0xff]
        %v3787 = vld [vmem:[%s280 + $0x80] sm:$0xff]
        %v3788 = vld [vmem:[%s280 + $0x88] sm:$0xff]
        %v3789 = vld [vmem:[%s280 + $0x90] sm:$0xff]
        %v3790 = vld [vmem:[%s280 + $0x98] sm:$0xff]
        %v3791 = vld [vmem:[%s280 + $0xa0] sm:$0xff]
        %v3792 = vld [vmem:[%s280 + $0xa8] sm:$0xff]
        %v3793 = vld [vmem:[%s280 + $0xb0] sm:$0xff]
        %v3794 = vld [vmem:[%s280 + $0xb8] sm:$0xff]
        %v3795 = vld [vmem:[%s280 + $0xc0] sm:$0xff]
        %v3796 = vld [vmem:[%s280 + $0xc8] sm:$0xff]
        %v3797 = vld [vmem:[%s280 + $0xd0] sm:$0xff]
        %v3798 = vld [vmem:[%s280 + $0xd8] sm:$0xff]
        %v3799 = vld [vmem:[%s280 + $0xe0] sm:$0xff]
        %v3800 = vld [vmem:[%s280 + $0xe8] sm:$0xff]
        %v3801 = vld [vmem:[%s280 + $0xf0] sm:$0xff]
        %v3802 = vld [vmem:[%s280 + $0xf8] sm:$0xff]
        %v3803 = vld [vmem:[%s280 + $0x100] sm:$0xff]
        %v3804 = vld [vmem:[%s280 + $0x108] sm:$0xff]
        %v3805 = vld [vmem:[%s280 + $0x110] sm:$0xff]
        %v3806 = vld [vmem:[%s280 + $0x118] sm:$0xff]
        %v3807 = vld [vmem:[%s280 + $0x120] sm:$0xff]
        %v3808 = vld [vmem:[%s280 + $0x128] sm:$0xff]
        %v3809 = vld [vmem:[%s280 + $0x130] sm:$0xff]
        %v3810 = vld [vmem:[%s280 + $0x138] sm:$0xff]
        %v3811 = vld [vmem:[%s280 + $0x140] sm:$0xff]
        %v3812 = vld [vmem:[%s280 + $0x148] sm:$0xff]
        %v3813 = vld [vmem:[%s280 + $0x150] sm:$0xff]
        %v3814 = vld [vmem:[%s280 + $0x158] sm:$0xff]
        %v3815 = vld [vmem:[%s280 + $0x160] sm:$0xff]
        %v3816 = vld [vmem:[%s280 + $0x168] sm:$0xff]
        %v3817 = vld [vmem:[%s280 + $0x170] sm:$0xff]
        %v3818 = vld [vmem:[%s280 + $0x178] sm:$0xff]
        %v3819 = vld [vmem:[%s280 + $0x180] sm:$0xff]
        %v3820 = vld [vmem:[%s280 + $0x188] sm:$0xff]
        %v3821 = vld [vmem:[%s280 + $0x190] sm:$0xff]
        %v3822 = vld [vmem:[%s280 + $0x198] sm:$0xff]
        %v3823 = vld [vmem:[%s280 + $0x1a0] sm:$0xff]
        %v3824 = vld [vmem:[%s280 + $0x1a8] sm:$0xff]
        %v3825 = vld [vmem:[%s280 + $0x1b0] sm:$0xff]
        %v3826 = vld [vmem:[%s280 + $0x1b8] sm:$0xff]
        %v3827 = vld [vmem:[%s280 + $0x1c0] sm:$0xff]
        %v3828 = vld [vmem:[%s280 + $0x1c8] sm:$0xff]
        %v3829 = vld [vmem:[%s280 + $0x1d0] sm:$0xff]
        %v3830 = vld [vmem:[%s280 + $0x1d8] sm:$0xff]
        %v3831 = vld [vmem:[%s280 + $0x1e0] sm:$0xff]
        %v3832 = vld [vmem:[%s280 + $0x1e8] sm:$0xff]
        %v3833 = vld [vmem:[%s280 + $0x1f0] sm:$0xff]
        %v3834 = vld [vmem:[%s280 + $0x1f8] sm:$0xff]
        %v3835 = vld [vmem:[%s6] sm:$0x1]
        %v3837 = vlaneseq
        %v3838 = vshrl.u32 %v3837, 7
        %v3839 = vsub.s32 0, %v3838
        %v3840 = vrot.slane %v3835, %v3839
        %v3843 = vsel %vm845, %v3738, 0
        %v3846 = vsel %vm845, %v3739, 0
        %v3849 = vsel %vm845, %v3740, 0
        %v3852 = vsel %vm845, %v3741, 0
        %v3855 = vsel %vm845, %v3742, 0
        %v3858 = vsel %vm845, %v3743, 0
        %v3861 = vsel %vm845, %v3744, 0
        %v3864 = vsel %vm845, %v3745, 0
        %v3867 = vsel %vm845, %v3746, 0
        %v3870 = vsel %vm845, %v3747, 0
        %v3873 = vsel %vm845, %v3748, 0
        %v3876 = vsel %vm845, %v3749, 0
        %v3879 = vsel %vm845, %v3750, 0
        %v3882 = vsel %vm845, %v3751, 0
        %v3885 = vsel %vm845, %v3752, 0
        %v3888 = vsel %vm845, %v3753, 0
        %v3891 = vsel %vm845, %v3754, 0
        %v3894 = vsel %vm845, %v3755, 0
        %v3897 = vsel %vm845, %v3756, 0
        %v3900 = vsel %vm845, %v3757, 0
        %v3903 = vsel %vm845, %v3758, 0
        %v3906 = vsel %vm845, %v3759, 0
        %v3909 = vsel %vm845, %v3760, 0
        %v3912 = vsel %vm845, %v3761, 0
        %v3915 = vsel %vm845, %v3762, 0
        %v3918 = vsel %vm845, %v3763, 0
        %v3921 = vsel %vm845, %v3764, 0
        %v3924 = vsel %vm845, %v3765, 0
        %v3927 = vsel %vm845, %v3766, 0
        %v3930 = vsel %vm845, %v3767, 0
        %v3933 = vsel %vm845, %v3768, 0
        %v3936 = vsel %vm845, %v3769, 0
        %v3939 = vsel %vm3381, %v3770, 0
        %3941 = vmatprep.subr.bf16.mxu0 0
        %3942 = vmatpush1.bf16.msra.mxu0 0
        %3943 = vmatprep.subr.bf16.mxu0 0
        %3944 = vmatpush1.bf16.msra.mxu0 0
        %3945 = vmatprep.subr.bf16.mxu0 0
        %3946 = vmatpush1.bf16.msra.mxu0 0
        %3947 = vmatprep.subr.bf16.mxu0 0
        %3948 = vmatpush1.bf16.msra.mxu0 0
        %3949 = vmatprep.subr.bf16.mxu0 0
        %3950 = vmatpush1.bf16.msra.mxu0 0
        %3951 = vmatprep.subr.bf16.mxu0 0
        %3952 = vmatpush1.bf16.msra.mxu0 0
        %3953 = vmatprep.subr.bf16.mxu0 0
        %3954 = vmatpush1.bf16.msra.mxu0 0
        %3955 = vmatprep.subr.bf16.mxu0 0
        %3956 = vmatpush1.bf16.msra.mxu0 %v3939
        %3957 = vmatprep.subr.bf16.mxu0 0
        %3958 = vmatpush2.bf16.msra.mxu0 0
        %3959 = vmatprep.subr.bf16.mxu0 0
        %3960 = vmatpush2.bf16.msra.mxu0 0
        %3961 = vmatprep.subr.bf16.mxu0 0
        %3962 = vmatpush2.bf16.msra.mxu0 0
        %3963 = vmatprep.subr.bf16.mxu0 0
        %3964 = vmatpush2.bf16.msra.mxu0 0
        %3965 = vmatprep.subr.bf16.mxu0 0
        %3966 = vmatpush2.bf16.msra.mxu0 0
        %3967 = vmatprep.subr.bf16.mxu0 0
        %3968 = vmatpush2.bf16.msra.mxu0 0
        %3969 = vmatprep.subr.bf16.mxu0 0
        %3970 = vmatpush2.bf16.msra.mxu0 0
        %3971 = vmatprep.subr.bf16.mxu0 0
        %3972 = vmatpush2.bf16.msra.mxu0 0
        %3973 = vmatprep.mubr.bf16.mxu0 0
        %3974 = vmatmul.mubr.bf16.gmra.mxu0 %v3843
        %v3975 = vpop.f32.mrf.mxu0
        %v3976 = vadd.f32 %v3840, %v3975
        %v3977 = vpop.f32.mrf.mxu0
        %v3978 = vpop.f32.mrf.mxu0
        %v3979 = vadd.f32 %v3840, %v3978
        %v3980 = vpop.f32.mrf.mxu0
        %3981 = vmatprep.mubr.bf16.mxu0 0
        %3982 = vmatmul.mubr.bf16.gmra.mxu0 %v3846
        %v3983 = vpop.f32.mrf.mxu0
        %v3984 = vadd.f32 %v3840, %v3983
        %v3985 = vpop.f32.mrf.mxu0
        %v3986 = vpop.f32.mrf.mxu0
        %v3987 = vadd.f32 %v3840, %v3986
        %v3988 = vpop.f32.mrf.mxu0
        %3989 = vmatprep.mubr.bf16.mxu0 0
        %3990 = vmatmul.mubr.bf16.gmra.mxu0 %v3849
        %v3991 = vpop.f32.mrf.mxu0
        %v3992 = vadd.f32 %v3840, %v3991
        %v3993 = vpop.f32.mrf.mxu0
        %v3994 = vpop.f32.mrf.mxu0
        %v3995 = vadd.f32 %v3840, %v3994
        %v3996 = vpop.f32.mrf.mxu0
        %3997 = vmatprep.mubr.bf16.mxu0 0
        %3998 = vmatmul.mubr.bf16.gmra.mxu0 %v3852
        %v3999 = vpop.f32.mrf.mxu0
        %v4000 = vadd.f32 %v3840, %v3999
        %v4001 = vpop.f32.mrf.mxu0
        %v4002 = vpop.f32.mrf.mxu0
        %v4003 = vadd.f32 %v3840, %v4002
        %v4004 = vpop.f32.mrf.mxu0
        %4005 = vmatprep.mubr.bf16.mxu0 0
        %4006 = vmatmul.mubr.bf16.gmra.mxu0 %v3855
        %v4007 = vpop.f32.mrf.mxu0
        %v4008 = vadd.f32 %v3840, %v4007
        %v4009 = vpop.f32.mrf.mxu0
        %v4010 = vpop.f32.mrf.mxu0
        %v4011 = vadd.f32 %v3840, %v4010
        %v4012 = vpop.f32.mrf.mxu0
        %4013 = vmatprep.mubr.bf16.mxu0 0
        %4014 = vmatmul.mubr.bf16.gmra.mxu0 %v3858
        %v4015 = vpop.f32.mrf.mxu0
        %v4016 = vadd.f32 %v3840, %v4015
        %v4017 = vpop.f32.mrf.mxu0
        %v4018 = vpop.f32.mrf.mxu0
        %v4019 = vadd.f32 %v3840, %v4018
        %v4020 = vpop.f32.mrf.mxu0
        %4021 = vmatprep.mubr.bf16.mxu0 0
        %4022 = vmatmul.mubr.bf16.gmra.mxu0 %v3861
        %v4023 = vpop.f32.mrf.mxu0
        %v4024 = vadd.f32 %v3840, %v4023
        %v4025 = vpop.f32.mrf.mxu0
        %v4026 = vpop.f32.mrf.mxu0
        %v4027 = vadd.f32 %v3840, %v4026
        %v4028 = vpop.f32.mrf.mxu0
        %4029 = vmatprep.mubr.bf16.mxu0 0
        %4030 = vmatmul.mubr.bf16.gmra.mxu0 %v3864
        %v4031 = vpop.f32.mrf.mxu0
        %v4032 = vadd.f32 %v3840, %v4031
        %v4033 = vpop.f32.mrf.mxu0
        %v4034 = vpop.f32.mrf.mxu0
        %v4035 = vadd.f32 %v3840, %v4034
        %v4036 = vpop.f32.mrf.mxu0
        %4037 = vmatprep.mubr.bf16.mxu0 0
        %4038 = vmatmul.mubr.bf16.gmra.mxu0 %v3867
        %v4039 = vpop.f32.mrf.mxu0
        %v4040 = vadd.f32 %v3840, %v4039
        %v4041 = vpop.f32.mrf.mxu0
        %v4042 = vpop.f32.mrf.mxu0
        %v4043 = vadd.f32 %v3840, %v4042
        %v4044 = vpop.f32.mrf.mxu0
        %4045 = vmatprep.mubr.bf16.mxu0 0
        %4046 = vmatmul.mubr.bf16.gmra.mxu0 %v3870
        %v4047 = vpop.f32.mrf.mxu0
        %v4048 = vadd.f32 %v3840, %v4047
        %v4049 = vpop.f32.mrf.mxu0
        %v4050 = vpop.f32.mrf.mxu0
        %v4051 = vadd.f32 %v3840, %v4050
        %v4052 = vpop.f32.mrf.mxu0
        %4053 = vmatprep.mubr.bf16.mxu0 0
        %4054 = vmatmul.mubr.bf16.gmra.mxu0 %v3873
        %v4055 = vpop.f32.mrf.mxu0
        %v4056 = vadd.f32 %v3840, %v4055
        %v4057 = vpop.f32.mrf.mxu0
        %v4058 = vpop.f32.mrf.mxu0
        %v4059 = vadd.f32 %v3840, %v4058
        %v4060 = vpop.f32.mrf.mxu0
        %4061 = vmatprep.mubr.bf16.mxu0 0
        %4062 = vmatmul.mubr.bf16.gmra.mxu0 %v3876
        %v4063 = vpop.f32.mrf.mxu0
        %v4064 = vadd.f32 %v3840, %v4063
        %v4065 = vpop.f32.mrf.mxu0
        %v4066 = vpop.f32.mrf.mxu0
        %v4067 = vadd.f32 %v3840, %v4066
        %v4068 = vpop.f32.mrf.mxu0
        %4069 = vmatprep.mubr.bf16.mxu0 0
        %4070 = vmatmul.mubr.bf16.gmra.mxu0 %v3879
        %v4071 = vpop.f32.mrf.mxu0
        %v4072 = vadd.f32 %v3840, %v4071
        %v4073 = vpop.f32.mrf.mxu0
        %v4074 = vpop.f32.mrf.mxu0
        %v4075 = vadd.f32 %v3840, %v4074
        %v4076 = vpop.f32.mrf.mxu0
        %4077 = vmatprep.mubr.bf16.mxu0 0
        %4078 = vmatmul.mubr.bf16.gmra.mxu0 %v3882
        %v4079 = vpop.f32.mrf.mxu0
        %v4080 = vadd.f32 %v3840, %v4079
        %v4081 = vpop.f32.mrf.mxu0
        %v4082 = vpop.f32.mrf.mxu0
        %v4083 = vadd.f32 %v3840, %v4082
        %v4084 = vpop.f32.mrf.mxu0
        %4085 = vmatprep.mubr.bf16.mxu0 0
        %4086 = vmatmul.mubr.bf16.gmra.mxu0 %v3885
        %v4087 = vpop.f32.mrf.mxu0
        %v4088 = vadd.f32 %v3840, %v4087
        %v4089 = vpop.f32.mrf.mxu0
        %v4090 = vpop.f32.mrf.mxu0
        %v4091 = vadd.f32 %v3840, %v4090
        %v4092 = vpop.f32.mrf.mxu0
        %4093 = vmatprep.mubr.bf16.mxu0 0
        %4094 = vmatmul.mubr.bf16.gmra.mxu0 %v3888
        %v4095 = vpop.f32.mrf.mxu0
        %v4096 = vadd.f32 %v3840, %v4095
        %v4097 = vpop.f32.mrf.mxu0
        %v4098 = vpop.f32.mrf.mxu0
        %v4099 = vadd.f32 %v3840, %v4098
        %v4100 = vpop.f32.mrf.mxu0
        %4101 = vmatprep.mubr.bf16.mxu0 0
        %4102 = vmatmul.mubr.bf16.gmra.mxu0 %v3891
        %v4103 = vpop.f32.mrf.mxu0
        %v4104 = vadd.f32 %v3840, %v4103
        %v4105 = vpop.f32.mrf.mxu0
        %v4106 = vpop.f32.mrf.mxu0
        %v4107 = vadd.f32 %v3840, %v4106
        %v4108 = vpop.f32.mrf.mxu0
        %4109 = vmatprep.mubr.bf16.mxu0 0
        %4110 = vmatmul.mubr.bf16.gmra.mxu0 %v3894
        %v4111 = vpop.f32.mrf.mxu0
        %v4112 = vadd.f32 %v3840, %v4111
        %v4113 = vpop.f32.mrf.mxu0
        %v4114 = vpop.f32.mrf.mxu0
        %v4115 = vadd.f32 %v3840, %v4114
        %v4116 = vpop.f32.mrf.mxu0
        %4117 = vmatprep.mubr.bf16.mxu0 0
        %4118 = vmatmul.mubr.bf16.gmra.mxu0 %v3897
        %v4119 = vpop.f32.mrf.mxu0
        %v4120 = vadd.f32 %v3840, %v4119
        %v4121 = vpop.f32.mrf.mxu0
        %v4122 = vpop.f32.mrf.mxu0
        %v4123 = vadd.f32 %v3840, %v4122
        %v4124 = vpop.f32.mrf.mxu0
        %4125 = vmatprep.mubr.bf16.mxu0 0
        %4126 = vmatmul.mubr.bf16.gmra.mxu0 %v3900
        %v4127 = vpop.f32.mrf.mxu0
        %v4128 = vadd.f32 %v3840, %v4127
        %v4129 = vpop.f32.mrf.mxu0
        %v4130 = vpop.f32.mrf.mxu0
        %v4131 = vadd.f32 %v3840, %v4130
        %v4132 = vpop.f32.mrf.mxu0
        %4133 = vmatprep.mubr.bf16.mxu0 0
        %4134 = vmatmul.mubr.bf16.gmra.mxu0 %v3903
        %v4135 = vpop.f32.mrf.mxu0
        %v4136 = vadd.f32 %v3840, %v4135
        %v4137 = vpop.f32.mrf.mxu0
        %v4138 = vpop.f32.mrf.mxu0
        %v4139 = vadd.f32 %v3840, %v4138
        %v4140 = vpop.f32.mrf.mxu0
        %4141 = vmatprep.mubr.bf16.mxu0 0
        %4142 = vmatmul.mubr.bf16.gmra.mxu0 %v3906
        %v4143 = vpop.f32.mrf.mxu0
        %v4144 = vadd.f32 %v3840, %v4143
        %v4145 = vpop.f32.mrf.mxu0
        %v4146 = vpop.f32.mrf.mxu0
        %v4147 = vadd.f32 %v3840, %v4146
        %v4148 = vpop.f32.mrf.mxu0
        %4149 = vmatprep.mubr.bf16.mxu0 0
        %4150 = vmatmul.mubr.bf16.gmra.mxu0 %v3909
        %v4151 = vpop.f32.mrf.mxu0
        %v4152 = vadd.f32 %v3840, %v4151
        %v4153 = vpop.f32.mrf.mxu0
        %v4154 = vpop.f32.mrf.mxu0
        %v4155 = vadd.f32 %v3840, %v4154
        %v4156 = vpop.f32.mrf.mxu0
        %4157 = vmatprep.mubr.bf16.mxu0 0
        %4158 = vmatmul.mubr.bf16.gmra.mxu0 %v3912
        %v4159 = vpop.f32.mrf.mxu0
        %v4160 = vadd.f32 %v3840, %v4159
        %v4161 = vpop.f32.mrf.mxu0
        %v4162 = vpop.f32.mrf.mxu0
        %v4163 = vadd.f32 %v3840, %v4162
        %v4164 = vpop.f32.mrf.mxu0
        %4165 = vmatprep.mubr.bf16.mxu0 0
        %4166 = vmatmul.mubr.bf16.gmra.mxu0 %v3915
        %v4167 = vpop.f32.mrf.mxu0
        %v4168 = vadd.f32 %v3840, %v4167
        %v4169 = vpop.f32.mrf.mxu0
        %v4170 = vpop.f32.mrf.mxu0
        %v4171 = vadd.f32 %v3840, %v4170
        %v4172 = vpop.f32.mrf.mxu0
        %4173 = vmatprep.mubr.bf16.mxu0 0
        %4174 = vmatmul.mubr.bf16.gmra.mxu0 %v3918
        %v4175 = vpop.f32.mrf.mxu0
        %v4176 = vadd.f32 %v3840, %v4175
        %v4177 = vpop.f32.mrf.mxu0
        %v4178 = vpop.f32.mrf.mxu0
        %v4179 = vadd.f32 %v3840, %v4178
        %v4180 = vpop.f32.mrf.mxu0
        %4181 = vmatprep.mubr.bf16.mxu0 0
        %4182 = vmatmul.mubr.bf16.gmra.mxu0 %v3921
        %v4183 = vpop.f32.mrf.mxu0
        %v4184 = vadd.f32 %v3840, %v4183
        %v4185 = vpop.f32.mrf.mxu0
        %v4186 = vpop.f32.mrf.mxu0
        %v4187 = vadd.f32 %v3840, %v4186
        %v4188 = vpop.f32.mrf.mxu0
        %4189 = vmatprep.mubr.bf16.mxu0 0
        %4190 = vmatmul.mubr.bf16.gmra.mxu0 %v3924
        %v4191 = vpop.f32.mrf.mxu0
        %v4192 = vadd.f32 %v3840, %v4191
        %v4193 = vpop.f32.mrf.mxu0
        %v4194 = vpop.f32.mrf.mxu0
        %v4195 = vadd.f32 %v3840, %v4194
        %v4196 = vpop.f32.mrf.mxu0
        %4197 = vmatprep.mubr.bf16.mxu0 0
        %4198 = vmatmul.mubr.bf16.gmra.mxu0 %v3927
        %v4199 = vpop.f32.mrf.mxu0
        %v4200 = vadd.f32 %v3840, %v4199
        %v4201 = vpop.f32.mrf.mxu0
        %v4202 = vpop.f32.mrf.mxu0
        %v4203 = vadd.f32 %v3840, %v4202
        %v4204 = vpop.f32.mrf.mxu0
        %4205 = vmatprep.mubr.bf16.mxu0 0
        %4206 = vmatmul.mubr.bf16.gmra.mxu0 %v3930
        %v4207 = vpop.f32.mrf.mxu0
        %v4208 = vadd.f32 %v3840, %v4207
        %v4209 = vpop.f32.mrf.mxu0
        %v4210 = vpop.f32.mrf.mxu0
        %v4211 = vadd.f32 %v3840, %v4210
        %v4212 = vpop.f32.mrf.mxu0
        %4213 = vmatprep.mubr.bf16.mxu0 0
        %4214 = vmatmul.mubr.bf16.gmra.mxu0 %v3933
        %v4215 = vpop.f32.mrf.mxu0
        %v4216 = vadd.f32 %v3840, %v4215
        %v4217 = vpop.f32.mrf.mxu0
        %v4218 = vpop.f32.mrf.mxu0
        %v4219 = vadd.f32 %v3840, %v4218
        %v4220 = vpop.f32.mrf.mxu0
        %4221 = vmatprep.mubr.bf16.mxu0 0
        %4222 = vmatmul.mubr.bf16.gmra.mxu0 %v3936
        %v4223 = vpop.f32.mrf.mxu0
        %v4224 = vadd.f32 %v3840, %v4223
        %v4225 = vpop.f32.mrf.mxu0
        %v4226 = vpop.f32.mrf.mxu0
        %v4227 = vadd.f32 %v3840, %v4226
        %v4228 = vpop.f32.mrf.mxu0
        %4229 = vdwg.mxu0
        %v4230 = vadd.f32 %v3976, %v3771
        %v4231 = vadd.f32 %v3979, %v3772
        %v4232 = vadd.f32 %v3984, %v3773
        %v4233 = vadd.f32 %v3987, %v3774
        %v4234 = vadd.f32 %v3992, %v3775
        %v4235 = vadd.f32 %v3995, %v3776
        %v4236 = vadd.f32 %v4000, %v3777
        %v4237 = vadd.f32 %v4003, %v3778
        %v4238 = vadd.f32 %v4008, %v3779
        %v4239 = vadd.f32 %v4011, %v3780
        %v4240 = vadd.f32 %v4016, %v3781
        %v4241 = vadd.f32 %v4019, %v3782
        %v4242 = vadd.f32 %v4024, %v3783
        %v4243 = vadd.f32 %v4027, %v3784
        %v4244 = vadd.f32 %v4032, %v3785
        %v4245 = vadd.f32 %v4035, %v3786
        %v4246 = vadd.f32 %v4040, %v3787
        %v4247 = vadd.f32 %v4043, %v3788
        %v4248 = vadd.f32 %v4048, %v3789
        %v4249 = vadd.f32 %v4051, %v3790
        %v4250 = vadd.f32 %v4056, %v3791
        %v4251 = vadd.f32 %v4059, %v3792
        %v4252 = vadd.f32 %v4064, %v3793
        %v4253 = vadd.f32 %v4067, %v3794
        %v4254 = vadd.f32 %v4072, %v3795
        %v4255 = vadd.f32 %v4075, %v3796
        %v4256 = vadd.f32 %v4080, %v3797
        %v4257 = vadd.f32 %v4083, %v3798
        %v4258 = vadd.f32 %v4088, %v3799
        %v4259 = vadd.f32 %v4091, %v3800
        %v4260 = vadd.f32 %v4096, %v3801
        %v4261 = vadd.f32 %v4099, %v3802
        %v4262 = vadd.f32 %v4104, %v3803
        %v4263 = vadd.f32 %v4107, %v3804
        %v4264 = vadd.f32 %v4112, %v3805
        %v4265 = vadd.f32 %v4115, %v3806
        %v4266 = vadd.f32 %v4120, %v3807
        %v4267 = vadd.f32 %v4123, %v3808
        %v4268 = vadd.f32 %v4128, %v3809
        %v4269 = vadd.f32 %v4131, %v3810
        %v4270 = vadd.f32 %v4136, %v3811
        %v4271 = vadd.f32 %v4139, %v3812
        %v4272 = vadd.f32 %v4144, %v3813
        %v4273 = vadd.f32 %v4147, %v3814
        %v4274 = vadd.f32 %v4152, %v3815
        %v4275 = vadd.f32 %v4155, %v3816
        %v4276 = vadd.f32 %v4160, %v3817
        %v4277 = vadd.f32 %v4163, %v3818
        %v4278 = vadd.f32 %v4168, %v3819
        %v4279 = vadd.f32 %v4171, %v3820
        %v4280 = vadd.f32 %v4176, %v3821
        %v4281 = vadd.f32 %v4179, %v3822
        %v4282 = vadd.f32 %v4184, %v3823
        %v4283 = vadd.f32 %v4187, %v3824
        %v4284 = vadd.f32 %v4192, %v3825
        %v4285 = vadd.f32 %v4195, %v3826
        %v4286 = vadd.f32 %v4200, %v3827
        %v4287 = vadd.f32 %v4203, %v3828
        %v4288 = vadd.f32 %v4208, %v3829
        %v4289 = vadd.f32 %v4211, %v3830
        %v4290 = vadd.f32 %v4216, %v3831
        %v4291 = vadd.f32 %v4219, %v3832
        %v4292 = vadd.f32 %v4224, %v3833
        %v4293 = vadd.f32 %v4227, %v3834
        %v4294 = vmax.f32 %v4230, 0.0
        %v4295 = vmax.f32 %v4231, 0.0
        %v4296 = vmax.f32 %v4232, 0.0
        %v4297 = vmax.f32 %v4233, 0.0
        %v4298 = vmax.f32 %v4234, 0.0
        %v4299 = vmax.f32 %v4235, 0.0
        %v4300 = vmax.f32 %v4236, 0.0
        %v4301 = vmax.f32 %v4237, 0.0
        %v4302 = vmax.f32 %v4238, 0.0
        %v4303 = vmax.f32 %v4239, 0.0
        %v4304 = vmax.f32 %v4240, 0.0
        %v4305 = vmax.f32 %v4241, 0.0
        %v4306 = vmax.f32 %v4242, 0.0
        %v4307 = vmax.f32 %v4243, 0.0
        %v4308 = vmax.f32 %v4244, 0.0
        %v4309 = vmax.f32 %v4245, 0.0
        %v4310 = vmax.f32 %v4246, 0.0
        %v4311 = vmax.f32 %v4247, 0.0
        %v4312 = vmax.f32 %v4248, 0.0
        %v4313 = vmax.f32 %v4249, 0.0
        %v4314 = vmax.f32 %v4250, 0.0
        %v4315 = vmax.f32 %v4251, 0.0
        %v4316 = vmax.f32 %v4252, 0.0
        %v4317 = vmax.f32 %v4253, 0.0
        %v4318 = vmax.f32 %v4254, 0.0
        %v4319 = vmax.f32 %v4255, 0.0
        %v4320 = vmax.f32 %v4256, 0.0
        %v4321 = vmax.f32 %v4257, 0.0
        %v4322 = vmax.f32 %v4258, 0.0
        %v4323 = vmax.f32 %v4259, 0.0
        %v4324 = vmax.f32 %v4260, 0.0
        %v4325 = vmax.f32 %v4261, 0.0
        %v4326 = vmax.f32 %v4262, 0.0
        %v4327 = vmax.f32 %v4263, 0.0
        %v4328 = vmax.f32 %v4264, 0.0
        %v4329 = vmax.f32 %v4265, 0.0
        %v4330 = vmax.f32 %v4266, 0.0
        %v4331 = vmax.f32 %v4267, 0.0
        %v4332 = vmax.f32 %v4268, 0.0
        %v4333 = vmax.f32 %v4269, 0.0
        %v4334 = vmax.f32 %v4270, 0.0
        %v4335 = vmax.f32 %v4271, 0.0
        %v4336 = vmax.f32 %v4272, 0.0
        %v4337 = vmax.f32 %v4273, 0.0
        %v4338 = vmax.f32 %v4274, 0.0
        %v4339 = vmax.f32 %v4275, 0.0
        %v4340 = vmax.f32 %v4276, 0.0
        %v4341 = vmax.f32 %v4277, 0.0
        %v4342 = vmax.f32 %v4278, 0.0
        %v4343 = vmax.f32 %v4279, 0.0
        %v4344 = vmax.f32 %v4280, 0.0
        %v4345 = vmax.f32 %v4281, 0.0
        %v4346 = vmax.f32 %v4282, 0.0
        %v4347 = vmax.f32 %v4283, 0.0
        %v4348 = vmax.f32 %v4284, 0.0
        %v4349 = vmax.f32 %v4285, 0.0
        %v4350 = vmax.f32 %v4286, 0.0
        %v4351 = vmax.f32 %v4287, 0.0
        %v4352 = vmax.f32 %v4288, 0.0
        %v4353 = vmax.f32 %v4289, 0.0
        %v4354 = vmax.f32 %v4290, 0.0
        %v4355 = vmax.f32 %v4291, 0.0
        %v4356 = vmax.f32 %v4292, 0.0
        %v4357 = vmax.f32 %v4293, 0.0
        %v4422 = vrot.slane %v4295, 7
        %vm4423 = vcmask 1041409
        %v4424 = vsel %vm4423, %v4422, %v4294
        %v4425 = vrot.slane %v4296, 6
        %vm4426 = vcmask 1042434
        %v4427 = vsel %vm4426, %v4425, %v4424
        %v4428 = vrot.slane %v4297, 5
        %vm4429 = vcmask 1043459
        %v4430 = vsel %vm4429, %v4428, %v4427
        %v4431 = vrot.slane %v4298, 4
        %vm4432 = vcmask 1044484
        %v4433 = vsel %vm4432, %v4431, %v4430
        %v4434 = vrot.slane %v4299, 3
        %vm4435 = vcmask 1045509
        %v4436 = vsel %vm4435, %v4434, %v4433
        %v4437 = vrot.slane %v4300, 2
        %vm4438 = vcmask 1046534
        %v4439 = vsel %vm4438, %v4437, %v4436
        %v4440 = vrot.slane %v4301, 1
        %vm4441 = vcmask 1047559
        %v4442 = vsel %vm4441, %v4440, %v4439
        %v4443 = vrot.slane %v4303, 7
        %v4444 = vsel %vm4423, %v4443, %v4302
        %v4445 = vrot.slane %v4304, 6
        %v4446 = vsel %vm4426, %v4445, %v4444
        %v4447 = vrot.slane %v4305, 5
        %v4448 = vsel %vm4429, %v4447, %v4446
        %v4449 = vrot.slane %v4306, 4
        %v4450 = vsel %vm4432, %v4449, %v4448
        %v4451 = vrot.slane %v4307, 3
        %v4452 = vsel %vm4435, %v4451, %v4450
        %v4453 = vrot.slane %v4308, 2
        %v4454 = vsel %vm4438, %v4453, %v4452
        %v4455 = vrot.slane %v4309, 1
        %v4456 = vsel %vm4441, %v4455, %v4454
        %v4457 = vrot.slane %v4311, 7
        %v4458 = vsel %vm4423, %v4457, %v4310
        %v4459 = vrot.slane %v4312, 6
        %v4460 = vsel %vm4426, %v4459, %v4458
        %v4461 = vrot.slane %v4313, 5
        %v4462 = vsel %vm4429, %v4461, %v4460
        %v4463 = vrot.slane %v4314, 4
        %v4464 = vsel %vm4432, %v4463, %v4462
        %v4465 = vrot.slane %v4315, 3
        %v4466 = vsel %vm4435, %v4465, %v4464
        %v4467 = vrot.slane %v4316, 2
        %v4468 = vsel %vm4438, %v4467, %v4466
        %v4469 = vrot.slane %v4317, 1
        %v4470 = vsel %vm4441, %v4469, %v4468
        %v4471 = vrot.slane %v4319, 7
        %v4472 = vsel %vm4423, %v4471, %v4318
        %v4473 = vrot.slane %v4320, 6
        %v4474 = vsel %vm4426, %v4473, %v4472
        %v4475 = vrot.slane %v4321, 5
        %v4476 = vsel %vm4429, %v4475, %v4474
        %v4477 = vrot.slane %v4322, 4
        %v4478 = vsel %vm4432, %v4477, %v4476
        %v4479 = vrot.slane %v4323, 3
        %v4480 = vsel %vm4435, %v4479, %v4478
        %v4481 = vrot.slane %v4324, 2
        %v4482 = vsel %vm4438, %v4481, %v4480
        %v4483 = vrot.slane %v4325, 1
        %v4484 = vsel %vm4441, %v4483, %v4482
        %v4485 = vrot.slane %v4327, 7
        %v4486 = vsel %vm4423, %v4485, %v4326
        %v4487 = vrot.slane %v4328, 6
        %v4488 = vsel %vm4426, %v4487, %v4486
        %v4489 = vrot.slane %v4329, 5
        %v4490 = vsel %vm4429, %v4489, %v4488
        %v4491 = vrot.slane %v4330, 4
        %v4492 = vsel %vm4432, %v4491, %v4490
        %v4493 = vrot.slane %v4331, 3
        %v4494 = vsel %vm4435, %v4493, %v4492
        %v4495 = vrot.slane %v4332, 2
        %v4496 = vsel %vm4438, %v4495, %v4494
        %v4497 = vrot.slane %v4333, 1
        %v4498 = vsel %vm4441, %v4497, %v4496
        %v4499 = vrot.slane %v4335, 7
        %v4500 = vsel %vm4423, %v4499, %v4334
        %v4501 = vrot.slane %v4336, 6
        %v4502 = vsel %vm4426, %v4501, %v4500
        %v4503 = vrot.slane %v4337, 5
        %v4504 = vsel %vm4429, %v4503, %v4502
        %v4505 = vrot.slane %v4338, 4
        %v4506 = vsel %vm4432, %v4505, %v4504
        %v4507 = vrot.slane %v4339, 3
        %v4508 = vsel %vm4435, %v4507, %v4506
        %v4509 = vrot.slane %v4340, 2
        %v4510 = vsel %vm4438, %v4509, %v4508
        %v4511 = vrot.slane %v4341, 1
        %v4512 = vsel %vm4441, %v4511, %v4510
        %v4513 = vrot.slane %v4343, 7
        %v4514 = vsel %vm4423, %v4513, %v4342
        %v4515 = vrot.slane %v4344, 6
        %v4516 = vsel %vm4426, %v4515, %v4514
        %v4517 = vrot.slane %v4345, 5
        %v4518 = vsel %vm4429, %v4517, %v4516
        %v4519 = vrot.slane %v4346, 4
        %v4520 = vsel %vm4432, %v4519, %v4518
        %v4521 = vrot.slane %v4347, 3
        %v4522 = vsel %vm4435, %v4521, %v4520
        %v4523 = vrot.slane %v4348, 2
        %v4524 = vsel %vm4438, %v4523, %v4522
        %v4525 = vrot.slane %v4349, 1
        %v4526 = vsel %vm4441, %v4525, %v4524
        %v4527 = vrot.slane %v4351, 7
        %v4528 = vsel %vm4423, %v4527, %v4350
        %v4529 = vrot.slane %v4352, 6
        %v4530 = vsel %vm4426, %v4529, %v4528
        %v4531 = vrot.slane %v4353, 5
        %v4532 = vsel %vm4429, %v4531, %v4530
        %v4533 = vrot.slane %v4354, 4
        %v4534 = vsel %vm4432, %v4533, %v4532
        %v4535 = vrot.slane %v4355, 3
        %v4536 = vsel %vm4435, %v4535, %v4534
        %v4537 = vrot.slane %v4356, 2
        %v4538 = vsel %vm4438, %v4537, %v4536
        %v4539 = vrot.slane %v4357, 1
        %v4540 = vsel %vm4441, %v4539, %v4538
        %v4549 = vrot.slane %v4294, 1
        %v4550 = vsel %vm4423, %v4295, %v4549
        %v4551 = vrot.slane %v4296, 7
        %v4552 = vsel %vm4426, %v4551, %v4550
        %v4553 = vrot.slane %v4297, 6
        %v4554 = vsel %vm4429, %v4553, %v4552
        %v4555 = vrot.slane %v4298, 5
        %v4556 = vsel %vm4432, %v4555, %v4554
        %v4557 = vrot.slane %v4299, 4
        %v4558 = vsel %vm4435, %v4557, %v4556
        %v4559 = vrot.slane %v4300, 3
        %v4560 = vsel %vm4438, %v4559, %v4558
        %v4561 = vrot.slane %v4301, 2
        %v4562 = vsel %vm4441, %v4561, %v4560
        %v4563 = vrot.slane %v4302, 1
        %v4564 = vsel %vm4423, %v4303, %v4563
        %v4565 = vrot.slane %v4304, 7
        %v4566 = vsel %vm4426, %v4565, %v4564
        %v4567 = vrot.slane %v4305, 6
        %v4568 = vsel %vm4429, %v4567, %v4566
        %v4569 = vrot.slane %v4306, 5
        %v4570 = vsel %vm4432, %v4569, %v4568
        %v4571 = vrot.slane %v4307, 4
        %v4572 = vsel %vm4435, %v4571, %v4570
        %v4573 = vrot.slane %v4308, 3
        %v4574 = vsel %vm4438, %v4573, %v4572
        %v4575 = vrot.slane %v4309, 2
        %v4576 = vsel %vm4441, %v4575, %v4574
        %v4577 = vrot.slane %v4310, 1
        %v4578 = vsel %vm4423, %v4311, %v4577
        %v4579 = vrot.slane %v4312, 7
        %v4580 = vsel %vm4426, %v4579, %v4578
        %v4581 = vrot.slane %v4313, 6
        %v4582 = vsel %vm4429, %v4581, %v4580
        %v4583 = vrot.slane %v4314, 5
        %v4584 = vsel %vm4432, %v4583, %v4582
        %v4585 = vrot.slane %v4315, 4
        %v4586 = vsel %vm4435, %v4585, %v4584
        %v4587 = vrot.slane %v4316, 3
        %v4588 = vsel %vm4438, %v4587, %v4586
        %v4589 = vrot.slane %v4317, 2
        %v4590 = vsel %vm4441, %v4589, %v4588
        %v4591 = vrot.slane %v4318, 1
        %v4592 = vsel %vm4423, %v4319, %v4591
        %v4593 = vrot.slane %v4320, 7
        %v4594 = vsel %vm4426, %v4593, %v4592
        %v4595 = vrot.slane %v4321, 6
        %v4596 = vsel %vm4429, %v4595, %v4594
        %v4597 = vrot.slane %v4322, 5
        %v4598 = vsel %vm4432, %v4597, %v4596
        %v4599 = vrot.slane %v4323, 4
        %v4600 = vsel %vm4435, %v4599, %v4598
        %v4601 = vrot.slane %v4324, 3
        %v4602 = vsel %vm4438, %v4601, %v4600
        %v4603 = vrot.slane %v4325, 2
        %v4604 = vsel %vm4441, %v4603, %v4602
        %v4605 = vrot.slane %v4326, 1
        %v4606 = vsel %vm4423, %v4327, %v4605
        %v4607 = vrot.slane %v4328, 7
        %v4608 = vsel %vm4426, %v4607, %v4606
        %v4609 = vrot.slane %v4329, 6
        %v4610 = vsel %vm4429, %v4609, %v4608
        %v4611 = vrot.slane %v4330, 5
        %v4612 = vsel %vm4432, %v4611, %v4610
        %v4613 = vrot.slane %v4331, 4
        %v4614 = vsel %vm4435, %v4613, %v4612
        %v4615 = vrot.slane %v4332, 3
        %v4616 = vsel %vm4438, %v4615, %v4614
        %v4617 = vrot.slane %v4333, 2
        %v4618 = vsel %vm4441, %v4617, %v4616
        %v4619 = vrot.slane %v4334, 1
        %v4620 = vsel %vm4423, %v4335, %v4619
        %v4621 = vrot.slane %v4336, 7
        %v4622 = vsel %vm4426, %v4621, %v4620
        %v4623 = vrot.slane %v4337, 6
        %v4624 = vsel %vm4429, %v4623, %v4622
        %v4625 = vrot.slane %v4338, 5
        %v4626 = vsel %vm4432, %v4625, %v4624
        %v4627 = vrot.slane %v4339, 4
        %v4628 = vsel %vm4435, %v4627, %v4626
        %v4629 = vrot.slane %v4340, 3
        %v4630 = vsel %vm4438, %v4629, %v4628
        %v4631 = vrot.slane %v4341, 2
        %v4632 = vsel %vm4441, %v4631, %v4630
        %v4633 = vrot.slane %v4342, 1
        %v4634 = vsel %vm4423, %v4343, %v4633
        %v4635 = vrot.slane %v4344, 7
        %v4636 = vsel %vm4426, %v4635, %v4634
        %v4637 = vrot.slane %v4345, 6
        %v4638 = vsel %vm4429, %v4637, %v4636
        %v4639 = vrot.slane %v4346, 5
        %v4640 = vsel %vm4432, %v4639, %v4638
        %v4641 = vrot.slane %v4347, 4
        %v4642 = vsel %vm4435, %v4641, %v4640
        %v4643 = vrot.slane %v4348, 3
        %v4644 = vsel %vm4438, %v4643, %v4642
        %v4645 = vrot.slane %v4349, 2
        %v4646 = vsel %vm4441, %v4645, %v4644
        %v4647 = vrot.slane %v4350, 1
        %v4648 = vsel %vm4423, %v4351, %v4647
        %v4649 = vrot.slane %v4352, 7
        %v4650 = vsel %vm4426, %v4649, %v4648
        %v4651 = vrot.slane %v4353, 6
        %v4652 = vsel %vm4429, %v4651, %v4650
        %v4653 = vrot.slane %v4354, 5
        %v4654 = vsel %vm4432, %v4653, %v4652
        %v4655 = vrot.slane %v4355, 4
        %v4656 = vsel %vm4435, %v4655, %v4654
        %v4657 = vrot.slane %v4356, 3
        %v4658 = vsel %vm4438, %v4657, %v4656
        %v4659 = vrot.slane %v4357, 2
        %v4660 = vsel %vm4441, %v4659, %v4658
        %4661 = vrot.lane.b32.xlu0 %v4562, 16
        %v4662 = vpop.permute.xlu0 %4661
        %4663 = vrot.lane.b32.xlu0 %v4576, 16
        %v4664 = vpop.permute.xlu0 %4663
        %4665 = vrot.lane.b32.xlu0 %v4590, 16
        %v4666 = vpop.permute.xlu0 %4665
        %4667 = vrot.lane.b32.xlu0 %v4604, 16
        %v4668 = vpop.permute.xlu0 %4667
        %4669 = vrot.lane.b32.xlu0 %v4618, 16
        %v4670 = vpop.permute.xlu0 %4669
        %4671 = vrot.lane.b32.xlu0 %v4632, 16
        %v4672 = vpop.permute.xlu0 %4671
        %4673 = vrot.lane.b32.xlu0 %v4646, 16
        %v4674 = vpop.permute.xlu0 %4673
        %4675 = vrot.lane.b32.xlu0 %v4660, 16
        %v4676 = vpop.permute.xlu0 %4675
        %v4685 = vrot.slane %v4294, 2
        %v4686 = vrot.slane %v4295, 1
        %v4687 = vsel %vm4423, %v4686, %v4685
        %v4688 = vsel %vm4426, %v4296, %v4687
        %v4689 = vrot.slane %v4297, 7
        %v4690 = vsel %vm4429, %v4689, %v4688
        %v4691 = vrot.slane %v4298, 6
        %v4692 = vsel %vm4432, %v4691, %v4690
        %v4693 = vrot.slane %v4299, 5
        %v4694 = vsel %vm4435, %v4693, %v4692
        %v4695 = vrot.slane %v4300, 4
        %v4696 = vsel %vm4438, %v4695, %v4694
        %v4697 = vrot.slane %v4301, 3
        %v4698 = vsel %vm4441, %v4697, %v4696
        %v4699 = vrot.slane %v4302, 2
        %v4700 = vrot.slane %v4303, 1
        %v4701 = vsel %vm4423, %v4700, %v4699
        %v4702 = vsel %vm4426, %v4304, %v4701
        %v4703 = vrot.slane %v4305, 7
        %v4704 = vsel %vm4429, %v4703, %v4702
        %v4705 = vrot.slane %v4306, 6
        %v4706 = vsel %vm4432, %v4705, %v4704
        %v4707 = vrot.slane %v4307, 5
        %v4708 = vsel %vm4435, %v4707, %v4706
        %v4709 = vrot.slane %v4308, 4
        %v4710 = vsel %vm4438, %v4709, %v4708
        %v4711 = vrot.slane %v4309, 3
        %v4712 = vsel %vm4441, %v4711, %v4710
        %v4713 = vrot.slane %v4310, 2
        %v4714 = vrot.slane %v4311, 1
        %v4715 = vsel %vm4423, %v4714, %v4713
        %v4716 = vsel %vm4426, %v4312, %v4715
        %v4717 = vrot.slane %v4313, 7
        %v4718 = vsel %vm4429, %v4717, %v4716
        %v4719 = vrot.slane %v4314, 6
        %v4720 = vsel %vm4432, %v4719, %v4718
        %v4721 = vrot.slane %v4315, 5
        %v4722 = vsel %vm4435, %v4721, %v4720
        %v4723 = vrot.slane %v4316, 4
        %v4724 = vsel %vm4438, %v4723, %v4722
        %v4725 = vrot.slane %v4317, 3
        %v4726 = vsel %vm4441, %v4725, %v4724
        %v4727 = vrot.slane %v4318, 2
        %v4728 = vrot.slane %v4319, 1
        %v4729 = vsel %vm4423, %v4728, %v4727
        %v4730 = vsel %vm4426, %v4320, %v4729
        %v4731 = vrot.slane %v4321, 7
        %v4732 = vsel %vm4429, %v4731, %v4730
        %v4733 = vrot.slane %v4322, 6
        %v4734 = vsel %vm4432, %v4733, %v4732
        %v4735 = vrot.slane %v4323, 5
        %v4736 = vsel %vm4435, %v4735, %v4734
        %v4737 = vrot.slane %v4324, 4
        %v4738 = vsel %vm4438, %v4737, %v4736
        %v4739 = vrot.slane %v4325, 3
        %v4740 = vsel %vm4441, %v4739, %v4738
        %v4741 = vrot.slane %v4326, 2
        %v4742 = vrot.slane %v4327, 1
        %v4743 = vsel %vm4423, %v4742, %v4741
        %v4744 = vsel %vm4426, %v4328, %v4743
        %v4745 = vrot.slane %v4329, 7
        %v4746 = vsel %vm4429, %v4745, %v4744
        %v4747 = vrot.slane %v4330, 6
        %v4748 = vsel %vm4432, %v4747, %v4746
        %v4749 = vrot.slane %v4331, 5
        %v4750 = vsel %vm4435, %v4749, %v4748
        %v4751 = vrot.slane %v4332, 4
        %v4752 = vsel %vm4438, %v4751, %v4750
        %v4753 = vrot.slane %v4333, 3
        %v4754 = vsel %vm4441, %v4753, %v4752
        %v4755 = vrot.slane %v4334, 2
        %v4756 = vrot.slane %v4335, 1
        %v4757 = vsel %vm4423, %v4756, %v4755
        %v4758 = vsel %vm4426, %v4336, %v4757
        %v4759 = vrot.slane %v4337, 7
        %v4760 = vsel %vm4429, %v4759, %v4758
        %v4761 = vrot.slane %v4338, 6
        %v4762 = vsel %vm4432, %v4761, %v4760
        %v4763 = vrot.slane %v4339, 5
        %v4764 = vsel %vm4435, %v4763, %v4762
        %v4765 = vrot.slane %v4340, 4
        %v4766 = vsel %vm4438, %v4765, %v4764
        %v4767 = vrot.slane %v4341, 3
        %v4768 = vsel %vm4441, %v4767, %v4766
        %v4769 = vrot.slane %v4342, 2
        %v4770 = vrot.slane %v4343, 1
        %v4771 = vsel %vm4423, %v4770, %v4769
        %v4772 = vsel %vm4426, %v4344, %v4771
        %v4773 = vrot.slane %v4345, 7
        %v4774 = vsel %vm4429, %v4773, %v4772
        %v4775 = vrot.slane %v4346, 6
        %v4776 = vsel %vm4432, %v4775, %v4774
        %v4777 = vrot.slane %v4347, 5
        %v4778 = vsel %vm4435, %v4777, %v4776
        %v4779 = vrot.slane %v4348, 4
        %v4780 = vsel %vm4438, %v4779, %v4778
        %v4781 = vrot.slane %v4349, 3
        %v4782 = vsel %vm4441, %v4781, %v4780
        %v4783 = vrot.slane %v4350, 2
        %v4784 = vrot.slane %v4351, 1
        %v4785 = vsel %vm4423, %v4784, %v4783
        %v4786 = vsel %vm4426, %v4352, %v4785
        %v4787 = vrot.slane %v4353, 7
        %v4788 = vsel %vm4429, %v4787, %v4786
        %v4789 = vrot.slane %v4354, 6
        %v4790 = vsel %vm4432, %v4789, %v4788
        %v4791 = vrot.slane %v4355, 5
        %v4792 = vsel %vm4435, %v4791, %v4790
        %v4793 = vrot.slane %v4356, 4
        %v4794 = vsel %vm4438, %v4793, %v4792
        %v4795 = vrot.slane %v4357, 3
        %v4796 = vsel %vm4441, %v4795, %v4794
        %4797 = vrot.lane.b32.xlu0 %v4698, 32
        %v4798 = vpop.permute.xlu0 %4797
        %4799 = vrot.lane.b32.xlu0 %v4712, 32
        %v4800 = vpop.permute.xlu0 %4799
        %4801 = vrot.lane.b32.xlu0 %v4726, 32
        %v4802 = vpop.permute.xlu0 %4801
        %4803 = vrot.lane.b32.xlu0 %v4740, 32
        %v4804 = vpop.permute.xlu0 %4803
        %4805 = vrot.lane.b32.xlu0 %v4754, 32
        %v4806 = vpop.permute.xlu0 %4805
        %4807 = vrot.lane.b32.xlu0 %v4768, 32
        %v4808 = vpop.permute.xlu0 %4807
        %4809 = vrot.lane.b32.xlu0 %v4782, 32
        %v4810 = vpop.permute.xlu0 %4809
        %4811 = vrot.lane.b32.xlu0 %v4796, 32
        %v4812 = vpop.permute.xlu0 %4811
        %v4821 = vrot.slane %v4294, 3
        %v4822 = vrot.slane %v4295, 2
        %v4823 = vsel %vm4423, %v4822, %v4821
        %v4824 = vrot.slane %v4296, 1
        %v4825 = vsel %vm4426, %v4824, %v4823
        %v4826 = vsel %vm4429, %v4297, %v4825
        %v4827 = vrot.slane %v4298, 7
        %v4828 = vsel %vm4432, %v4827, %v4826
        %v4829 = vrot.slane %v4299, 6
        %v4830 = vsel %vm4435, %v4829, %v4828
        %v4831 = vrot.slane %v4300, 5
        %v4832 = vsel %vm4438, %v4831, %v4830
        %v4833 = vrot.slane %v4301, 4
        %v4834 = vsel %vm4441, %v4833, %v4832
        %v4835 = vrot.slane %v4302, 3
        %v4836 = vrot.slane %v4303, 2
        %v4837 = vsel %vm4423, %v4836, %v4835
        %v4838 = vrot.slane %v4304, 1
        %v4839 = vsel %vm4426, %v4838, %v4837
        %v4840 = vsel %vm4429, %v4305, %v4839
        %v4841 = vrot.slane %v4306, 7
        %v4842 = vsel %vm4432, %v4841, %v4840
        %v4843 = vrot.slane %v4307, 6
        %v4844 = vsel %vm4435, %v4843, %v4842
        %v4845 = vrot.slane %v4308, 5
        %v4846 = vsel %vm4438, %v4845, %v4844
        %v4847 = vrot.slane %v4309, 4
        %v4848 = vsel %vm4441, %v4847, %v4846
        %v4849 = vrot.slane %v4310, 3
        %v4850 = vrot.slane %v4311, 2
        %v4851 = vsel %vm4423, %v4850, %v4849
        %v4852 = vrot.slane %v4312, 1
        %v4853 = vsel %vm4426, %v4852, %v4851
        %v4854 = vsel %vm4429, %v4313, %v4853
        %v4855 = vrot.slane %v4314, 7
        %v4856 = vsel %vm4432, %v4855, %v4854
        %v4857 = vrot.slane %v4315, 6
        %v4858 = vsel %vm4435, %v4857, %v4856
        %v4859 = vrot.slane %v4316, 5
        %v4860 = vsel %vm4438, %v4859, %v4858
        %v4861 = vrot.slane %v4317, 4
        %v4862 = vsel %vm4441, %v4861, %v4860
        %v4863 = vrot.slane %v4318, 3
        %v4864 = vrot.slane %v4319, 2
        %v4865 = vsel %vm4423, %v4864, %v4863
        %v4866 = vrot.slane %v4320, 1
        %v4867 = vsel %vm4426, %v4866, %v4865
        %v4868 = vsel %vm4429, %v4321, %v4867
        %v4869 = vrot.slane %v4322, 7
        %v4870 = vsel %vm4432, %v4869, %v4868
        %v4871 = vrot.slane %v4323, 6
        %v4872 = vsel %vm4435, %v4871, %v4870
        %v4873 = vrot.slane %v4324, 5
        %v4874 = vsel %vm4438, %v4873, %v4872
        %v4875 = vrot.slane %v4325, 4
        %v4876 = vsel %vm4441, %v4875, %v4874
        %v4877 = vrot.slane %v4326, 3
        %v4878 = vrot.slane %v4327, 2
        %v4879 = vsel %vm4423, %v4878, %v4877
        %v4880 = vrot.slane %v4328, 1
        %v4881 = vsel %vm4426, %v4880, %v4879
        %v4882 = vsel %vm4429, %v4329, %v4881
        %v4883 = vrot.slane %v4330, 7
        %v4884 = vsel %vm4432, %v4883, %v4882
        %v4885 = vrot.slane %v4331, 6
        %v4886 = vsel %vm4435, %v4885, %v4884
        %v4887 = vrot.slane %v4332, 5
        %v4888 = vsel %vm4438, %v4887, %v4886
        %v4889 = vrot.slane %v4333, 4
        %v4890 = vsel %vm4441, %v4889, %v4888
        %v4891 = vrot.slane %v4334, 3
        %v4892 = vrot.slane %v4335, 2
        %v4893 = vsel %vm4423, %v4892, %v4891
        %v4894 = vrot.slane %v4336, 1
        %v4895 = vsel %vm4426, %v4894, %v4893
        %v4896 = vsel %vm4429, %v4337, %v4895
        %v4897 = vrot.slane %v4338, 7
        %v4898 = vsel %vm4432, %v4897, %v4896
        %v4899 = vrot.slane %v4339, 6
        %v4900 = vsel %vm4435, %v4899, %v4898
        %v4901 = vrot.slane %v4340, 5
        %v4902 = vsel %vm4438, %v4901, %v4900
        %v4903 = vrot.slane %v4341, 4
        %v4904 = vsel %vm4441, %v4903, %v4902
        %v4905 = vrot.slane %v4342, 3
        %v4906 = vrot.slane %v4343, 2
        %v4907 = vsel %vm4423, %v4906, %v4905
        %v4908 = vrot.slane %v4344, 1
        %v4909 = vsel %vm4426, %v4908, %v4907
        %v4910 = vsel %vm4429, %v4345, %v4909
        %v4911 = vrot.slane %v4346, 7
        %v4912 = vsel %vm4432, %v4911, %v4910
        %v4913 = vrot.slane %v4347, 6
        %v4914 = vsel %vm4435, %v4913, %v4912
        %v4915 = vrot.slane %v4348, 5
        %v4916 = vsel %vm4438, %v4915, %v4914
        %v4917 = vrot.slane %v4349, 4
        %v4918 = vsel %vm4441, %v4917, %v4916
        %v4919 = vrot.slane %v4350, 3
        %v4920 = vrot.slane %v4351, 2
        %v4921 = vsel %vm4423, %v4920, %v4919
        %v4922 = vrot.slane %v4352, 1
        %v4923 = vsel %vm4426, %v4922, %v4921
        %v4924 = vsel %vm4429, %v4353, %v4923
        %v4925 = vrot.slane %v4354, 7
        %v4926 = vsel %vm4432, %v4925, %v4924
        %v4927 = vrot.slane %v4355, 6
        %v4928 = vsel %vm4435, %v4927, %v4926
        %v4929 = vrot.slane %v4356, 5
        %v4930 = vsel %vm4438, %v4929, %v4928
        %v4931 = vrot.slane %v4357, 4
        %v4932 = vsel %vm4441, %v4931, %v4930
        %4933 = vrot.lane.b32.xlu0 %v4834, 48
        %v4934 = vpop.permute.xlu0 %4933
        %4935 = vrot.lane.b32.xlu0 %v4848, 48
        %v4936 = vpop.permute.xlu0 %4935
        %4937 = vrot.lane.b32.xlu0 %v4862, 48
        %v4938 = vpop.permute.xlu0 %4937
        %4939 = vrot.lane.b32.xlu0 %v4876, 48
        %v4940 = vpop.permute.xlu0 %4939
        %4941 = vrot.lane.b32.xlu0 %v4890, 48
        %v4942 = vpop.permute.xlu0 %4941
        %4943 = vrot.lane.b32.xlu0 %v4904, 48
        %v4944 = vpop.permute.xlu0 %4943
        %4945 = vrot.lane.b32.xlu0 %v4918, 48
        %v4946 = vpop.permute.xlu0 %4945
        %4947 = vrot.lane.b32.xlu0 %v4932, 48
        %v4948 = vpop.permute.xlu0 %4947
        %v4957 = vrot.slane %v4294, 4
        %v4958 = vrot.slane %v4295, 3
        %v4959 = vsel %vm4423, %v4958, %v4957
        %v4960 = vrot.slane %v4296, 2
        %v4961 = vsel %vm4426, %v4960, %v4959
        %v4962 = vrot.slane %v4297, 1
        %v4963 = vsel %vm4429, %v4962, %v4961
        %v4964 = vsel %vm4432, %v4298, %v4963
        %v4965 = vrot.slane %v4299, 7
        %v4966 = vsel %vm4435, %v4965, %v4964
        %v4967 = vrot.slane %v4300, 6
        %v4968 = vsel %vm4438, %v4967, %v4966
        %v4969 = vrot.slane %v4301, 5
        %v4970 = vsel %vm4441, %v4969, %v4968
        %v4971 = vrot.slane %v4302, 4
        %v4972 = vrot.slane %v4303, 3
        %v4973 = vsel %vm4423, %v4972, %v4971
        %v4974 = vrot.slane %v4304, 2
        %v4975 = vsel %vm4426, %v4974, %v4973
        %v4976 = vrot.slane %v4305, 1
        %v4977 = vsel %vm4429, %v4976, %v4975
        %v4978 = vsel %vm4432, %v4306, %v4977
        %v4979 = vrot.slane %v4307, 7
        %v4980 = vsel %vm4435, %v4979, %v4978
        %v4981 = vrot.slane %v4308, 6
        %v4982 = vsel %vm4438, %v4981, %v4980
        %v4983 = vrot.slane %v4309, 5
        %v4984 = vsel %vm4441, %v4983, %v4982
        %v4985 = vrot.slane %v4310, 4
        %v4986 = vrot.slane %v4311, 3
        %v4987 = vsel %vm4423, %v4986, %v4985
        %v4988 = vrot.slane %v4312, 2
        %v4989 = vsel %vm4426, %v4988, %v4987
        %v4990 = vrot.slane %v4313, 1
        %v4991 = vsel %vm4429, %v4990, %v4989
        %v4992 = vsel %vm4432, %v4314, %v4991
        %v4993 = vrot.slane %v4315, 7
        %v4994 = vsel %vm4435, %v4993, %v4992
        %v4995 = vrot.slane %v4316, 6
        %v4996 = vsel %vm4438, %v4995, %v4994
        %v4997 = vrot.slane %v4317, 5
        %v4998 = vsel %vm4441, %v4997, %v4996
        %v4999 = vrot.slane %v4318, 4
        %v5000 = vrot.slane %v4319, 3
        %v5001 = vsel %vm4423, %v5000, %v4999
        %v5002 = vrot.slane %v4320, 2
        %v5003 = vsel %vm4426, %v5002, %v5001
        %v5004 = vrot.slane %v4321, 1
        %v5005 = vsel %vm4429, %v5004, %v5003
        %v5006 = vsel %vm4432, %v4322, %v5005
        %v5007 = vrot.slane %v4323, 7
        %v5008 = vsel %vm4435, %v5007, %v5006
        %v5009 = vrot.slane %v4324, 6
        %v5010 = vsel %vm4438, %v5009, %v5008
        %v5011 = vrot.slane %v4325, 5
        %v5012 = vsel %vm4441, %v5011, %v5010
        %v5013 = vrot.slane %v4326, 4
        %v5014 = vrot.slane %v4327, 3
        %v5015 = vsel %vm4423, %v5014, %v5013
        %v5016 = vrot.slane %v4328, 2
        %v5017 = vsel %vm4426, %v5016, %v5015
        %v5018 = vrot.slane %v4329, 1
        %v5019 = vsel %vm4429, %v5018, %v5017
        %v5020 = vsel %vm4432, %v4330, %v5019
        %v5021 = vrot.slane %v4331, 7
        %v5022 = vsel %vm4435, %v5021, %v5020
        %v5023 = vrot.slane %v4332, 6
        %v5024 = vsel %vm4438, %v5023, %v5022
        %v5025 = vrot.slane %v4333, 5
        %v5026 = vsel %vm4441, %v5025, %v5024
        %v5027 = vrot.slane %v4334, 4
        %v5028 = vrot.slane %v4335, 3
        %v5029 = vsel %vm4423, %v5028, %v5027
        %v5030 = vrot.slane %v4336, 2
        %v5031 = vsel %vm4426, %v5030, %v5029
        %v5032 = vrot.slane %v4337, 1
        %v5033 = vsel %vm4429, %v5032, %v5031
        %v5034 = vsel %vm4432, %v4338, %v5033
        %v5035 = vrot.slane %v4339, 7
        %v5036 = vsel %vm4435, %v5035, %v5034
        %v5037 = vrot.slane %v4340, 6
        %v5038 = vsel %vm4438, %v5037, %v5036
        %v5039 = vrot.slane %v4341, 5
        %v5040 = vsel %vm4441, %v5039, %v5038
        %v5041 = vrot.slane %v4342, 4
        %v5042 = vrot.slane %v4343, 3
        %v5043 = vsel %vm4423, %v5042, %v5041
        %v5044 = vrot.slane %v4344, 2
        %v5045 = vsel %vm4426, %v5044, %v5043
        %v5046 = vrot.slane %v4345, 1
        %v5047 = vsel %vm4429, %v5046, %v5045
        %v5048 = vsel %vm4432, %v4346, %v5047
        %v5049 = vrot.slane %v4347, 7
        %v5050 = vsel %vm4435, %v5049, %v5048
        %v5051 = vrot.slane %v4348, 6
        %v5052 = vsel %vm4438, %v5051, %v5050
        %v5053 = vrot.slane %v4349, 5
        %v5054 = vsel %vm4441, %v5053, %v5052
        %v5055 = vrot.slane %v4350, 4
        %v5056 = vrot.slane %v4351, 3
        %v5057 = vsel %vm4423, %v5056, %v5055
        %v5058 = vrot.slane %v4352, 2
        %v5059 = vsel %vm4426, %v5058, %v5057
        %v5060 = vrot.slane %v4353, 1
        %v5061 = vsel %vm4429, %v5060, %v5059
        %v5062 = vsel %vm4432, %v4354, %v5061
        %v5063 = vrot.slane %v4355, 7
        %v5064 = vsel %vm4435, %v5063, %v5062
        %v5065 = vrot.slane %v4356, 6
        %v5066 = vsel %vm4438, %v5065, %v5064
        %v5067 = vrot.slane %v4357, 5
        %v5068 = vsel %vm4441, %v5067, %v5066
        %5069 = vrot.lane.b32.xlu0 %v4970, 64
        %v5070 = vpop.permute.xlu0 %5069
        %5071 = vrot.lane.b32.xlu0 %v4984, 64
        %v5072 = vpop.permute.xlu0 %5071
        %5073 = vrot.lane.b32.xlu0 %v4998, 64
        %v5074 = vpop.permute.xlu0 %5073
        %5075 = vrot.lane.b32.xlu0 %v5012, 64
        %v5076 = vpop.permute.xlu0 %5075
        %5077 = vrot.lane.b32.xlu0 %v5026, 64
        %v5078 = vpop.permute.xlu0 %5077
        %5079 = vrot.lane.b32.xlu0 %v5040, 64
        %v5080 = vpop.permute.xlu0 %5079
        %5081 = vrot.lane.b32.xlu0 %v5054, 64
        %v5082 = vpop.permute.xlu0 %5081
        %5083 = vrot.lane.b32.xlu0 %v5068, 64
        %v5084 = vpop.permute.xlu0 %5083
        %v5093 = vrot.slane %v4294, 5
        %v5094 = vrot.slane %v4295, 4
        %v5095 = vsel %vm4423, %v5094, %v5093
        %v5096 = vrot.slane %v4296, 3
        %v5097 = vsel %vm4426, %v5096, %v5095
        %v5098 = vrot.slane %v4297, 2
        %v5099 = vsel %vm4429, %v5098, %v5097
        %v5100 = vrot.slane %v4298, 1
        %v5101 = vsel %vm4432, %v5100, %v5099
        %v5102 = vsel %vm4435, %v4299, %v5101
        %v5103 = vrot.slane %v4300, 7
        %v5104 = vsel %vm4438, %v5103, %v5102
        %v5105 = vrot.slane %v4301, 6
        %v5106 = vsel %vm4441, %v5105, %v5104
        %v5107 = vrot.slane %v4302, 5
        %v5108 = vrot.slane %v4303, 4
        %v5109 = vsel %vm4423, %v5108, %v5107
        %v5110 = vrot.slane %v4304, 3
        %v5111 = vsel %vm4426, %v5110, %v5109
        %v5112 = vrot.slane %v4305, 2
        %v5113 = vsel %vm4429, %v5112, %v5111
        %v5114 = vrot.slane %v4306, 1
        %v5115 = vsel %vm4432, %v5114, %v5113
        %v5116 = vsel %vm4435, %v4307, %v5115
        %v5117 = vrot.slane %v4308, 7
        %v5118 = vsel %vm4438, %v5117, %v5116
        %v5119 = vrot.slane %v4309, 6
        %v5120 = vsel %vm4441, %v5119, %v5118
        %v5121 = vrot.slane %v4310, 5
        %v5122 = vrot.slane %v4311, 4
        %v5123 = vsel %vm4423, %v5122, %v5121
        %v5124 = vrot.slane %v4312, 3
        %v5125 = vsel %vm4426, %v5124, %v5123
        %v5126 = vrot.slane %v4313, 2
        %v5127 = vsel %vm4429, %v5126, %v5125
        %v5128 = vrot.slane %v4314, 1
        %v5129 = vsel %vm4432, %v5128, %v5127
        %v5130 = vsel %vm4435, %v4315, %v5129
        %v5131 = vrot.slane %v4316, 7
        %v5132 = vsel %vm4438, %v5131, %v5130
        %v5133 = vrot.slane %v4317, 6
        %v5134 = vsel %vm4441, %v5133, %v5132
        %v5135 = vrot.slane %v4318, 5
        %v5136 = vrot.slane %v4319, 4
        %v5137 = vsel %vm4423, %v5136, %v5135
        %v5138 = vrot.slane %v4320, 3
        %v5139 = vsel %vm4426, %v5138, %v5137
        %v5140 = vrot.slane %v4321, 2
        %v5141 = vsel %vm4429, %v5140, %v5139
        %v5142 = vrot.slane %v4322, 1
        %v5143 = vsel %vm4432, %v5142, %v5141
        %v5144 = vsel %vm4435, %v4323, %v5143
        %v5145 = vrot.slane %v4324, 7
        %v5146 = vsel %vm4438, %v5145, %v5144
        %v5147 = vrot.slane %v4325, 6
        %v5148 = vsel %vm4441, %v5147, %v5146
        %v5149 = vrot.slane %v4326, 5
        %v5150 = vrot.slane %v4327, 4
        %v5151 = vsel %vm4423, %v5150, %v5149
        %v5152 = vrot.slane %v4328, 3
        %v5153 = vsel %vm4426, %v5152, %v5151
        %v5154 = vrot.slane %v4329, 2
        %v5155 = vsel %vm4429, %v5154, %v5153
        %v5156 = vrot.slane %v4330, 1
        %v5157 = vsel %vm4432, %v5156, %v5155
        %v5158 = vsel %vm4435, %v4331, %v5157
        %v5159 = vrot.slane %v4332, 7
        %v5160 = vsel %vm4438, %v5159, %v5158
        %v5161 = vrot.slane %v4333, 6
        %v5162 = vsel %vm4441, %v5161, %v5160
        %v5163 = vrot.slane %v4334, 5
        %v5164 = vrot.slane %v4335, 4
        %v5165 = vsel %vm4423, %v5164, %v5163
        %v5166 = vrot.slane %v4336, 3
        %v5167 = vsel %vm4426, %v5166, %v5165
        %v5168 = vrot.slane %v4337, 2
        %v5169 = vsel %vm4429, %v5168, %v5167
        %v5170 = vrot.slane %v4338, 1
        %v5171 = vsel %vm4432, %v5170, %v5169
        %v5172 = vsel %vm4435, %v4339, %v5171
        %v5173 = vrot.slane %v4340, 7
        %v5174 = vsel %vm4438, %v5173, %v5172
        %v5175 = vrot.slane %v4341, 6
        %v5176 = vsel %vm4441, %v5175, %v5174
        %v5177 = vrot.slane %v4342, 5
        %v5178 = vrot.slane %v4343, 4
        %v5179 = vsel %vm4423, %v5178, %v5177
        %v5180 = vrot.slane %v4344, 3
        %v5181 = vsel %vm4426, %v5180, %v5179
        %v5182 = vrot.slane %v4345, 2
        %v5183 = vsel %vm4429, %v5182, %v5181
        %v5184 = vrot.slane %v4346, 1
        %v5185 = vsel %vm4432, %v5184, %v5183
        %v5186 = vsel %vm4435, %v4347, %v5185
        %v5187 = vrot.slane %v4348, 7
        %v5188 = vsel %vm4438, %v5187, %v5186
        %v5189 = vrot.slane %v4349, 6
        %v5190 = vsel %vm4441, %v5189, %v5188
        %v5191 = vrot.slane %v4350, 5
        %v5192 = vrot.slane %v4351, 4
        %v5193 = vsel %vm4423, %v5192, %v5191
        %v5194 = vrot.slane %v4352, 3
        %v5195 = vsel %vm4426, %v5194, %v5193
        %v5196 = vrot.slane %v4353, 2
        %v5197 = vsel %vm4429, %v5196, %v5195
        %v5198 = vrot.slane %v4354, 1
        %v5199 = vsel %vm4432, %v5198, %v5197
        %v5200 = vsel %vm4435, %v4355, %v5199
        %v5201 = vrot.slane %v4356, 7
        %v5202 = vsel %vm4438, %v5201, %v5200
        %v5203 = vrot.slane %v4357, 6
        %v5204 = vsel %vm4441, %v5203, %v5202
        %5205 = vrot.lane.b32.xlu0 %v5106, 80
        %v5206 = vpop.permute.xlu0 %5205
        %5207 = vrot.lane.b32.xlu0 %v5120, 80
        %v5208 = vpop.permute.xlu0 %5207
        %5209 = vrot.lane.b32.xlu0 %v5134, 80
        %v5210 = vpop.permute.xlu0 %5209
        %5211 = vrot.lane.b32.xlu0 %v5148, 80
        %v5212 = vpop.permute.xlu0 %5211
        %5213 = vrot.lane.b32.xlu0 %v5162, 80
        %v5214 = vpop.permute.xlu0 %5213
        %5215 = vrot.lane.b32.xlu0 %v5176, 80
        %v5216 = vpop.permute.xlu0 %5215
        %5217 = vrot.lane.b32.xlu0 %v5190, 80
        %v5218 = vpop.permute.xlu0 %5217
        %5219 = vrot.lane.b32.xlu0 %v5204, 80
        %v5220 = vpop.permute.xlu0 %5219
        %v5229 = vrot.slane %v4294, 6
        %v5230 = vrot.slane %v4295, 5
        %v5231 = vsel %vm4423, %v5230, %v5229
        %v5232 = vrot.slane %v4296, 4
        %v5233 = vsel %vm4426, %v5232, %v5231
        %v5234 = vrot.slane %v4297, 3
        %v5235 = vsel %vm4429, %v5234, %v5233
        %v5236 = vrot.slane %v4298, 2
        %v5237 = vsel %vm4432, %v5236, %v5235
        %v5238 = vrot.slane %v4299, 1
        %v5239 = vsel %vm4435, %v5238, %v5237
        %v5240 = vsel %vm4438, %v4300, %v5239
        %v5241 = vrot.slane %v4301, 7
        %v5242 = vsel %vm4441, %v5241, %v5240
        %v5243 = vrot.slane %v4302, 6
        %v5244 = vrot.slane %v4303, 5
        %v5245 = vsel %vm4423, %v5244, %v5243
        %v5246 = vrot.slane %v4304, 4
        %v5247 = vsel %vm4426, %v5246, %v5245
        %v5248 = vrot.slane %v4305, 3
        %v5249 = vsel %vm4429, %v5248, %v5247
        %v5250 = vrot.slane %v4306, 2
        %v5251 = vsel %vm4432, %v5250, %v5249
        %v5252 = vrot.slane %v4307, 1
        %v5253 = vsel %vm4435, %v5252, %v5251
        %v5254 = vsel %vm4438, %v4308, %v5253
        %v5255 = vrot.slane %v4309, 7
        %v5256 = vsel %vm4441, %v5255, %v5254
        %v5257 = vrot.slane %v4310, 6
        %v5258 = vrot.slane %v4311, 5
        %v5259 = vsel %vm4423, %v5258, %v5257
        %v5260 = vrot.slane %v4312, 4
        %v5261 = vsel %vm4426, %v5260, %v5259
        %v5262 = vrot.slane %v4313, 3
        %v5263 = vsel %vm4429, %v5262, %v5261
        %v5264 = vrot.slane %v4314, 2
        %v5265 = vsel %vm4432, %v5264, %v5263
        %v5266 = vrot.slane %v4315, 1
        %v5267 = vsel %vm4435, %v5266, %v5265
        %v5268 = vsel %vm4438, %v4316, %v5267
        %v5269 = vrot.slane %v4317, 7
        %v5270 = vsel %vm4441, %v5269, %v5268
        %v5271 = vrot.slane %v4318, 6
        %v5272 = vrot.slane %v4319, 5
        %v5273 = vsel %vm4423, %v5272, %v5271
        %v5274 = vrot.slane %v4320, 4
        %v5275 = vsel %vm4426, %v5274, %v5273
        %v5276 = vrot.slane %v4321, 3
        %v5277 = vsel %vm4429, %v5276, %v5275
        %v5278 = vrot.slane %v4322, 2
        %v5279 = vsel %vm4432, %v5278, %v5277
        %v5280 = vrot.slane %v4323, 1
        %v5281 = vsel %vm4435, %v5280, %v5279
        %v5282 = vsel %vm4438, %v4324, %v5281
        %v5283 = vrot.slane %v4325, 7
        %v5284 = vsel %vm4441, %v5283, %v5282
        %v5285 = vrot.slane %v4326, 6
        %v5286 = vrot.slane %v4327, 5
        %v5287 = vsel %vm4423, %v5286, %v5285
        %v5288 = vrot.slane %v4328, 4
        %v5289 = vsel %vm4426, %v5288, %v5287
        %v5290 = vrot.slane %v4329, 3
        %v5291 = vsel %vm4429, %v5290, %v5289
        %v5292 = vrot.slane %v4330, 2
        %v5293 = vsel %vm4432, %v5292, %v5291
        %v5294 = vrot.slane %v4331, 1
        %v5295 = vsel %vm4435, %v5294, %v5293
        %v5296 = vsel %vm4438, %v4332, %v5295
        %v5297 = vrot.slane %v4333, 7
        %v5298 = vsel %vm4441, %v5297, %v5296
        %v5299 = vrot.slane %v4334, 6
        %v5300 = vrot.slane %v4335, 5
        %v5301 = vsel %vm4423, %v5300, %v5299
        %v5302 = vrot.slane %v4336, 4
        %v5303 = vsel %vm4426, %v5302, %v5301
        %v5304 = vrot.slane %v4337, 3
        %v5305 = vsel %vm4429, %v5304, %v5303
        %v5306 = vrot.slane %v4338, 2
        %v5307 = vsel %vm4432, %v5306, %v5305
        %v5308 = vrot.slane %v4339, 1
        %v5309 = vsel %vm4435, %v5308, %v5307
        %v5310 = vsel %vm4438, %v4340, %v5309
        %v5311 = vrot.slane %v4341, 7
        %v5312 = vsel %vm4441, %v5311, %v5310
        %v5313 = vrot.slane %v4342, 6
        %v5314 = vrot.slane %v4343, 5
        %v5315 = vsel %vm4423, %v5314, %v5313
        %v5316 = vrot.slane %v4344, 4
        %v5317 = vsel %vm4426, %v5316, %v5315
        %v5318 = vrot.slane %v4345, 3
        %v5319 = vsel %vm4429, %v5318, %v5317
        %v5320 = vrot.slane %v4346, 2
        %v5321 = vsel %vm4432, %v5320, %v5319
        %v5322 = vrot.slane %v4347, 1
        %v5323 = vsel %vm4435, %v5322, %v5321
        %v5324 = vsel %vm4438, %v4348, %v5323
        %v5325 = vrot.slane %v4349, 7
        %v5326 = vsel %vm4441, %v5325, %v5324
        %v5327 = vrot.slane %v4350, 6
        %v5328 = vrot.slane %v4351, 5
        %v5329 = vsel %vm4423, %v5328, %v5327
        %v5330 = vrot.slane %v4352, 4
        %v5331 = vsel %vm4426, %v5330, %v5329
        %v5332 = vrot.slane %v4353, 3
        %v5333 = vsel %vm4429, %v5332, %v5331
        %v5334 = vrot.slane %v4354, 2
        %v5335 = vsel %vm4432, %v5334, %v5333
        %v5336 = vrot.slane %v4355, 1
        %v5337 = vsel %vm4435, %v5336, %v5335
        %v5338 = vsel %vm4438, %v4356, %v5337
        %v5339 = vrot.slane %v4357, 7
        %v5340 = vsel %vm4441, %v5339, %v5338
        %5341 = vrot.lane.b32.xlu0 %v5242, 96
        %v5342 = vpop.permute.xlu0 %5341
        %5343 = vrot.lane.b32.xlu0 %v5256, 96
        %v5344 = vpop.permute.xlu0 %5343
        %5345 = vrot.lane.b32.xlu0 %v5270, 96
        %v5346 = vpop.permute.xlu0 %5345
        %5347 = vrot.lane.b32.xlu0 %v5284, 96
        %v5348 = vpop.permute.xlu0 %5347
        %5349 = vrot.lane.b32.xlu0 %v5298, 96
        %v5350 = vpop.permute.xlu0 %5349
        %5351 = vrot.lane.b32.xlu0 %v5312, 96
        %v5352 = vpop.permute.xlu0 %5351
        %5353 = vrot.lane.b32.xlu0 %v5326, 96
        %v5354 = vpop.permute.xlu0 %5353
        %5355 = vrot.lane.b32.xlu0 %v5340, 96
        %v5356 = vpop.permute.xlu0 %5355
        %v5365 = vrot.slane %v4294, 7
        %v5366 = vrot.slane %v4295, 6
        %v5367 = vsel %vm4423, %v5366, %v5365
        %v5368 = vrot.slane %v4296, 5
        %v5369 = vsel %vm4426, %v5368, %v5367
        %v5370 = vrot.slane %v4297, 4
        %v5371 = vsel %vm4429, %v5370, %v5369
        %v5372 = vrot.slane %v4298, 3
        %v5373 = vsel %vm4432, %v5372, %v5371
        %v5374 = vrot.slane %v4299, 2
        %v5375 = vsel %vm4435, %v5374, %v5373
        %v5376 = vrot.slane %v4300, 1
        %v5377 = vsel %vm4438, %v5376, %v5375
        %v5378 = vsel %vm4441, %v4301, %v5377
        %v5379 = vrot.slane %v4302, 7
        %v5380 = vrot.slane %v4303, 6
        %v5381 = vsel %vm4423, %v5380, %v5379
        %v5382 = vrot.slane %v4304, 5
        %v5383 = vsel %vm4426, %v5382, %v5381
        %v5384 = vrot.slane %v4305, 4
        %v5385 = vsel %vm4429, %v5384, %v5383
        %v5386 = vrot.slane %v4306, 3
        %v5387 = vsel %vm4432, %v5386, %v5385
        %v5388 = vrot.slane %v4307, 2
        %v5389 = vsel %vm4435, %v5388, %v5387
        %v5390 = vrot.slane %v4308, 1
        %v5391 = vsel %vm4438, %v5390, %v5389
        %v5392 = vsel %vm4441, %v4309, %v5391
        %v5393 = vrot.slane %v4310, 7
        %v5394 = vrot.slane %v4311, 6
        %v5395 = vsel %vm4423, %v5394, %v5393
        %v5396 = vrot.slane %v4312, 5
        %v5397 = vsel %vm4426, %v5396, %v5395
        %v5398 = vrot.slane %v4313, 4
        %v5399 = vsel %vm4429, %v5398, %v5397
        %v5400 = vrot.slane %v4314, 3
        %v5401 = vsel %vm4432, %v5400, %v5399
        %v5402 = vrot.slane %v4315, 2
        %v5403 = vsel %vm4435, %v5402, %v5401
        %v5404 = vrot.slane %v4316, 1
        %v5405 = vsel %vm4438, %v5404, %v5403
        %v5406 = vsel %vm4441, %v4317, %v5405
        %v5407 = vrot.slane %v4318, 7
        %v5408 = vrot.slane %v4319, 6
        %v5409 = vsel %vm4423, %v5408, %v5407
        %v5410 = vrot.slane %v4320, 5
        %v5411 = vsel %vm4426, %v5410, %v5409
        %v5412 = vrot.slane %v4321, 4
        %v5413 = vsel %vm4429, %v5412, %v5411
        %v5414 = vrot.slane %v4322, 3
        %v5415 = vsel %vm4432, %v5414, %v5413
        %v5416 = vrot.slane %v4323, 2
        %v5417 = vsel %vm4435, %v5416, %v5415
        %v5418 = vrot.slane %v4324, 1
        %v5419 = vsel %vm4438, %v5418, %v5417
        %v5420 = vsel %vm4441, %v4325, %v5419
        %v5421 = vrot.slane %v4326, 7
        %v5422 = vrot.slane %v4327, 6
        %v5423 = vsel %vm4423, %v5422, %v5421
        %v5424 = vrot.slane %v4328, 5
        %v5425 = vsel %vm4426, %v5424, %v5423
        %v5426 = vrot.slane %v4329, 4
        %v5427 = vsel %vm4429, %v5426, %v5425
        %v5428 = vrot.slane %v4330, 3
        %v5429 = vsel %vm4432, %v5428, %v5427
        %v5430 = vrot.slane %v4331, 2
        %v5431 = vsel %vm4435, %v5430, %v5429
        %v5432 = vrot.slane %v4332, 1
        %v5433 = vsel %vm4438, %v5432, %v5431
        %v5434 = vsel %vm4441, %v4333, %v5433
        %v5435 = vrot.slane %v4334, 7
        %v5436 = vrot.slane %v4335, 6
        %v5437 = vsel %vm4423, %v5436, %v5435
        %v5438 = vrot.slane %v4336, 5
        %v5439 = vsel %vm4426, %v5438, %v5437
        %v5440 = vrot.slane %v4337, 4
        %v5441 = vsel %vm4429, %v5440, %v5439
        %v5442 = vrot.slane %v4338, 3
        %v5443 = vsel %vm4432, %v5442, %v5441
        %v5444 = vrot.slane %v4339, 2
        %v5445 = vsel %vm4435, %v5444, %v5443
        %v5446 = vrot.slane %v4340, 1
        %v5447 = vsel %vm4438, %v5446, %v5445
        %v5448 = vsel %vm4441, %v4341, %v5447
        %v5449 = vrot.slane %v4342, 7
        %v5450 = vrot.slane %v4343, 6
        %v5451 = vsel %vm4423, %v5450, %v5449
        %v5452 = vrot.slane %v4344, 5
        %v5453 = vsel %vm4426, %v5452, %v5451
        %v5454 = vrot.slane %v4345, 4
        %v5455 = vsel %vm4429, %v5454, %v5453
        %v5456 = vrot.slane %v4346, 3
        %v5457 = vsel %vm4432, %v5456, %v5455
        %v5458 = vrot.slane %v4347, 2
        %v5459 = vsel %vm4435, %v5458, %v5457
        %v5460 = vrot.slane %v4348, 1
        %v5461 = vsel %vm4438, %v5460, %v5459
        %v5462 = vsel %vm4441, %v4349, %v5461
        %v5463 = vrot.slane %v4350, 7
        %v5464 = vrot.slane %v4351, 6
        %v5465 = vsel %vm4423, %v5464, %v5463
        %v5466 = vrot.slane %v4352, 5
        %v5467 = vsel %vm4426, %v5466, %v5465
        %v5468 = vrot.slane %v4353, 4
        %v5469 = vsel %vm4429, %v5468, %v5467
        %v5470 = vrot.slane %v4354, 3
        %v5471 = vsel %vm4432, %v5470, %v5469
        %v5472 = vrot.slane %v4355, 2
        %v5473 = vsel %vm4435, %v5472, %v5471
        %v5474 = vrot.slane %v4356, 1
        %v5475 = vsel %vm4438, %v5474, %v5473
        %v5476 = vsel %vm4441, %v4357, %v5475
        %5477 = vrot.lane.b32.xlu0 %v5378, 112
        %v5478 = vpop.permute.xlu0 %5477
        %5479 = vrot.lane.b32.xlu0 %v5392, 112
        %v5480 = vpop.permute.xlu0 %5479
        %5481 = vrot.lane.b32.xlu0 %v5406, 112
        %v5482 = vpop.permute.xlu0 %5481
        %5483 = vrot.lane.b32.xlu0 %v5420, 112
        %v5484 = vpop.permute.xlu0 %5483
        %5485 = vrot.lane.b32.xlu0 %v5434, 112
        %v5486 = vpop.permute.xlu0 %5485
        %5487 = vrot.lane.b32.xlu0 %v5448, 112
        %v5488 = vpop.permute.xlu0 %5487
        %5489 = vrot.lane.b32.xlu0 %v5462, 112
        %v5490 = vpop.permute.xlu0 %5489
        %5491 = vrot.lane.b32.xlu0 %v5476, 112
        %v5492 = vpop.permute.xlu0 %5491
        %v5501 = vsel %vm395, %v4442, %v4662
        %v5502 = vsel %vm395, %v4456, %v4664
        %v5503 = vsel %vm395, %v4470, %v4666
        %v5504 = vsel %vm395, %v4484, %v4668
        %v5505 = vsel %vm395, %v4498, %v4670
        %v5506 = vsel %vm395, %v4512, %v4672
        %v5507 = vsel %vm395, %v4526, %v4674
        %v5508 = vsel %vm395, %v4540, %v4676
        %v5509 = vsel %vm3224, %v5501, %v4798
        %v5510 = vsel %vm3224, %v5502, %v4800
        %v5511 = vsel %vm3224, %v5503, %v4802
        %v5512 = vsel %vm3224, %v5504, %v4804
        %v5513 = vsel %vm3224, %v5505, %v4806
        %v5514 = vsel %vm3224, %v5506, %v4808
        %v5515 = vsel %vm3224, %v5507, %v4810
        %v5516 = vsel %vm3224, %v5508, %v4812
        %vm5517 = vcmask 392192
        %v5518 = vsel %vm5517, %v5509, %v4934
        %v5519 = vsel %vm5517, %v5510, %v4936
        %v5520 = vsel %vm5517, %v5511, %v4938
        %v5521 = vsel %vm5517, %v5512, %v4940
        %v5522 = vsel %vm5517, %v5513, %v4942
        %v5523 = vsel %vm5517, %v5514, %v4944
        %v5524 = vsel %vm5517, %v5515, %v4946
        %v5525 = vsel %vm5517, %v5516, %v4948
        %vm5526 = vcmask 523264
        %v5527 = vsel %vm5526, %v5518, %v5070
        %v5528 = vsel %vm5526, %v5519, %v5072
        %v5529 = vsel %vm5526, %v5520, %v5074
        %v5530 = vsel %vm5526, %v5521, %v5076
        %v5531 = vsel %vm5526, %v5522, %v5078
        %v5532 = vsel %vm5526, %v5523, %v5080
        %v5533 = vsel %vm5526, %v5524, %v5082
        %v5534 = vsel %vm5526, %v5525, %v5084
        %vm5535 = vcmask 654336
        %v5536 = vsel %vm5535, %v5527, %v5206
        %v5537 = vsel %vm5535, %v5528, %v5208
        %v5538 = vsel %vm5535, %v5529, %v5210
        %v5539 = vsel %vm5535, %v5530, %v5212
        %v5540 = vsel %vm5535, %v5531, %v5214
        %v5541 = vsel %vm5535, %v5532, %v5216
        %v5542 = vsel %vm5535, %v5533, %v5218
        %v5543 = vsel %vm5535, %v5534, %v5220
        %vm5544 = vcmask 785408
        %v5545 = vsel %vm5544, %v5536, %v5342
        %v5546 = vsel %vm5544, %v5537, %v5344
        %v5547 = vsel %vm5544, %v5538, %v5346
        %v5548 = vsel %vm5544, %v5539, %v5348
        %v5549 = vsel %vm5544, %v5540, %v5350
        %v5550 = vsel %vm5544, %v5541, %v5352
        %v5551 = vsel %vm5544, %v5542, %v5354
        %v5552 = vsel %vm5544, %v5543, %v5356
        %vm5553 = vcmask 916480
        %v5554 = vsel %vm5553, %v5545, %v5478
        %v5555 = vsel %vm5553, %v5546, %v5480
        %v5556 = vsel %vm5553, %v5547, %v5482
        %v5557 = vsel %vm5553, %v5548, %v5484
        %v5558 = vsel %vm5553, %v5549, %v5486
        %v5559 = vsel %vm5553, %v5550, %v5488
        %v5560 = vsel %vm5553, %v5551, %v5490
        %v5561 = vsel %vm5553, %v5552, %v5492
        %5562 = vst [vmem:[%s274] sm:$0xff] %v5554
        %5563 = vst [vmem:[%s274 + $0x8] sm:$0xff] %v5555
        %5564 = vst [vmem:[%s274 + $0x10] sm:$0xff] %v5556
        %5565 = vst [vmem:[%s274 + $0x18] sm:$0xff] %v5557
        %5566 = vst [vmem:[%s274 + $0x20] sm:$0xff] %v5558
        %5567 = vst [vmem:[%s274 + $0x28] sm:$0xff] %v5559
        %5568 = vst [vmem:[%s274 + $0x30] sm:$0xff] %v5560
        %5569 = vst [vmem:[%s274 + $0x38] sm:$0xff] %v5561
        %s5570 = sand.u32 %s181, 1
        %s5571 = scalar_lea.sflag [#allocation4], %s5570
        %s5572 = sand.u32 %s181, 1
        %s5573 = smul.addr %s5572, 64
        %s5574 = scalar_lea.vmem [#allocation3], %s5573
        // Predicated region
        $region49: #{tpu_custom_call.1} parent=47 // pred_check
          %p5575 = pneg %p191
        $region50: #{tpu_custom_call.1} parent=47 // pred_check_branch
          %5577 = sbr.rel (%p5575) target = $region52
        $region51: #{tpu_custom_call.1} parent=47 // pred_region
          %s5578 = smul.u32 8, %s21
          %s5580 = ssub.s32 1024, 1024
          %5581 = vsyncadd %s5571, %s5580
          %s5582 = smul.addr %s5578, 128
          %s5583 = scalar_lea.hbm %s7, %s5582
          %s5584 = sshll.u32 %s5574, 4
          %s5585 = int_to_ptr.vmem [resolvable:$true] %s5584
          %5590 = dma.vmem_to_hbm [thread:$0]  %s5585, 1024, %s5583, %s5571, 128, 128, 8
        $region52: #{tpu_custom_call.1} parent=47 // pred_fallthru
          _
      $region48: #{tpu_custom_call.1} parent=5 // pred_fallthru
        _
      %p5591 = scmp.le.s32.totalorder 2, %s16
      // Predicated region
      $region53: #{tpu_custom_call.1} parent=5 // pred_check
        %p5592 = pneg %p5591
      $region54: #{tpu_custom_call.1} parent=5 // pred_check_branch
        %5594 = sbr.rel (%p5592) target = $region56
      $region55: #{tpu_custom_call.1} parent=5 // pred_region
        %s5595 = ssub.s32 %s16, 2
        // Predicated region
        $region57: #{tpu_custom_call.1} parent=55 // pred_check
          %p5596 = pneg %p197
        $region58: #{tpu_custom_call.1} parent=55 // pred_check_branch
          %5598 = sbr.rel (%p5596) target = $region60
        $region59: #{tpu_custom_call.1} parent=55 // pred_region
          %s5599 = sand.u32 %s182, 1
          %s5600 = scalar_lea.sflag [#allocation4], %s5599
          %s5601 = sand.u32 %s182, 1
          %s5602 = smul.addr %s5601, 64
          %s5603 = scalar_lea.vmem [#allocation3], %s5602
          %5604 = dma.done %s5600, 1024
        $region60: #{tpu_custom_call.1} parent=55 // pred_fallthru
          _
      $region56: #{tpu_custom_call.1} parent=5 // pred_fallthru
        _
    $region6: #{tpu_custom_call.1} parent=1 // loop_footer
      %s20 = sadd.s32 1, %s16
    $region7: #{tpu_custom_call.1} parent=1 // loop_footer_branch
      %15 = sbr.rel target = $region3
    $region8: #{tpu_custom_call.1} parent=1 // loop_exit
      _
    %5605 = vsyncpa [#allocation4], 1
    %s5606 = scalar_lea.sflag [#allocation4], 1
    %5607 = vsyncpa %s5606, 1

</llo_original>
